<compile_context>
chip_gen: v7x
topology: tpu7x:2x2x1
jax: 0.10.0
libtpu: 0.0.40
codegen_flags: <defaults>
</compile_context>

<pallas_src>
import functools

import numpy as np
import jax
import jax.numpy as jnp
from jax import lax
from jax.experimental import pallas as pl
from jax.experimental.pallas import tpu as pltpu


# ---------------------------------------------------------------------------
# Hardware-aware budgets: v5e/v6e (128 MiB physical VMEM) get a larger scoped
# limit and bigger linear tiles than v7x (64 MiB physical VMEM).
# ---------------------------------------------------------------------------
@functools.lru_cache(maxsize=None)
def _vmem_budget():
    try:
        cap = int(pltpu.get_tpu_info().vmem_capacity_bytes)
    except Exception:
        cap = 64 * 1024 * 1024                       # conservative fallback
    if cap >= 128 * 1024 * 1024:                     # v5e / v6e
        return 96 * 1024 * 1024, (512, 256, 128, 8), (1024, 512, 256, 128)
    return 32 * 1024 * 1024, (256, 128, 8), (512, 256, 128)   # v7x


def _pick_tile(dim, prefs):
    # Largest preferred tile that divides the dim, else the full dim
    # (full-dim blocks waive the (8, 128) divisibility rule).
    for p in prefs:
        if dim >= p and dim % p == 0:
            return p
    return dim


# ---------------------------------------------------------------------------
# Tiled linear kernel: y = act_in(x) @ w_t + b
#   * w_t pre-transposed (K, N) and pre-cast to bf16 at init time
#   * x cast to bf16 in-kernel; accumulation in f32 directly into o_ref
#     (the output block is resident across the K grid axis)
# ---------------------------------------------------------------------------
def _linear_kernel(x_ref, w_ref, b_ref, o_ref, *, act_in):
    k = pl.program_id(2)

    x = x_ref[...]
    if act_in == "relu":                 # fused input activation (no HBM pass)
        x = jnp.maximum(x, 0.0)
    partial = jnp.dot(x.astype(jnp.bfloat16), w_ref[...],
                      preferred_element_type=jnp.float32)

    @pl.when(k == 0)
    def _():
        o_ref[...] = (b_ref[...] + partial).astype(o_ref.dtype)

    @pl.when(k > 0)
    def _():
        o_ref[...] += partial.astype(o_ref.dtype)


def linear_pallas(x, w_t, b=None, act_in=None):
    """y = act_in(x) @ w_t + b.  w_t is (K, N) bf16, pre-transposed at init."""
    *lead, K = x.shape
    Kw, N = w_t.shape
    assert Kw == K
    M = int(np.prod(lead)) if lead else 1
    x2d = x.reshape(M, K)
    b2d = (jnp.zeros((1, N), dtype=jnp.float32) if b is None
           else b.reshape(1, N).astype(jnp.float32))

    vmem_limit, tm_prefs, tk_prefs = _vmem_budget()
    tm = _pick_tile(M, tm_prefs)
    tn = _pick_tile(N, (256, 128))
    tk = _pick_tile(K, tk_prefs)
    grid = (M // tm, N // tn, K // tk)

    out2d = pl.pallas_call(
        functools.partial(_linear_kernel, act_in=act_in),
        out_shape=jax.ShapeDtypeStruct((M, N), jnp.float32),
        grid_spec=pltpu.PrefetchScalarGridSpec(
            num_scalar_prefetch=0,
            grid=grid,
            in_specs=[
                pl.BlockSpec((tm, tk), lambda i, j, k: (i, k)),
                pl.BlockSpec((tk, tn), lambda i, j, k: (k, j)),
                pl.BlockSpec((1, tn), lambda i, j, k: (0, j)),
            ],
            out_specs=pl.BlockSpec((tm, tn), lambda i, j, k: (i, j)),
        ),
        compiler_params=pltpu.CompilerParams(
            dimension_semantics=("parallel", "parallel", "arbitrary"),
            vmem_limit_bytes=vmem_limit,
        ),
        cost_estimate=pl.CostEstimate(
            flops=2 * M * N * K,
            transcendentals=0,
            bytes_accessed=M * K * 4 + K * N * 2 + M * N * 4,
        ),
    )(x2d, w_t, b2d)
    return out2d.reshape(*lead, N)


def _linear_ref(x, w_t, b=None, act_in=None):
    # Same math as the kernel (bf16 operands, f32 accumulation).
    if act_in == "relu":
        x = jnp.maximum(x, 0.0)
    y = jnp.dot(x.astype(jnp.bfloat16), w_t.astype(jnp.bfloat16),
                preferred_element_type=jnp.float32)
    if b is not None:
        y = y + b
    return y


# ---------------------------------------------------------------------------
# Deformable-masked softmax attention — one kernel per layer.
#   grid = (B, query-row tiles); the kernel loops the (static) window groups,
#   reads the fused (B, L, 3*hidden) qkv in place and writes a lane-dense
#   (B, L, hidden) output slab.  Window mask is generated in-kernel.
#   scores = (q/sqrt(L)) @ k^T ; scores = where(win_mask > dx, -1e18, s) + s
#   out    = softmax(scores) @ v
# TODO(synk): flash-style KV-tiled online-softmax variant for very long L
#             (full K/V rows + a (tq, L) score block live in VMEM here).
# ---------------------------------------------------------------------------
def _deform_attn_kernel(q_ref, kv_ref, dx_ref, o_ref, *, scale, hidden,
                        window_sizes):
    G = len(window_sizes)
    dg = hidden // G
    tq = q_ref.shape[1]
    L = kv_ref.shape[1]
    row0 = pl.program_id(1) * tq

    q_rows = q_ref[0]                    # (tq, 3*hidden); only the q third used
    kv = kv_ref[0]                       # (L, 3*hidden)
    dx0 = dx_ref[0]                      # (tq, 1)

    # win_mask[i, j] = 1e18 if j < i else |i - j|; masked when win_mask > dx.
    ii = row0 + lax.broadcasted_iota(jnp.int32, (tq, L), 0)
    jj = lax.broadcasted_iota(jnp.int32, (tq, L), 1)
    causal = jj < ii
    dist = jnp.abs(ii - jj).astype(jnp.float32)

    outs = []
    for g in range(G):
        # 1/sqrt(L) folded into q: L*dg multiplies instead of L*L.
        q = (q_rows[:, g * dg:(g + 1) * dg] * scale).astype(jnp.bfloat16)
        k = kv[:, hidden + g * dg:hidden + (g + 1) * dg].astype(jnp.bfloat16)
        v = kv[:, 2 * hidden + g * dg:2 * hidden + (g + 1) * dg].astype(jnp.bfloat16)
        dx = dx0 + float(window_sizes[g])

        s = lax.dot_general(q, k, (((1,), (1,)), ((), ())),
                            preferred_element_type=jnp.float32)      # (tq, L)
        # deformableAttn: masked_fill(win_mask > dx, -1e18) + scores
        s = jnp.where(causal | (dist > dx), -1e18, s) + s
        m = jnp.max(s, axis=-1, keepdims=True)
        p = jnp.exp(s - m)
        denom = jnp.sum(p, axis=-1, keepdims=True)
        p = p * pl.reciprocal(denom, approx=True)
        outs.append(jnp.dot(p.astype(jnp.bfloat16), v,
                            preferred_element_type=jnp.float32))
    # Lane-dense (tq, hidden) store covering all groups (no HBM concat).
    o_ref[0] = jnp.concatenate(outs, axis=-1).astype(o_ref.dtype)


def deform_attention_pallas(qkv, dx_base, window_sizes, hidden):
    B, L, threeh = qkv.shape
    G = len(window_sizes)
    # TODO(synk): uneven torch.chunk group sizes (hidden % G != 0) not supported.
    assert hidden % G == 0
    scale = 1.0 / float(np.sqrt(L))
    vmem_limit, _, _ = _vmem_budget()
    tq = _pick_tile(L, (256, 128))
    grid = (B, L // tq)

    kernel = functools.partial(
        _deform_attn_kernel, scale=scale, hidden=hidden,
        window_sizes=tuple(float(w) for w in window_sizes))

    return pl.pallas_call(
        kernel,
        out_shape=jax.ShapeDtypeStruct((B, L, hidden), jnp.float32),
        grid_spec=pltpu.PrefetchScalarGridSpec(
            num_scalar_prefetch=0,
            grid=grid,
            in_specs=[
                # q rows of the fused qkv (full 3*hidden lane width keeps the
                # block layout-compliant; only the q third is read in-kernel)
                pl.BlockSpec((1, tq, threeh), lambda b, qi: (b, qi, 0)),
                # full-length K/V rows: same block across qi -> not re-fetched
                pl.BlockSpec((1, L, threeh), lambda b, qi: (b, 0, 0)),
                pl.BlockSpec((1, tq, 1), lambda b, qi: (b, qi, 0)),
            ],
            out_specs=pl.BlockSpec((1, tq, hidden), lambda b, qi: (b, qi, 0)),
        ),
        compiler_params=pltpu.CompilerParams(
            dimension_semantics=("parallel", "parallel"),
            vmem_limit_bytes=vmem_limit,
        ),
    )(qkv, qkv, dx_base)


def _deform_attn_ref(qkv, dx_base, window_sizes, hidden):
    B, L, _ = qkv.shape
    G = len(window_sizes)
    dg = hidden // G
    scale = 1.0 / float(np.sqrt(L))
    i = jnp.arange(L)[:, None]
    j = jnp.arange(L)[None, :]
    causal = j < i
    dist = jnp.abs(i - j).astype(jnp.float32)
    outs = []
    for g in range(G):
        q = (qkv[:, :, g * dg:(g + 1) * dg] * scale).astype(jnp.bfloat16)
        k = qkv[:, :, hidden + g * dg:hidden + (g + 1) * dg].astype(jnp.bfloat16)
        v = qkv[:, :, 2 * hidden + g * dg:2 * hidden + (g + 1) * dg].astype(jnp.bfloat16)
        dx = dx_base + float(window_sizes[g])                      # (B, L, 1)
        s = jnp.einsum("bid,bjd->bij", q, k, preferred_element_type=jnp.float32)
        s = jnp.where(causal[None] | (dist[None] > dx), -1e18, s) + s
        p = jax.nn.softmax(s, axis=-1)
        outs.append(jnp.einsum("bij,bjd->bid", p.astype(jnp.bfloat16), v,
                               preferred_element_type=jnp.float32))
    return jnp.concatenate(outs, axis=-1)


# ---------------------------------------------------------------------------
# Fused residual-add + LayerNorm kernel (row-tiled, full feature dim per block)
# ---------------------------------------------------------------------------
def _add_layernorm_kernel(x_ref, a_ref, g_ref, b_ref, o_ref, *, eps):
    x = x_ref[...].astype(jnp.float32) + a_ref[...].astype(jnp.float32)
    mean = jnp.mean(x, axis=-1, keepdims=True)
    xc = x - mean
    var = jnp.mean(xc * xc, axis=-1, keepdims=True)
    o_ref[...] = (xc * lax.rsqrt(var + eps) * g_ref[...] + b_ref[...]
                  ).astype(o_ref.dtype)


def add_layernorm_pallas(x, a, gamma, beta, eps=1e-5):
    *lead, D = x.shape
    M = int(np.prod(lead)) if lead else 1
    x2d = x.reshape(M, D)
    a2d = a.reshape(M, D)
    tm = _pick_tile(M, (512, 256, 128, 8))
    out2d = pl.pallas_call(
        functools.partial(_add_layernorm_kernel, eps=eps),
        out_shape=jax.ShapeDtypeStruct((M, D), jnp.float32),
        grid_spec=pltpu.PrefetchScalarGridSpec(
            num_scalar_prefetch=0,
            grid=(M // tm,),
            in_specs=[
                pl.BlockSpec((tm, D), lambda i: (i, 0)),
                pl.BlockSpec((tm, D), lambda i: (i, 0)),
                pl.BlockSpec((1, D), lambda i: (0, 0)),
                pl.BlockSpec((1, D), lambda i: (0, 0)),
            ],
            out_specs=pl.BlockSpec((tm, D), lambda i: (i, 0)),
        ),
        compiler_params=pltpu.CompilerParams(dimension_semantics=("parallel",)),
    )(x2d, a2d, gamma.reshape(1, D), beta.reshape(1, D))
    return out2d.reshape(*lead, D)


def _add_layernorm_ref(x, a, gamma, beta, eps=1e-5):
    x = x + a
    mean = jnp.mean(x, axis=-1, keepdims=True)
    xc = x - mean
    var = jnp.mean(xc * xc, axis=-1, keepdims=True)
    return xc * lax.rsqrt(var + eps) * gamma + beta


# ---------------------------------------------------------------------------
# Model (parameters + forward)
# ---------------------------------------------------------------------------
def _positional_encoding(max_len, d_model):
    position = np.arange(max_len, dtype=np.float32)[:, None]
    div_term = np.exp(np.arange(0, d_model, 2, dtype=np.float32)
                      * (-np.log(10000.0) / d_model))
    pe = np.zeros((max_len, d_model), dtype=np.float32)
    pe[:, 0::2] = np.sin(position * div_term)
    pe[:, 1::2] = np.cos(position * div_term)
    return jnp.asarray(pe)


def _init_linear(key, in_dim, out_dim, bias=True, w_dtype=jnp.bfloat16):
    # Weight stored ALREADY TRANSPOSED as (K, N) == W^T and pre-cast to the
    # matmul compute dtype (bf16 for Pallas-side projections).
    kw, kb = jax.random.split(key)
    bound = 1.0 / float(np.sqrt(in_dim))
    w = jax.random.uniform(kw, (in_dim, out_dim), jnp.float32, -bound, bound)
    p = {"w_t": w.astype(w_dtype)}
    p["b"] = (jax.random.uniform(kb, (out_dim,), jnp.float32, -bound, bound)
              if bias else None)
    return p


def init_transformer_params(key, cfg):
    keys = iter(jax.random.split(key, 8 + 8 * cfg["n_encoder_layers"]))
    params = {
        "enc_input_fc": _init_linear(next(keys), cfg["input_dim"],
                                     cfg["dim_val"], bias=True),
        "pe": _positional_encoding(cfg["max_len"], cfg["dim_val"]),
        "layers": [],
    }
    for _ in range(cfg["n_encoder_layers"]):
        lp = {
            # AttentionBlock.query  (Key/Value projections are dead code:
            # MultiHeadAttention ignores its key/value args, so they are
            # skipped — no effect on the forward output).
            "query": _init_linear(next(keys), cfg["dim_val"],
                                  cfg["dim_attn"], bias=False),
            # MultiHeadAttention.qkv — fused, lane-dense (3*hidden) output
            "qkv": _init_linear(next(keys), cfg["hidden_size"],
                                3 * cfg["hidden_size"], bias=True),
            # learnedvector
            "offset_predictor": _init_linear(next(keys), cfg["hidden_size"],
                                             cfg["learneddim"], bias=False),
            "linear2": _init_linear(next(keys), cfg["learneddim"], 1, bias=True,
                                    w_dtype=jnp.float32),   # tiny head stays XLA/f32
            # MultiHeadAttentionBlock.fc
            "fc": _init_linear(next(keys), cfg["hidden_size"],
                               cfg["embedding_size"], bias=False),
            # EncoderLayer feed-forward + norms
            "fc1": _init_linear(next(keys), cfg["dim_val"], cfg["dim_val"], True),
            "fc2": _init_linear(next(keys), cfg["dim_val"], cfg["dim_val"], True),
            "norm1_g": jnp.ones((cfg["dim_val"],), jnp.float32),
            "norm1_b": jnp.zeros((cfg["dim_val"],), jnp.float32),
            "norm2_g": jnp.ones((cfg["dim_val"],), jnp.float32),
            "norm2_b": jnp.zeros((cfg["dim_val"],), jnp.float32),
        }
        params["layers"].append(lp)
    return params


def _mha_block(lp, x, cfg, linear, attn):
    B, L, _ = x.shape
    hidden = cfg["hidden_size"]
    windows = list(cfg["window_size"])

    # Query projection (feeds both the fused qkv projection and the offset MLP)
    q_in = linear(x, lp["query"]["w_t"], lp["query"]["b"])          # (B, L, hidden)

    # Fused, lane-dense qkv projection: N = 3*hidden.  The attention kernel
    # reads it in place — no reshape/transpose/chunk round trip through HBM.
    qkv = linear(q_in, lp["qkv"]["w_t"], lp["qkv"]["b"])            # (B, L, 3*hidden)

    # learnedvector: dx = sigmoid(linear2(offset_predictor(relu(q)))) * L
    lv1 = linear(q_in, lp["offset_predictor"]["w_t"],
                 lp["offset_predictor"]["b"], act_in="relu")        # (B, L, learneddim)
    # Tiny (N=1) head left to XLA: a 1-lane Pallas output is pure overhead.
    dx_base = jax.nn.sigmoid(
        jnp.dot(lv1, lp["linear2"]["w_t"]) + lp["linear2"]["b"]) * L  # (B, L, 1)

    att = attn(qkv, dx_base, windows, hidden)                       # (B, L, hidden)
    return linear(att, lp["fc"]["w_t"], lp["fc"]["b"])              # (B, L, embed)


def _encoder_layer(lp, x, cfg, linear, add_ln, attn):
    a = _mha_block(lp, x, cfg, linear, attn)
    x = add_ln(x, a, lp["norm1_g"], lp["norm1_b"])                  # LN1(x + a) fused
    inner = linear(x, lp["fc2"]["w_t"], lp["fc2"]["b"])
    a = linear(inner, lp["fc1"]["w_t"], lp["fc1"]["b"], act_in="relu")  # fc1(relu(fc2(x)))
    x = add_ln(x, a, lp["norm2_g"], lp["norm2_b"])                  # LN2(x + a) fused
    return x


def transformer_forward(params, x, cfg, use_pallas=True):
    linear = linear_pallas if use_pallas else _linear_ref
    add_ln = add_layernorm_pallas if use_pallas else _add_layernorm_ref
    attn = deform_attention_pallas if use_pallas else _deform_attn_ref

    x = x.astype(jnp.float32)
    a = linear(x, params["enc_input_fc"]["w_t"], params["enc_input_fc"]["b"])
    # TODO(synk): training-mode stochastic Dropout not implemented
    #             (inference path => identity).
    c = a + params["pe"][:a.shape[1]]
    e = c
    for lp in params["layers"]:
        e = _encoder_layer(lp, e, cfg, linear, add_ln, attn)
    return e


# ---------------------------------------------------------------------------
if __name__ == "__main__":
    # Small but mutually consistent config:
    #   hidden_size == dim_attn (MHA consumes the Query projection),
    #   embedding_size == dim_val (residual + LayerNorm(dim_val)).
    cfg = dict(
        input_dim=8, dim_val=32, dim_attn=16, hidden_size=16,
        embedding_size=32, learneddim=8, window_size=[2, 4],
        n_encoder_layers=2, max_len=64,
    )
    batch, seq = 2, 8

    key = jax.random.PRNGKey(0)
    kp, kx = jax.random.split(key)
    params = init_transformer_params(kp, cfg)
    x = jax.random.normal(kx, (batch, seq, cfg["input_dim"]), dtype=jnp.float32)

    fwd = jax.jit(functools.partial(transformer_forward, cfg=cfg, use_pallas=True))
    y = fwd(params, x)
    jax.block_until_ready(y)

    # Pure-JAX reference implementing the same math (bf16 MXU operands,
    # f32 accumulation), used to validate the Pallas plumbing.
    y_ref = transformer_forward(params, x, cfg, use_pallas=False)

    assert y.shape == (batch, seq, cfg["dim_val"])
    max_err = float(jnp.max(jnp.abs(y - y_ref)))
    assert jnp.allclose(y, y_ref, atol=2e-2, rtol=2e-2), f"max_err={max_err}"

    print("KERNEL_OK")
</pallas_src>

<mosaic_0001>
module attributes {stable_mosaic.version = 11 : i64} {
  func.func @_linear_kernel(%arg0: i32, %arg1: i32, %arg2: i32, %arg3: memref<8x8xf32, #tpu.memory_space<vmem>>, %arg4: memref<8x32xbf16, #tpu.memory_space<vmem>>, %arg5: memref<1x32xf32, #tpu.memory_space<vmem>>, %arg6: memref<8x32xf32, #tpu.memory_space<vmem>>) attributes {dimension_semantics = [#tpu.dimension_semantics<parallel>, #tpu.dimension_semantics<parallel>, #tpu.dimension_semantics<arbitrary>], iteration_bounds = array<i64: 2, 1, 1>, scalar_prefetch = 0 : i64, scratch_operands = 0 : i64, tpu.core_type = #tpu.core_type<tc>, window_params = [{transform_indices = @transform_0, window_bounds = array<i64: 8, 8>}, {transform_indices = @transform_1, window_bounds = array<i64: 8, 32>}, {transform_indices = @transform_2, window_bounds = array<i64: 1, 32>}, {transform_indices = @transform_3, window_bounds = array<i64: 8, 32>}]} {
    %c0 = arith.constant 0 : index
    %c0_0 = arith.constant 0 : index
    %0 = vector.load %arg3[%c0, %c0_0] : memref<8x8xf32, #tpu.memory_space<vmem>>, vector<8x8xf32>
    %1 = arith.truncf %0 : vector<8x8xf32> to vector<8x8xbf16>
    %c0_1 = arith.constant 0 : index
    %c0_2 = arith.constant 0 : index
    %2 = vector.load %arg4[%c0_1, %c0_2] : memref<8x32xbf16, #tpu.memory_space<vmem>>, vector<8x32xbf16>
    %cst = arith.constant dense<0.000000e+00> : vector<8x32xf32>
    %3 = tpu.matmul %1, %2, %cst {dimension_numbers = #tpu.dot_dimension_numbers<[1], [0], [0], [1], [0, 0, 1, 1], [], []>} : vector<8x8xbf16>, vector<8x32xbf16>, vector<8x32xf32> -> vector<8x32xf32>
    %c0_i32 = arith.constant 0 : i32
    %4 = arith.cmpi eq, %arg2, %c0_i32 : i32
    %5 = arith.extui %4 : i1 to i32
    %c0_i32_3 = arith.constant 0 : i32
    %6 = arith.cmpi ne, %5, %c0_i32_3 : i32
    scf.if %6 {
      %c0_6 = arith.constant 0 : index
      %c0_7 = arith.constant 0 : index
      %10 = vector.load %arg5[%c0_6, %c0_7] : memref<1x32xf32, #tpu.memory_space<vmem>>, vector<1x32xf32>
      %11 = vector.broadcast %10 : vector<1x32xf32> to vector<8x32xf32>
      %12 = arith.addf %11, %3 : vector<8x32xf32>
      %c0_8 = arith.constant 0 : index
      %c0_9 = arith.constant 0 : index
      %13 = vector.load %arg6[%c0_8, %c0_9] : memref<8x32xf32, #tpu.memory_space<vmem>>, vector<8x32xf32>
      tpu.vector_store %arg6[%c0_8, %c0_9], %12 {strides = array<i32>} : memref<8x32xf32, #tpu.memory_space<vmem>>, vector<8x32xf32>,
    } else {
    }
    %c0_i32_4 = arith.constant 0 : i32
    %7 = arith.cmpi sgt, %arg2, %c0_i32_4 : i32
    %8 = arith.extui %7 : i1 to i32
    %c0_i32_5 = arith.constant 0 : i32
    %9 = arith.cmpi ne, %8, %c0_i32_5 : i32
    scf.if %9 {
      %c0_6 = arith.constant 0 : index
      %c0_7 = arith.constant 0 : index
      %10 = vector.load %arg6[%c0_6, %c0_7] : memref<8x32xf32, #tpu.memory_space<vmem>>, vector<8x32xf32>
      %11 = arith.addf %10, %3 : vector<8x32xf32>
      %c0_8 = arith.constant 0 : index
      %c0_9 = arith.constant 0 : index
      %12 = vector.load %arg6[%c0_8, %c0_9] : memref<8x32xf32, #tpu.memory_space<vmem>>, vector<8x32xf32>
      tpu.vector_store %arg6[%c0_8, %c0_9], %11 {strides = array<i32>} : memref<8x32xf32, #tpu.memory_space<vmem>>, vector<8x32xf32>,
    } else {
    }
    return
  }
  func.func @transform_0(%arg0: i32, %arg1: i32, %arg2: i32) -> (i32, i32) {
    %c0_i32 = arith.constant 0 : i32
    return %arg0, %arg2 : i32, i32
  }
  func.func @transform_1(%arg0: i32, %arg1: i32, %arg2: i32) -> (i32, i32) {
    %c0_i32 = arith.constant 0 : i32
    return %arg2, %arg1 : i32, i32
  }
  func.func @transform_2(%arg0: i32, %arg1: i32, %arg2: i32) -> (i32, i32) {
    %c0_i32 = arith.constant 0 : i32
    %c0_i32_0 = arith.constant 0 : i32
    return %c0_i32, %arg1 : i32, i32
  }
  func.func @transform_3(%arg0: i32, %arg1: i32, %arg2: i32) -> (i32, i32) {
    %c0_i32 = arith.constant 0 : i32
    return %arg0, %arg1 : i32, i32
  }
}

module attributes {stable_mosaic.version = 11 : i64} {
  func.func @_linear_kernel(%arg0: i32, %arg1: i32, %arg2: i32, %arg3: memref<8x32xf32, #tpu.memory_space<vmem>>, %arg4: memref<32x16xbf16, #tpu.memory_space<vmem>>, %arg5: memref<1x16xf32, #tpu.memory_space<vmem>>, %arg6: memref<8x16xf32, #tpu.memory_space<vmem>>) attributes {dimension_semantics = [#tpu.dimension_semantics<parallel>, #tpu.dimension_semantics<parallel>, #tpu.dimension_semantics<arbitrary>], iteration_bounds = array<i64: 2, 1, 1>, scalar_prefetch = 0 : i64, scratch_operands = 0 : i64, tpu.core_type = #tpu.core_type<tc>, window_params = [{transform_indices = @transform_0, window_bounds = array<i64: 8, 32>}, {transform_indices = @transform_1, window_bounds = array<i64: 32, 16>}, {transform_indices = @transform_2, window_bounds = array<i64: 1, 16>}, {transform_indices = @transform_3, window_bounds = array<i64: 8, 16>}]} {
    %c0 = arith.constant 0 : index
    %c0_0 = arith.constant 0 : index
    %0 = vector.load %arg3[%c0, %c0_0] : memref<8x32xf32, #tpu.memory_space<vmem>>, vector<8x32xf32>
    %1 = arith.truncf %0 : vector<8x32xf32> to vector<8x32xbf16>
    %c0_1 = arith.constant 0 : index
    %c0_2 = arith.constant 0 : index
    %2 = vector.load %arg4[%c0_1, %c0_2] : memref<32x16xbf16, #tpu.memory_space<vmem>>, vector<32x16xbf16>
    %cst = arith.constant dense<0.000000e+00> : vector<8x16xf32>
    %3 = tpu.matmul %1, %2, %cst {dimension_numbers = #tpu.dot_dimension_numbers<[1], [0], [0], [1], [0, 0, 1, 1], [], []>} : vector<8x32xbf16>, vector<32x16xbf16>, vector<8x16xf32> -> vector<8x16xf32>
    %c0_i32 = arith.constant 0 : i32
    %4 = arith.cmpi eq, %arg2, %c0_i32 : i32
    %5 = arith.extui %4 : i1 to i32
    %c0_i32_3 = arith.constant 0 : i32
    %6 = arith.cmpi ne, %5, %c0_i32_3 : i32
    scf.if %6 {
      %c0_6 = arith.constant 0 : index
      %c0_7 = arith.constant 0 : index
      %10 = vector.load %arg5[%c0_6, %c0_7] : memref<1x16xf32, #tpu.memory_space<vmem>>, vector<1x16xf32>
      %11 = vector.broadcast %10 : vector<1x16xf32> to vector<8x16xf32>
      %12 = arith.addf %11, %3 : vector<8x16xf32>
      %c0_8 = arith.constant 0 : index
      %c0_9 = arith.constant 0 : index
      %13 = vector.load %arg6[%c0_8, %c0_9] : memref<8x16xf32, #tpu.memory_space<vmem>>, vector<8x16xf32>
      tpu.vector_store %arg6[%c0_8, %c0_9], %12 {strides = array<i32>} : memref<8x16xf32, #tpu.memory_space<vmem>>, vector<8x16xf32>,
    } else {
    }
    %c0_i32_4 = arith.constant 0 : i32
    %7 = arith.cmpi sgt, %arg2, %c0_i32_4 : i32
    %8 = arith.extui %7 : i1 to i32
    %c0_i32_5 = arith.constant 0 : i32
    %9 = arith.cmpi ne, %8, %c0_i32_5 : i32
    scf.if %9 {
      %c0_6 = arith.constant 0 : index
      %c0_7 = arith.constant 0 : index
      %10 = vector.load %arg6[%c0_6, %c0_7] : memref<8x16xf32, #tpu.memory_space<vmem>>, vector<8x16xf32>
      %11 = arith.addf %10, %3 : vector<8x16xf32>
      %c0_8 = arith.constant 0 : index
      %c0_9 = arith.constant 0 : index
      %12 = vector.load %arg6[%c0_8, %c0_9] : memref<8x16xf32, #tpu.memory_space<vmem>>, vector<8x16xf32>
      tpu.vector_store %arg6[%c0_8, %c0_9], %11 {strides = array<i32>} : memref<8x16xf32, #tpu.memory_space<vmem>>, vector<8x16xf32>,
    } else {
    }
    return
  }
  func.func @transform_0(%arg0: i32, %arg1: i32, %arg2: i32) -> (i32, i32) {
    %c0_i32 = arith.constant 0 : i32
    return %arg0, %arg2 : i32, i32
  }
  func.func @transform_1(%arg0: i32, %arg1: i32, %arg2: i32) -> (i32, i32) {
    %c0_i32 = arith.constant 0 : i32
    return %arg2, %arg1 : i32, i32
  }
  func.func @transform_2(%arg0: i32, %arg1: i32, %arg2: i32) -> (i32, i32) {
    %c0_i32 = arith.constant 0 : i32
    %c0_i32_0 = arith.constant 0 : i32
    return %c0_i32, %arg1 : i32, i32
  }
  func.func @transform_3(%arg0: i32, %arg1: i32, %arg2: i32) -> (i32, i32) {
    %c0_i32 = arith.constant 0 : i32
    return %arg0, %arg1 : i32, i32
  }
}

module attributes {stable_mosaic.version = 11 : i64} {
  func.func @_linear_kernel(%arg0: i32, %arg1: i32, %arg2: i32, %arg3: memref<8x16xf32, #tpu.memory_space<vmem>>, %arg4: memref<16x48xbf16, #tpu.memory_space<vmem>>, %arg5: memref<1x48xf32, #tpu.memory_space<vmem>>, %arg6: memref<8x48xf32, #tpu.memory_space<vmem>>) attributes {dimension_semantics = [#tpu.dimension_semantics<parallel>, #tpu.dimension_semantics<parallel>, #tpu.dimension_semantics<arbitrary>], iteration_bounds = array<i64: 2, 1, 1>, scalar_prefetch = 0 : i64, scratch_operands = 0 : i64, tpu.core_type = #tpu.core_type<tc>, window_params = [{transform_indices = @transform_0, window_bounds = array<i64: 8, 16>}, {transform_indices = @transform_1, window_bounds = array<i64: 16, 48>}, {transform_indices = @transform_2, window_bounds = array<i64: 1, 48>}, {transform_indices = @transform_3, window_bounds = array<i64: 8, 48>}]} {
    %c0 = arith.constant 0 : index
    %c0_0 = arith.constant 0 : index
    %0 = vector.load %arg3[%c0, %c0_0] : memref<8x16xf32, #tpu.memory_space<vmem>>, vector<8x16xf32>
    %1 = arith.truncf %0 : vector<8x16xf32> to vector<8x16xbf16>
    %c0_1 = arith.constant 0 : index
    %c0_2 = arith.constant 0 : index
    %2 = vector.load %arg4[%c0_1, %c0_2] : memref<16x48xbf16, #tpu.memory_space<vmem>>, vector<16x48xbf16>
    %cst = arith.constant dense<0.000000e+00> : vector<8x48xf32>
    %3 = tpu.matmul %1, %2, %cst {dimension_numbers = #tpu.dot_dimension_numbers<[1], [0], [0], [1], [0, 0, 1, 1], [], []>} : vector<8x16xbf16>, vector<16x48xbf16>, vector<8x48xf32> -> vector<8x48xf32>
    %c0_i32 = arith.constant 0 : i32
    %4 = arith.cmpi eq, %arg2, %c0_i32 : i32
    %5 = arith.extui %4 : i1 to i32
    %c0_i32_3 = arith.constant 0 : i32
    %6 = arith.cmpi ne, %5, %c0_i32_3 : i32
    scf.if %6 {
      %c0_6 = arith.constant 0 : index
      %c0_7 = arith.constant 0 : index
      %10 = vector.load %arg5[%c0_6, %c0_7] : memref<1x48xf32, #tpu.memory_space<vmem>>, vector<1x48xf32>
      %11 = vector.broadcast %10 : vector<1x48xf32> to vector<8x48xf32>
      %12 = arith.addf %11, %3 : vector<8x48xf32>
      %c0_8 = arith.constant 0 : index
      %c0_9 = arith.constant 0 : index
      %13 = vector.load %arg6[%c0_8, %c0_9] : memref<8x48xf32, #tpu.memory_space<vmem>>, vector<8x48xf32>
      tpu.vector_store %arg6[%c0_8, %c0_9], %12 {strides = array<i32>} : memref<8x48xf32, #tpu.memory_space<vmem>>, vector<8x48xf32>,
    } else {
    }
    %c0_i32_4 = arith.constant 0 : i32
    %7 = arith.cmpi sgt, %arg2, %c0_i32_4 : i32
    %8 = arith.extui %7 : i1 to i32
    %c0_i32_5 = arith.constant 0 : i32
    %9 = arith.cmpi ne, %8, %c0_i32_5 : i32
    scf.if %9 {
      %c0_6 = arith.constant 0 : index
      %c0_7 = arith.constant 0 : index
      %10 = vector.load %arg6[%c0_6, %c0_7] : memref<8x48xf32, #tpu.memory_space<vmem>>, vector<8x48xf32>
      %11 = arith.addf %10, %3 : vector<8x48xf32>
      %c0_8 = arith.constant 0 : index
      %c0_9 = arith.constant 0 : index
      %12 = vector.load %arg6[%c0_8, %c0_9] : memref<8x48xf32, #tpu.memory_space<vmem>>, vector<8x48xf32>
      tpu.vector_store %arg6[%c0_8, %c0_9], %11 {strides = array<i32>} : memref<8x48xf32, #tpu.memory_space<vmem>>, vector<8x48xf32>,
    } else {
    }
    return
  }
  func.func @transform_0(%arg0: i32, %arg1: i32, %arg2: i32) -> (i32, i32) {
    %c0_i32 = arith.constant 0 : i32
    return %arg0, %arg2 : i32, i32
  }
  func.func @transform_1(%arg0: i32, %arg1: i32, %arg2: i32) -> (i32, i32) {
    %c0_i32 = arith.constant 0 : i32
    return %arg2, %arg1 : i32, i32
  }
  func.func @transform_2(%arg0: i32, %arg1: i32, %arg2: i32) -> (i32, i32) {
    %c0_i32 = arith.constant 0 : i32
    %c0_i32_0 = arith.constant 0 : i32
    return %c0_i32, %arg1 : i32, i32
  }
  func.func @transform_3(%arg0: i32, %arg1: i32, %arg2: i32) -> (i32, i32) {
    %c0_i32 = arith.constant 0 : i32
    return %arg0, %arg1 : i32, i32
  }
}

module attributes {stable_mosaic.version = 11 : i64} {
  func.func @_linear_kernel(%arg0: i32, %arg1: i32, %arg2: i32, %arg3: memref<8x16xf32, #tpu.memory_space<vmem>>, %arg4: memref<16x8xbf16, #tpu.memory_space<vmem>>, %arg5: memref<1x8xf32, #tpu.memory_space<vmem>>, %arg6: memref<8x8xf32, #tpu.memory_space<vmem>>) attributes {dimension_semantics = [#tpu.dimension_semantics<parallel>, #tpu.dimension_semantics<parallel>, #tpu.dimension_semantics<arbitrary>], iteration_bounds = array<i64: 2, 1, 1>, scalar_prefetch = 0 : i64, scratch_operands = 0 : i64, tpu.core_type = #tpu.core_type<tc>, window_params = [{transform_indices = @transform_0, window_bounds = array<i64: 8, 16>}, {transform_indices = @transform_1, window_bounds = array<i64: 16, 8>}, {transform_indices = @transform_2, window_bounds = array<i64: 1, 8>}, {transform_indices = @transform_3, window_bounds = array<i64: 8, 8>}]} {
    %c0 = arith.constant 0 : index
    %c0_0 = arith.constant 0 : index
    %0 = vector.load %arg3[%c0, %c0_0] : memref<8x16xf32, #tpu.memory_space<vmem>>, vector<8x16xf32>
    %cst = arith.constant 0.000000e+00 : f32
    %1 = vector.broadcast %cst : f32 to vector<8x16xf32>
    %2 = arith.maximumf %0, %1 : vector<8x16xf32>
    %3 = arith.truncf %2 : vector<8x16xf32> to vector<8x16xbf16>
    %c0_1 = arith.constant 0 : index
    %c0_2 = arith.constant 0 : index
    %4 = vector.load %arg4[%c0_1, %c0_2] : memref<16x8xbf16, #tpu.memory_space<vmem>>, vector<16x8xbf16>
    %cst_3 = arith.constant dense<0.000000e+00> : vector<8x8xf32>
    %5 = tpu.matmul %3, %4, %cst_3 {dimension_numbers = #tpu.dot_dimension_numbers<[1], [0], [0], [1], [0, 0, 1, 1], [], []>} : vector<8x16xbf16>, vector<16x8xbf16>, vector<8x8xf32> -> vector<8x8xf32>
    %c0_i32 = arith.constant 0 : i32
    %6 = arith.cmpi eq, %arg2, %c0_i32 : i32
    %7 = arith.extui %6 : i1 to i32
    %c0_i32_4 = arith.constant 0 : i32
    %8 = arith.cmpi ne, %7, %c0_i32_4 : i32
    scf.if %8 {
      %c0_7 = arith.constant 0 : index
      %c0_8 = arith.constant 0 : index
      %12 = vector.load %arg5[%c0_7, %c0_8] : memref<1x8xf32, #tpu.memory_space<vmem>>, vector<1x8xf32>
      %13 = vector.broadcast %12 : vector<1x8xf32> to vector<8x8xf32>
      %14 = arith.addf %13, %5 : vector<8x8xf32>
      %c0_9 = arith.constant 0 : index
      %c0_10 = arith.constant 0 : index
      %15 = vector.load %arg6[%c0_9, %c0_10] : memref<8x8xf32, #tpu.memory_space<vmem>>, vector<8x8xf32>
      tpu.vector_store %arg6[%c0_9, %c0_10], %14 {strides = array<i32>} : memref<8x8xf32, #tpu.memory_space<vmem>>, vector<8x8xf32>,
    } else {
    }
    %c0_i32_5 = arith.constant 0 : i32
    %9 = arith.cmpi sgt, %arg2, %c0_i32_5 : i32
    %10 = arith.extui %9 : i1 to i32
    %c0_i32_6 = arith.constant 0 : i32
    %11 = arith.cmpi ne, %10, %c0_i32_6 : i32
    scf.if %11 {
      %c0_7 = arith.constant 0 : index
      %c0_8 = arith.constant 0 : index
      %12 = vector.load %arg6[%c0_7, %c0_8] : memref<8x8xf32, #tpu.memory_space<vmem>>, vector<8x8xf32>
      %13 = arith.addf %12, %5 : vector<8x8xf32>
      %c0_9 = arith.constant 0 : index
      %c0_10 = arith.constant 0 : index
      %14 = vector.load %arg6[%c0_9, %c0_10] : memref<8x8xf32, #tpu.memory_space<vmem>>, vector<8x8xf32>
      tpu.vector_store %arg6[%c0_9, %c0_10], %13 {strides = array<i32>} : memref<8x8xf32, #tpu.memory_space<vmem>>, vector<8x8xf32>,
    } else {
    }
    return
  }
  func.func @transform_0(%arg0: i32, %arg1: i32, %arg2: i32) -> (i32, i32) {
    %c0_i32 = arith.constant 0 : i32
    return %arg0, %arg2 : i32, i32
  }
  func.func @transform_1(%arg0: i32, %arg1: i32, %arg2: i32) -> (i32, i32) {
    %c0_i32 = arith.constant 0 : i32
    return %arg2, %arg1 : i32, i32
  }
  func.func @transform_2(%arg0: i32, %arg1: i32, %arg2: i32) -> (i32, i32) {
    %c0_i32 = arith.constant 0 : i32
    %c0_i32_0 = arith.constant 0 : i32
    return %c0_i32, %arg1 : i32, i32
  }
  func.func @transform_3(%arg0: i32, %arg1: i32, %arg2: i32) -> (i32, i32) {
    %c0_i32 = arith.constant 0 : i32
    return %arg0, %arg1 : i32, i32
  }
}

module attributes {stable_mosaic.version = 11 : i64} {
  func.func @_deform_attn_kernel(%arg0: i32, %arg1: i32, %arg2: memref<1x8x48xf32, #tpu.memory_space<vmem>>, %arg3: memref<1x8x48xf32, #tpu.memory_space<vmem>>, %arg4: memref<1x8x1xf32, #tpu.memory_space<vmem>>, %arg5: memref<1x8x16xf32, #tpu.memory_space<vmem>>) attributes {dimension_semantics = [#tpu.dimension_semantics<parallel>, #tpu.dimension_semantics<parallel>], iteration_bounds = array<i64: 2, 1>, scalar_prefetch = 0 : i64, scratch_operands = 0 : i64, tpu.core_type = #tpu.core_type<tc>, window_params = [{transform_indices = @transform_0, window_bounds = array<i64: 1, 8, 48>}, {transform_indices = @transform_1, window_bounds = array<i64: 1, 8, 48>}, {transform_indices = @transform_2, window_bounds = array<i64: 1, 8, 1>}, {transform_indices = @transform_3, window_bounds = array<i64: 1, 8, 16>}]} {
    %c8_i32 = arith.constant 8 : i32
    %0 = arith.muli %arg1, %c8_i32 : i32
    %c0 = arith.constant 0 : index
    %c0_0 = arith.constant 0 : index
    %c0_1 = arith.constant 0 : index
    %1 = vector.load %arg2[%c0, %c0_0, %c0_1] : memref<1x8x48xf32, #tpu.memory_space<vmem>>, vector<1x8x48xf32>
    %2 = vector.shape_cast %1 : vector<1x8x48xf32> to vector<8x48xf32>
    %c0_2 = arith.constant 0 : index
    %c0_3 = arith.constant 0 : index
    %c0_4 = arith.constant 0 : index
    %3 = vector.load %arg3[%c0_2, %c0_3, %c0_4] : memref<1x8x48xf32, #tpu.memory_space<vmem>>, vector<1x8x48xf32>
    %4 = vector.shape_cast %3 : vector<1x8x48xf32> to vector<8x48xf32>
    %c0_5 = arith.constant 0 : index
    %c0_6 = arith.constant 0 : index
    %c0_7 = arith.constant 0 : index
    %5 = vector.load %arg4[%c0_5, %c0_6, %c0_7] : memref<1x8x1xf32, #tpu.memory_space<vmem>>, vector<1x8x1xf32>
    %6 = vector.shape_cast %5 : vector<1x8x1xf32> to vector<8x1xf32>
    %7 = tpu.iota {dimensions = array<i32: 0>} : vector<8x8xi32>
    %8 = vector.broadcast %0 : i32 to vector<8x8xi32>
    %9 = arith.addi %8, %7 : vector<8x8xi32>
    %10 = tpu.iota {dimensions = array<i32: 1>} : vector<8x8xi32>
    %11 = arith.cmpi slt, %10, %9 : vector<8x8xi32>
    %12 = arith.subi %9, %10 : vector<8x8xi32>
    %13 = math.absi %12 : vector<8x8xi32>
    %14 = arith.sitofp %13 : vector<8x8xi32> to vector<8x8xf32>
    %15 = vector.extract_strided_slice %2 {offsets = [0, 0], sizes = [8, 8], strides = [1, 1]} : vector<8x48xf32> to vector<8x8xf32>
    %cst = arith.constant 0.353553385 : f32
    %16 = vector.broadcast %cst : f32 to vector<8x8xf32>
    %17 = arith.mulf %15, %16 : vector<8x8xf32>
    %18 = arith.truncf %17 : vector<8x8xf32> to vector<8x8xbf16>
    %19 = vector.extract_strided_slice %4 {offsets = [0, 16], sizes = [8, 8], strides = [1, 1]} : vector<8x48xf32> to vector<8x8xf32>
    %20 = arith.truncf %19 : vector<8x8xf32> to vector<8x8xbf16>
    %21 = vector.extract_strided_slice %4 {offsets = [0, 32], sizes = [8, 8], strides = [1, 1]} : vector<8x48xf32> to vector<8x8xf32>
    %22 = arith.truncf %21 : vector<8x8xf32> to vector<8x8xbf16>
    %cst_8 = arith.constant 2.000000e+00 : f32
    %23 = vector.broadcast %cst_8 : f32 to vector<8x1xf32>
    %24 = arith.addf %6, %23 : vector<8x1xf32>
    %cst_9 = arith.constant dense<0.000000e+00> : vector<8x8xf32>
    %25 = tpu.matmul %18, %20, %cst_9 {dimension_numbers = #tpu.dot_dimension_numbers<[1], [1], [0], [0], [0, 0, 1, 0], [], []>} : vector<8x8xbf16>, vector<8x8xbf16>, vector<8x8xf32> -> vector<8x8xf32>
    %26 = vector.broadcast %24 : vector<8x1xf32> to vector<8x8xf32>
    %27 = arith.cmpf ogt, %14, %26 : vector<8x8xf32>
    %28 = arith.ori %11, %27 : vector<8x8xi1>
    %cst_10 = arith.constant -9.99999984E+17 : f32
    %29 = vector.broadcast %cst_10 : f32 to vector<8x8xf32>
    %30 = arith.select %28, %29, %25 : vector<8x8xi1>, vector<8x8xf32>
    %31 = arith.addf %30, %25 : vector<8x8xf32>
    %cst_11 = arith.constant dense<0xFF800000> : vector<8xf32>
    %32 = vector.multi_reduction <maximumf>, %31, %cst_11 [1] : vector<8x8xf32> to vector<8xf32>
    %33 = vector.shape_cast %32 : vector<8xf32> to vector<8x1xf32>
    %34 = vector.broadcast %33 : vector<8x1xf32> to vector<8x8xf32>
    %35 = arith.subf %31, %34 : vector<8x8xf32>
    %36 = math.exp %35 : vector<8x8xf32>
    %cst_12 = arith.constant dense<0.000000e+00> : vector<8xf32>
    %37 = vector.multi_reduction <add>, %36, %cst_12 [1] : vector<8x8xf32> to vector<8xf32>
    %38 = vector.shape_cast %37 : vector<8xf32> to vector<8x1xf32>
    %39 = tpu.reciprocal %38 {approx = true} : vector<8x1xf32> -> vector<8x1xf32>
    %40 = vector.broadcast %39 : vector<8x1xf32> to vector<8x8xf32>
    %41 = arith.mulf %36, %40 : vector<8x8xf32>
    %42 = arith.truncf %41 : vector<8x8xf32> to vector<8x8xbf16>
    %cst_13 = arith.constant dense<0.000000e+00> : vector<8x8xf32>
    %43 = tpu.matmul %42, %22, %cst_13 {dimension_numbers = #tpu.dot_dimension_numbers<[1], [0], [0], [1], [0, 0, 1, 1], [], []>} : vector<8x8xbf16>, vector<8x8xbf16>, vector<8x8xf32> -> vector<8x8xf32>
    %44 = vector.extract_strided_slice %2 {offsets = [0, 8], sizes = [8, 8], strides = [1, 1]} : vector<8x48xf32> to vector<8x8xf32>
    %cst_14 = arith.constant 0.353553385 : f32
    %45 = vector.broadcast %cst_14 : f32 to vector<8x8xf32>
    %46 = arith.mulf %44, %45 : vector<8x8xf32>
    %47 = arith.truncf %46 : vector<8x8xf32> to vector<8x8xbf16>
    %48 = vector.extract_strided_slice %4 {offsets = [0, 24], sizes = [8, 8], strides = [1, 1]} : vector<8x48xf32> to vector<8x8xf32>
    %49 = arith.truncf %48 : vector<8x8xf32> to vector<8x8xbf16>
    %50 = vector.extract_strided_slice %4 {offsets = [0, 40], sizes = [8, 8], strides = [1, 1]} : vector<8x48xf32> to vector<8x8xf32>
    %51 = arith.truncf %50 : vector<8x8xf32> to vector<8x8xbf16>
    %cst_15 = arith.constant 4.000000e+00 : f32
    %52 = vector.broadcast %cst_15 : f32 to vector<8x1xf32>
    %53 = arith.addf %6, %52 : vector<8x1xf32>
    %cst_16 = arith.constant dense<0.000000e+00> : vector<8x8xf32>
    %54 = tpu.matmul %47, %49, %cst_16 {dimension_numbers = #tpu.dot_dimension_numbers<[1], [1], [0], [0], [0, 0, 1, 0], [], []>} : vector<8x8xbf16>, vector<8x8xbf16>, vector<8x8xf32> -> vector<8x8xf32>
    %55 = vector.broadcast %53 : vector<8x1xf32> to vector<8x8xf32>
    %56 = arith.cmpf ogt, %14, %55 : vector<8x8xf32>
    %57 = arith.ori %11, %56 : vector<8x8xi1>
    %cst_17 = arith.constant -9.99999984E+17 : f32
    %58 = vector.broadcast %cst_17 : f32 to vector<8x8xf32>
    %59 = arith.select %57, %58, %54 : vector<8x8xi1>, vector<8x8xf32>
    %60 = arith.addf %59, %54 : vector<8x8xf32>
    %cst_18 = arith.constant dense<0xFF800000> : vector<8xf32>
    %61 = vector.multi_reduction <maximumf>, %60, %cst_18 [1] : vector<8x8xf32> to vector<8xf32>
    %62 = vector.shape_cast %61 : vector<8xf32> to vector<8x1xf32>
    %63 = vector.broadcast %62 : vector<8x1xf32> to vector<8x8xf32>
    %64 = arith.subf %60, %63 : vector<8x8xf32>
    %65 = math.exp %64 : vector<8x8xf32>
    %cst_19 = arith.constant dense<0.000000e+00> : vector<8xf32>
    %66 = vector.multi_reduction <add>, %65, %cst_19 [1] : vector<8x8xf32> to vector<8xf32>
    %67 = vector.shape_cast %66 : vector<8xf32> to vector<8x1xf32>
    %68 = tpu.reciprocal %67 {approx = true} : vector<8x1xf32> -> vector<8x1xf32>
    %69 = vector.broadcast %68 : vector<8x1xf32> to vector<8x8xf32>
    %70 = arith.mulf %65, %69 : vector<8x8xf32>
    %71 = arith.truncf %70 : vector<8x8xf32> to vector<8x8xbf16>
    %cst_20 = arith.constant dense<0.000000e+00> : vector<8x8xf32>
    %72 = tpu.matmul %71, %51, %cst_20 {dimension_numbers = #tpu.dot_dimension_numbers<[1], [0], [0], [1], [0, 0, 1, 1], [], []>} : vector<8x8xbf16>, vector<8x8xbf16>, vector<8x8xf32> -> vector<8x8xf32>
    %73 = tpu.concatenate %43, %72 in 1 : vector<8x8xf32>, vector<8x8xf32> -> vector<8x16xf32>
    %c0_21 = arith.constant 0 : index
    %c0_22 = arith.constant 0 : index
    %c0_23 = arith.constant 0 : index
    %74 = vector.load %arg5[%c0_21, %c0_22, %c0_23] : memref<1x8x16xf32, #tpu.memory_space<vmem>>, vector<1x8x16xf32>
    %75 = vector.shape_cast %74 : vector<1x8x16xf32> to vector<8x16xf32>
    %76 = vector.shape_cast %73 : vector<8x16xf32> to vector<1x8x16xf32>
    tpu.vector_store %arg5[%c0_21, %c0_22, %c0_23], %76 {strides = array<i32>} : memref<1x8x16xf32, #tpu.memory_space<vmem>>, vector<1x8x16xf32>,
    return
  }
  func.func @transform_0(%arg0: i32, %arg1: i32) -> (i32, i32, i32) {
    %c0_i32 = arith.constant 0 : i32
    %c0_i32_0 = arith.constant 0 : i32
    return %arg0, %arg1, %c0_i32 : i32, i32, i32
  }
  func.func @transform_1(%arg0: i32, %arg1: i32) -> (i32, i32, i32) {
    %c0_i32 = arith.constant 0 : i32
    %c0_i32_0 = arith.constant 0 : i32
    %c0_i32_1 = arith.constant 0 : i32
    return %arg0, %c0_i32, %c0_i32_0 : i32, i32, i32
  }
  func.func @transform_2(%arg0: i32, %arg1: i32) -> (i32, i32, i32) {
    %c0_i32 = arith.constant 0 : i32
    %c0_i32_0 = arith.constant 0 : i32
    return %arg0, %arg1, %c0_i32 : i32, i32, i32
  }
  func.func @transform_3(%arg0: i32, %arg1: i32) -> (i32, i32, i32) {
    %c0_i32 = arith.constant 0 : i32
    %c0_i32_0 = arith.constant 0 : i32
    return %arg0, %arg1, %c0_i32 : i32, i32, i32
  }
}

module attributes {stable_mosaic.version = 11 : i64} {
  func.func @_linear_kernel(%arg0: i32, %arg1: i32, %arg2: i32, %arg3: memref<8x16xf32, #tpu.memory_space<vmem>>, %arg4: memref<16x32xbf16, #tpu.memory_space<vmem>>, %arg5: memref<1x32xf32, #tpu.memory_space<vmem>>, %arg6: memref<8x32xf32, #tpu.memory_space<vmem>>) attributes {dimension_semantics = [#tpu.dimension_semantics<parallel>, #tpu.dimension_semantics<parallel>, #tpu.dimension_semantics<arbitrary>], iteration_bounds = array<i64: 2, 1, 1>, scalar_prefetch = 0 : i64, scratch_operands = 0 : i64, tpu.core_type = #tpu.core_type<tc>, window_params = [{transform_indices = @transform_0, window_bounds = array<i64: 8, 16>}, {transform_indices = @transform_1, window_bounds = array<i64: 16, 32>}, {transform_indices = @transform_2, window_bounds = array<i64: 1, 32>}, {transform_indices = @transform_3, window_bounds = array<i64: 8, 32>}]} {
    %c0 = arith.constant 0 : index
    %c0_0 = arith.constant 0 : index
    %0 = vector.load %arg3[%c0, %c0_0] : memref<8x16xf32, #tpu.memory_space<vmem>>, vector<8x16xf32>
    %1 = arith.truncf %0 : vector<8x16xf32> to vector<8x16xbf16>
    %c0_1 = arith.constant 0 : index
    %c0_2 = arith.constant 0 : index
    %2 = vector.load %arg4[%c0_1, %c0_2] : memref<16x32xbf16, #tpu.memory_space<vmem>>, vector<16x32xbf16>
    %cst = arith.constant dense<0.000000e+00> : vector<8x32xf32>
    %3 = tpu.matmul %1, %2, %cst {dimension_numbers = #tpu.dot_dimension_numbers<[1], [0], [0], [1], [0, 0, 1, 1], [], []>} : vector<8x16xbf16>, vector<16x32xbf16>, vector<8x32xf32> -> vector<8x32xf32>
    %c0_i32 = arith.constant 0 : i32
    %4 = arith.cmpi eq, %arg2, %c0_i32 : i32
    %5 = arith.extui %4 : i1 to i32
    %c0_i32_3 = arith.constant 0 : i32
    %6 = arith.cmpi ne, %5, %c0_i32_3 : i32
    scf.if %6 {
      %c0_6 = arith.constant 0 : index
      %c0_7 = arith.constant 0 : index
      %10 = vector.load %arg5[%c0_6, %c0_7] : memref<1x32xf32, #tpu.memory_space<vmem>>, vector<1x32xf32>
      %11 = vector.broadcast %10 : vector<1x32xf32> to vector<8x32xf32>
      %12 = arith.addf %11, %3 : vector<8x32xf32>
      %c0_8 = arith.constant 0 : index
      %c0_9 = arith.constant 0 : index
      %13 = vector.load %arg6[%c0_8, %c0_9] : memref<8x32xf32, #tpu.memory_space<vmem>>, vector<8x32xf32>
      tpu.vector_store %arg6[%c0_8, %c0_9], %12 {strides = array<i32>} : memref<8x32xf32, #tpu.memory_space<vmem>>, vector<8x32xf32>,
    } else {
    }
    %c0_i32_4 = arith.constant 0 : i32
    %7 = arith.cmpi sgt, %arg2, %c0_i32_4 : i32
    %8 = arith.extui %7 : i1 to i32
    %c0_i32_5 = arith.constant 0 : i32
    %9 = arith.cmpi ne, %8, %c0_i32_5 : i32
    scf.if %9 {
      %c0_6 = arith.constant 0 : index
      %c0_7 = arith.constant 0 : index
      %10 = vector.load %arg6[%c0_6, %c0_7] : memref<8x32xf32, #tpu.memory_space<vmem>>, vector<8x32xf32>
      %11 = arith.addf %10, %3 : vector<8x32xf32>
      %c0_8 = arith.constant 0 : index
      %c0_9 = arith.constant 0 : index
      %12 = vector.load %arg6[%c0_8, %c0_9] : memref<8x32xf32, #tpu.memory_space<vmem>>, vector<8x32xf32>
      tpu.vector_store %arg6[%c0_8, %c0_9], %11 {strides = array<i32>} : memref<8x32xf32, #tpu.memory_space<vmem>>, vector<8x32xf32>,
    } else {
    }
    return
  }
  func.func @transform_0(%arg0: i32, %arg1: i32, %arg2: i32) -> (i32, i32) {
    %c0_i32 = arith.constant 0 : i32
    return %arg0, %arg2 : i32, i32
  }
  func.func @transform_1(%arg0: i32, %arg1: i32, %arg2: i32) -> (i32, i32) {
    %c0_i32 = arith.constant 0 : i32
    return %arg2, %arg1 : i32, i32
  }
  func.func @transform_2(%arg0: i32, %arg1: i32, %arg2: i32) -> (i32, i32) {
    %c0_i32 = arith.constant 0 : i32
    %c0_i32_0 = arith.constant 0 : i32
    return %c0_i32, %arg1 : i32, i32
  }
  func.func @transform_3(%arg0: i32, %arg1: i32, %arg2: i32) -> (i32, i32) {
    %c0_i32 = arith.constant 0 : i32
    return %arg0, %arg1 : i32, i32
  }
}

module attributes {stable_mosaic.version = 11 : i64} {
  func.func @_add_layernorm_kernel(%arg0: i32, %arg1: memref<8x32xf32, #tpu.memory_space<vmem>>, %arg2: memref<8x32xf32, #tpu.memory_space<vmem>>, %arg3: memref<1x32xf32, #tpu.memory_space<vmem>>, %arg4: memref<1x32xf32, #tpu.memory_space<vmem>>, %arg5: memref<8x32xf32, #tpu.memory_space<vmem>>) attributes {dimension_semantics = [#tpu.dimension_semantics<parallel>], iteration_bounds = array<i64: 2>, scalar_prefetch = 0 : i64, scratch_operands = 0 : i64, tpu.core_type = #tpu.core_type<tc>, window_params = [{transform_indices = @transform_0, window_bounds = array<i64: 8, 32>}, {transform_indices = @transform_1, window_bounds = array<i64: 8, 32>}, {pipeline_mode = #tpu.pipeline_mode<synchronous>, transform_indices = @transform_2, window_bounds = array<i64: 1, 32>}, {pipeline_mode = #tpu.pipeline_mode<synchronous>, transform_indices = @transform_3, window_bounds = array<i64: 1, 32>}, {transform_indices = @transform_4, window_bounds = array<i64: 8, 32>}]} {
    %c0 = arith.constant 0 : index
    %c0_0 = arith.constant 0 : index
    %0 = vector.load %arg1[%c0, %c0_0] : memref<8x32xf32, #tpu.memory_space<vmem>>, vector<8x32xf32>
    %c0_1 = arith.constant 0 : index
    %c0_2 = arith.constant 0 : index
    %1 = vector.load %arg2[%c0_1, %c0_2] : memref<8x32xf32, #tpu.memory_space<vmem>>, vector<8x32xf32>
    %2 = arith.addf %0, %1 : vector<8x32xf32>
    %cst = arith.constant dense<0.000000e+00> : vector<8xf32>
    %3 = vector.multi_reduction <add>, %2, %cst [1] : vector<8x32xf32> to vector<8xf32>
    %4 = vector.shape_cast %3 : vector<8xf32> to vector<8x1xf32>
    %cst_3 = arith.constant 3.200000e+01 : f32
    %5 = vector.broadcast %cst_3 : f32 to vector<8x1xf32>
    %6 = arith.divf %4, %5 : vector<8x1xf32>
    %7 = vector.broadcast %6 : vector<8x1xf32> to vector<8x32xf32>
    %8 = arith.subf %2, %7 : vector<8x32xf32>
    %9 = arith.mulf %8, %8 : vector<8x32xf32>
    %cst_4 = arith.constant dense<0.000000e+00> : vector<8xf32>
    %10 = vector.multi_reduction <add>, %9, %cst_4 [1] : vector<8x32xf32> to vector<8xf32>
    %11 = vector.shape_cast %10 : vector<8xf32> to vector<8x1xf32>
    %cst_5 = arith.constant 3.200000e+01 : f32
    %12 = vector.broadcast %cst_5 : f32 to vector<8x1xf32>
    %13 = arith.divf %11, %12 : vector<8x1xf32>
    %cst_6 = arith.constant 9.99999974E-6 : f32
    %14 = vector.broadcast %cst_6 : f32 to vector<8x1xf32>
    %15 = arith.addf %13, %14 : vector<8x1xf32>
    %16 = math.rsqrt %15 : vector<8x1xf32>
    %17 = vector.broadcast %16 : vector<8x1xf32> to vector<8x32xf32>
    %18 = arith.mulf %8, %17 : vector<8x32xf32>
    %c0_7 = arith.constant 0 : index
    %c0_8 = arith.constant 0 : index
    %19 = vector.load %arg3[%c0_7, %c0_8] : memref<1x32xf32, #tpu.memory_space<vmem>>, vector<1x32xf32>
    %20 = vector.broadcast %19 : vector<1x32xf32> to vector<8x32xf32>
    %21 = arith.mulf %18, %20 : vector<8x32xf32>
    %c0_9 = arith.constant 0 : index
    %c0_10 = arith.constant 0 : index
    %22 = vector.load %arg4[%c0_9, %c0_10] : memref<1x32xf32, #tpu.memory_space<vmem>>, vector<1x32xf32>
    %23 = vector.broadcast %22 : vector<1x32xf32> to vector<8x32xf32>
    %24 = arith.addf %21, %23 : vector<8x32xf32>
    %c0_11 = arith.constant 0 : index
    %c0_12 = arith.constant 0 : index
    %25 = vector.load %arg5[%c0_11, %c0_12] : memref<8x32xf32, #tpu.memory_space<vmem>>, vector<8x32xf32>
    tpu.vector_store %arg5[%c0_11, %c0_12], %24 {strides = array<i32>} : memref<8x32xf32, #tpu.memory_space<vmem>>, vector<8x32xf32>,
    return
  }
  func.func @transform_0(%arg0: i32) -> (i32, i32) {
    %c0_i32 = arith.constant 0 : i32
    %c0_i32_0 = arith.constant 0 : i32
    return %arg0, %c0_i32 : i32, i32
  }
  func.func @transform_1(%arg0: i32) -> (i32, i32) {
    %c0_i32 = arith.constant 0 : i32
    %c0_i32_0 = arith.constant 0 : i32
    return %arg0, %c0_i32 : i32, i32
  }
  func.func @transform_2(%arg0: i32) -> (i32, i32) {
    %c0_i32 = arith.constant 0 : i32
    %c0_i32_0 = arith.constant 0 : i32
    %c0_i32_1 = arith.constant 0 : i32
    return %c0_i32, %c0_i32_0 : i32, i32
  }
  func.func @transform_3(%arg0: i32) -> (i32, i32) {
    %c0_i32 = arith.constant 0 : i32
    %c0_i32_0 = arith.constant 0 : i32
    %c0_i32_1 = arith.constant 0 : i32
    return %c0_i32, %c0_i32_0 : i32, i32
  }
  func.func @transform_4(%arg0: i32) -> (i32, i32) {
    %c0_i32 = arith.constant 0 : i32
    %c0_i32_0 = arith.constant 0 : i32
    return %arg0, %c0_i32 : i32, i32
  }
}

module attributes {stable_mosaic.version = 11 : i64} {
  func.func @_linear_kernel(%arg0: i32, %arg1: i32, %arg2: i32, %arg3: memref<8x32xf32, #tpu.memory_space<vmem>>, %arg4: memref<32x32xbf16, #tpu.memory_space<vmem>>, %arg5: memref<1x32xf32, #tpu.memory_space<vmem>>, %arg6: memref<8x32xf32, #tpu.memory_space<vmem>>) attributes {dimension_semantics = [#tpu.dimension_semantics<parallel>, #tpu.dimension_semantics<parallel>, #tpu.dimension_semantics<arbitrary>], iteration_bounds = array<i64: 2, 1, 1>, scalar_prefetch = 0 : i64, scratch_operands = 0 : i64, tpu.core_type = #tpu.core_type<tc>, window_params = [{transform_indices = @transform_0, window_bounds = array<i64: 8, 32>}, {transform_indices = @transform_1, window_bounds = array<i64: 32, 32>}, {transform_indices = @transform_2, window_bounds = array<i64: 1, 32>}, {transform_indices = @transform_3, window_bounds = array<i64: 8, 32>}]} {
    %c0 = arith.constant 0 : index
    %c0_0 = arith.constant 0 : index
    %0 = vector.load %arg3[%c0, %c0_0] : memref<8x32xf32, #tpu.memory_space<vmem>>, vector<8x32xf32>
    %1 = arith.truncf %0 : vector<8x32xf32> to vector<8x32xbf16>
    %c0_1 = arith.constant 0 : index
    %c0_2 = arith.constant 0 : index
    %2 = vector.load %arg4[%c0_1, %c0_2] : memref<32x32xbf16, #tpu.memory_space<vmem>>, vector<32x32xbf16>
    %cst = arith.constant dense<0.000000e+00> : vector<8x32xf32>
    %3 = tpu.matmul %1, %2, %cst {dimension_numbers = #tpu.dot_dimension_numbers<[1], [0], [0], [1], [0, 0, 1, 1], [], []>} : vector<8x32xbf16>, vector<32x32xbf16>, vector<8x32xf32> -> vector<8x32xf32>
    %c0_i32 = arith.constant 0 : i32
    %4 = arith.cmpi eq, %arg2, %c0_i32 : i32
    %5 = arith.extui %4 : i1 to i32
    %c0_i32_3 = arith.constant 0 : i32
    %6 = arith.cmpi ne, %5, %c0_i32_3 : i32
    scf.if %6 {
      %c0_6 = arith.constant 0 : index
      %c0_7 = arith.constant 0 : index
      %10 = vector.load %arg5[%c0_6, %c0_7] : memref<1x32xf32, #tpu.memory_space<vmem>>, vector<1x32xf32>
      %11 = vector.broadcast %10 : vector<1x32xf32> to vector<8x32xf32>
      %12 = arith.addf %11, %3 : vector<8x32xf32>
      %c0_8 = arith.constant 0 : index
      %c0_9 = arith.constant 0 : index
      %13 = vector.load %arg6[%c0_8, %c0_9] : memref<8x32xf32, #tpu.memory_space<vmem>>, vector<8x32xf32>
      tpu.vector_store %arg6[%c0_8, %c0_9], %12 {strides = array<i32>} : memref<8x32xf32, #tpu.memory_space<vmem>>, vector<8x32xf32>,
    } else {
    }
    %c0_i32_4 = arith.constant 0 : i32
    %7 = arith.cmpi sgt, %arg2, %c0_i32_4 : i32
    %8 = arith.extui %7 : i1 to i32
    %c0_i32_5 = arith.constant 0 : i32
    %9 = arith.cmpi ne, %8, %c0_i32_5 : i32
    scf.if %9 {
      %c0_6 = arith.constant 0 : index
      %c0_7 = arith.constant 0 : index
      %10 = vector.load %arg6[%c0_6, %c0_7] : memref<8x32xf32, #tpu.memory_space<vmem>>, vector<8x32xf32>
      %11 = arith.addf %10, %3 : vector<8x32xf32>
      %c0_8 = arith.constant 0 : index
      %c0_9 = arith.constant 0 : index
      %12 = vector.load %arg6[%c0_8, %c0_9] : memref<8x32xf32, #tpu.memory_space<vmem>>, vector<8x32xf32>
      tpu.vector_store %arg6[%c0_8, %c0_9], %11 {strides = array<i32>} : memref<8x32xf32, #tpu.memory_space<vmem>>, vector<8x32xf32>,
    } else {
    }
    return
  }
  func.func @transform_0(%arg0: i32, %arg1: i32, %arg2: i32) -> (i32, i32) {
    %c0_i32 = arith.constant 0 : i32
    return %arg0, %arg2 : i32, i32
  }
  func.func @transform_1(%arg0: i32, %arg1: i32, %arg2: i32) -> (i32, i32) {
    %c0_i32 = arith.constant 0 : i32
    return %arg2, %arg1 : i32, i32
  }
  func.func @transform_2(%arg0: i32, %arg1: i32, %arg2: i32) -> (i32, i32) {
    %c0_i32 = arith.constant 0 : i32
    %c0_i32_0 = arith.constant 0 : i32
    return %c0_i32, %arg1 : i32, i32
  }
  func.func @transform_3(%arg0: i32, %arg1: i32, %arg2: i32) -> (i32, i32) {
    %c0_i32 = arith.constant 0 : i32
    return %arg0, %arg1 : i32, i32
  }
}

module attributes {stable_mosaic.version = 11 : i64} {
  func.func @_linear_kernel(%arg0: i32, %arg1: i32, %arg2: i32, %arg3: memref<8x32xf32, #tpu.memory_space<vmem>>, %arg4: memref<32x32xbf16, #tpu.memory_space<vmem>>, %arg5: memref<1x32xf32, #tpu.memory_space<vmem>>, %arg6: memref<8x32xf32, #tpu.memory_space<vmem>>) attributes {dimension_semantics = [#tpu.dimension_semantics<parallel>, #tpu.dimension_semantics<parallel>, #tpu.dimension_semantics<arbitrary>], iteration_bounds = array<i64: 2, 1, 1>, scalar_prefetch = 0 : i64, scratch_operands = 0 : i64, tpu.core_type = #tpu.core_type<tc>, window_params = [{transform_indices = @transform_0, window_bounds = array<i64: 8, 32>}, {transform_indices = @transform_1, window_bounds = array<i64: 32, 32>}, {transform_indices = @transform_2, window_bounds = array<i64: 1, 32>}, {transform_indices = @transform_3, window_bounds = array<i64: 8, 32>}]} {
    %c0 = arith.constant 0 : index
    %c0_0 = arith.constant 0 : index
    %0 = vector.load %arg3[%c0, %c0_0] : memref<8x32xf32, #tpu.memory_space<vmem>>, vector<8x32xf32>
    %cst = arith.constant 0.000000e+00 : f32
    %1 = vector.broadcast %cst : f32 to vector<8x32xf32>
    %2 = arith.maximumf %0, %1 : vector<8x32xf32>
    %3 = arith.truncf %2 : vector<8x32xf32> to vector<8x32xbf16>
    %c0_1 = arith.constant 0 : index
    %c0_2 = arith.constant 0 : index
    %4 = vector.load %arg4[%c0_1, %c0_2] : memref<32x32xbf16, #tpu.memory_space<vmem>>, vector<32x32xbf16>
    %cst_3 = arith.constant dense<0.000000e+00> : vector<8x32xf32>
    %5 = tpu.matmul %3, %4, %cst_3 {dimension_numbers = #tpu.dot_dimension_numbers<[1], [0], [0], [1], [0, 0, 1, 1], [], []>} : vector<8x32xbf16>, vector<32x32xbf16>, vector<8x32xf32> -> vector<8x32xf32>
    %c0_i32 = arith.constant 0 : i32
    %6 = arith.cmpi eq, %arg2, %c0_i32 : i32
    %7 = arith.extui %6 : i1 to i32
    %c0_i32_4 = arith.constant 0 : i32
    %8 = arith.cmpi ne, %7, %c0_i32_4 : i32
    scf.if %8 {
      %c0_7 = arith.constant 0 : index
      %c0_8 = arith.constant 0 : index
      %12 = vector.load %arg5[%c0_7, %c0_8] : memref<1x32xf32, #tpu.memory_space<vmem>>, vector<1x32xf32>
      %13 = vector.broadcast %12 : vector<1x32xf32> to vector<8x32xf32>
      %14 = arith.addf %13, %5 : vector<8x32xf32>
      %c0_9 = arith.constant 0 : index
      %c0_10 = arith.constant 0 : index
      %15 = vector.load %arg6[%c0_9, %c0_10] : memref<8x32xf32, #tpu.memory_space<vmem>>, vector<8x32xf32>
      tpu.vector_store %arg6[%c0_9, %c0_10], %14 {strides = array<i32>} : memref<8x32xf32, #tpu.memory_space<vmem>>, vector<8x32xf32>,
    } else {
    }
    %c0_i32_5 = arith.constant 0 : i32
    %9 = arith.cmpi sgt, %arg2, %c0_i32_5 : i32
    %10 = arith.extui %9 : i1 to i32
    %c0_i32_6 = arith.constant 0 : i32
    %11 = arith.cmpi ne, %10, %c0_i32_6 : i32
    scf.if %11 {
      %c0_7 = arith.constant 0 : index
      %c0_8 = arith.constant 0 : index
      %12 = vector.load %arg6[%c0_7, %c0_8] : memref<8x32xf32, #tpu.memory_space<vmem>>, vector<8x32xf32>
      %13 = arith.addf %12, %5 : vector<8x32xf32>
      %c0_9 = arith.constant 0 : index
      %c0_10 = arith.constant 0 : index
      %14 = vector.load %arg6[%c0_9, %c0_10] : memref<8x32xf32, #tpu.memory_space<vmem>>, vector<8x32xf32>
      tpu.vector_store %arg6[%c0_9, %c0_10], %13 {strides = array<i32>} : memref<8x32xf32, #tpu.memory_space<vmem>>, vector<8x32xf32>,
    } else {
    }
    return
  }
  func.func @transform_0(%arg0: i32, %arg1: i32, %arg2: i32) -> (i32, i32) {
    %c0_i32 = arith.constant 0 : i32
    return %arg0, %arg2 : i32, i32
  }
  func.func @transform_1(%arg0: i32, %arg1: i32, %arg2: i32) -> (i32, i32) {
    %c0_i32 = arith.constant 0 : i32
    return %arg2, %arg1 : i32, i32
  }
  func.func @transform_2(%arg0: i32, %arg1: i32, %arg2: i32) -> (i32, i32) {
    %c0_i32 = arith.constant 0 : i32
    %c0_i32_0 = arith.constant 0 : i32
    return %c0_i32, %arg1 : i32, i32
  }
  func.func @transform_3(%arg0: i32, %arg1: i32, %arg2: i32) -> (i32, i32) {
    %c0_i32 = arith.constant 0 : i32
    return %arg0, %arg1 : i32, i32
  }
}

module attributes {stable_mosaic.version = 11 : i64} {
  func.func @_add_layernorm_kernel(%arg0: i32, %arg1: memref<8x32xf32, #tpu.memory_space<vmem>>, %arg2: memref<8x32xf32, #tpu.memory_space<vmem>>, %arg3: memref<1x32xf32, #tpu.memory_space<vmem>>, %arg4: memref<1x32xf32, #tpu.memory_space<vmem>>, %arg5: memref<8x32xf32, #tpu.memory_space<vmem>>) attributes {dimension_semantics = [#tpu.dimension_semantics<parallel>], iteration_bounds = array<i64: 2>, scalar_prefetch = 0 : i64, scratch_operands = 0 : i64, tpu.core_type = #tpu.core_type<tc>, window_params = [{transform_indices = @transform_0, window_bounds = array<i64: 8, 32>}, {transform_indices = @transform_1, window_bounds = array<i64: 8, 32>}, {pipeline_mode = #tpu.pipeline_mode<synchronous>, transform_indices = @transform_2, window_bounds = array<i64: 1, 32>}, {pipeline_mode = #tpu.pipeline_mode<synchronous>, transform_indices = @transform_3, window_bounds = array<i64: 1, 32>}, {transform_indices = @transform_4, window_bounds = array<i64: 8, 32>}]} {
    %c0 = arith.constant 0 : index
    %c0_0 = arith.constant 0 : index
    %0 = vector.load %arg1[%c0, %c0_0] : memref<8x32xf32, #tpu.memory_space<vmem>>, vector<8x32xf32>
    %c0_1 = arith.constant 0 : index
    %c0_2 = arith.constant 0 : index
    %1 = vector.load %arg2[%c0_1, %c0_2] : memref<8x32xf32, #tpu.memory_space<vmem>>, vector<8x32xf32>
    %2 = arith.addf %0, %1 : vector<8x32xf32>
    %cst = arith.constant dense<0.000000e+00> : vector<8xf32>
    %3 = vector.multi_reduction <add>, %2, %cst [1] : vector<8x32xf32> to vector<8xf32>
    %4 = vector.shape_cast %3 : vector<8xf32> to vector<8x1xf32>
    %cst_3 = arith.constant 3.200000e+01 : f32
    %5 = vector.broadcast %cst_3 : f32 to vector<8x1xf32>
    %6 = arith.divf %4, %5 : vector<8x1xf32>
    %7 = vector.broadcast %6 : vector<8x1xf32> to vector<8x32xf32>
    %8 = arith.subf %2, %7 : vector<8x32xf32>
    %9 = arith.mulf %8, %8 : vector<8x32xf32>
    %cst_4 = arith.constant dense<0.000000e+00> : vector<8xf32>
    %10 = vector.multi_reduction <add>, %9, %cst_4 [1] : vector<8x32xf32> to vector<8xf32>
    %11 = vector.shape_cast %10 : vector<8xf32> to vector<8x1xf32>
    %cst_5 = arith.constant 3.200000e+01 : f32
    %12 = vector.broadcast %cst_5 : f32 to vector<8x1xf32>
    %13 = arith.divf %11, %12 : vector<8x1xf32>
    %cst_6 = arith.constant 9.99999974E-6 : f32
    %14 = vector.broadcast %cst_6 : f32 to vector<8x1xf32>
    %15 = arith.addf %13, %14 : vector<8x1xf32>
    %16 = math.rsqrt %15 : vector<8x1xf32>
    %17 = vector.broadcast %16 : vector<8x1xf32> to vector<8x32xf32>
    %18 = arith.mulf %8, %17 : vector<8x32xf32>
    %c0_7 = arith.constant 0 : index
    %c0_8 = arith.constant 0 : index
    %19 = vector.load %arg3[%c0_7, %c0_8] : memref<1x32xf32, #tpu.memory_space<vmem>>, vector<1x32xf32>
    %20 = vector.broadcast %19 : vector<1x32xf32> to vector<8x32xf32>
    %21 = arith.mulf %18, %20 : vector<8x32xf32>
    %c0_9 = arith.constant 0 : index
    %c0_10 = arith.constant 0 : index
    %22 = vector.load %arg4[%c0_9, %c0_10] : memref<1x32xf32, #tpu.memory_space<vmem>>, vector<1x32xf32>
    %23 = vector.broadcast %22 : vector<1x32xf32> to vector<8x32xf32>
    %24 = arith.addf %21, %23 : vector<8x32xf32>
    %c0_11 = arith.constant 0 : index
    %c0_12 = arith.constant 0 : index
    %25 = vector.load %arg5[%c0_11, %c0_12] : memref<8x32xf32, #tpu.memory_space<vmem>>, vector<8x32xf32>
    tpu.vector_store %arg5[%c0_11, %c0_12], %24 {strides = array<i32>} : memref<8x32xf32, #tpu.memory_space<vmem>>, vector<8x32xf32>,
    return
  }
  func.func @transform_0(%arg0: i32) -> (i32, i32) {
    %c0_i32 = arith.constant 0 : i32
    %c0_i32_0 = arith.constant 0 : i32
    return %arg0, %c0_i32 : i32, i32
  }
  func.func @transform_1(%arg0: i32) -> (i32, i32) {
    %c0_i32 = arith.constant 0 : i32
    %c0_i32_0 = arith.constant 0 : i32
    return %arg0, %c0_i32 : i32, i32
  }
  func.func @transform_2(%arg0: i32) -> (i32, i32) {
    %c0_i32 = arith.constant 0 : i32
    %c0_i32_0 = arith.constant 0 : i32
    %c0_i32_1 = arith.constant 0 : i32
    return %c0_i32, %c0_i32_0 : i32, i32
  }
  func.func @transform_3(%arg0: i32) -> (i32, i32) {
    %c0_i32 = arith.constant 0 : i32
    %c0_i32_0 = arith.constant 0 : i32
    %c0_i32_1 = arith.constant 0 : i32
    return %c0_i32, %c0_i32_0 : i32, i32
  }
  func.func @transform_4(%arg0: i32) -> (i32, i32) {
    %c0_i32 = arith.constant 0 : i32
    %c0_i32_0 = arith.constant 0 : i32
    return %arg0, %c0_i32 : i32, i32
  }
}

</mosaic_0001>

<llo_original>
// kernel: transformer_forward.19
$region0: #{transformer_forward.19}
  #allocation0 [shape = 'u32[]', space=smem, size = 0x4, offset = 0x4, fixed_abs, tag = 'smem constant byte address 0x4 - core index']
  #allocation1 [shape = 'u32[144,128]{1,0:T(1,128)}', space=vmem, size = 0x12000, scoped, tag = 'internal scratch']
  %s0 = inlined_call_operand.vmem [shape: f32[16,8], index: 0, kind: input, shape index: {}]
  %s1 = inlined_call_operand.vmem [shape: bf16[8,32], index: 1, kind: input, shape index: {}]
  %s2 = inlined_call_operand.vmem [shape: f32[1,32], index: 2, kind: input, shape index: {}]
  %s3 = inlined_call_operand.vmem [shape: f32[16,32], index: 3, kind: output, shape index: {}]
  %s4 = sld [smem:[#allocation0]]
  $region53: #{transformer_forward.19} parent=0
    _
  %s6 = ssub.s32 1, %s4
  %s7 = scalar_select 0, %s6, %s4
  loop: start=0, step=1, limit=4
  $region2: #{transformer_forward.19} parent=0 // loop_pre_header
    _
  $region3: #{transformer_forward.19} parent=0 // loop_header
    %s9 = sphi 0, %s13
    %p10 = scmp.ge.s32.totalorder %s9, 4
    %s16 = sphi 0, %s35
    %s17 = sphi 0, %s31
    %s18 = sphi 0, %s27
    %s19 = sphi 0, %s16
    %s20 = sphi 0, %s17
    %s21 = sphi 0, %s18
    %s22 = sphi 0, %s19
    %s23 = sphi 0, %s20
    %s24 = sphi 0, %s21
    %s40 = sphi 0, %s42
    %s43 = sphi 0, %s40
    %s44 = sphi 0, %s43
    %s60 = sphi 0, %s44
    %s68 = sphi 0, %s70
    %s71 = sphi 0, %s68
    %s72 = sphi 0, %s71
    %s88 = sphi 0, %s72
    %s94 = sphi 0, %s96
    %s97 = sphi 0, %s94
    %s98 = sphi 0, %s97
    %s114 = sphi 0, %s98
    %s122 = sphi 0, %s124
    %s125 = sphi 0, %s122
    %s126 = sphi 0, %s125
    %s142 = sphi 0, %s126
  $region4: #{transformer_forward.19} parent=0 // loop_header_branch
    %12 = sbr.rel (%p10) target = $region8
  $region5: #{transformer_forward.19} parent=0 // loop_body
    %s14 = ssub.s32 %s9, 1
    %s15 = ssub.s32 %s9, 2
    %s25 = sadd.s32 1, %s18
    %p26 = scmp.ge.s32.totalorder %s25, 1
    %s27 = scalar_select %p26, 0, %s25
    %s28 = sadd.s32 1, %s17
    %s29 = scalar_select %p26, %s28, %s17
    %p30 = scmp.ge.s32.totalorder %s29, 1
    %s31 = scalar_select %p30, 0, %s29
    %s32 = sadd.s32 1, %s16
    %s33 = scalar_select %p30, %s32, %s16
    %p34 = scmp.ge.s32.totalorder %s33, 2
    %s35 = scalar_select %p34, 0, %s33
    %s36 = ssub.s32 %s16, %s35
    %s37 = ssub.s32 %s18, %s27
    %s38 = sor.u32 %s36, %s37
    %p39 = scmp.eq.s32.totalorder %s38, 0
    %s41 = sadd.s32 %s40, 1
    %s42 = scalar_select %p39, %s40, %s41
    %p45 = pneg %p39
    %p46 = scmp.eq.s32.totalorder %s9, 1
    %p47 = por %p45, %p46
    %p48 = scmp.ne.s32.totalorder %s40, %s43
    %p49 = scmp.eq.s32.totalorder %s9, 0
    %p50 = por %p48, %p49
    %p51 = scmp.ne.s32.totalorder %s40, %s43
    %p52 = scmp.eq.s32.totalorder %s14, 1
    %p53 = por %p51, %p52
    %p54 = scmp.ne.s32.totalorder %s43, %s44
    %p55 = scmp.eq.s32.totalorder %s14, 0
    %p56 = por %p54, %p55
    %p57 = scmp.ne.s32.totalorder %s43, %s44
    %p58 = scmp.eq.s32.totalorder %s15, 1
    %p59 = por %p57, %p58
    %p61 = scmp.ne.s32.totalorder %s44, %s60
    %p62 = scmp.eq.s32.totalorder %s15, 0
    %p63 = por %p61, %p62
    %s64 = ssub.s32 %s18, %s27
    %s65 = ssub.s32 %s17, %s31
    %s66 = sor.u32 %s64, %s65
    %p67 = scmp.eq.s32.totalorder %s66, 0
    %s69 = sadd.s32 %s68, 1
    %s70 = scalar_select %p67, %s68, %s69
    %p73 = pneg %p67
    %p74 = scmp.eq.s32.totalorder %s9, 1
    %p75 = por %p73, %p74
    %p76 = scmp.ne.s32.totalorder %s68, %s71
    %p77 = scmp.eq.s32.totalorder %s9, 0
    %p78 = por %p76, %p77
    %p79 = scmp.ne.s32.totalorder %s68, %s71
    %p80 = scmp.eq.s32.totalorder %s14, 1
    %p81 = por %p79, %p80
    %p82 = scmp.ne.s32.totalorder %s71, %s72
    %p83 = scmp.eq.s32.totalorder %s14, 0
    %p84 = por %p82, %p83
    %p85 = scmp.ne.s32.totalorder %s71, %s72
    %p86 = scmp.eq.s32.totalorder %s15, 1
    %p87 = por %p85, %p86
    %p89 = scmp.ne.s32.totalorder %s72, %s88
    %p90 = scmp.eq.s32.totalorder %s15, 0
    %p91 = por %p89, %p90
    %s92 = ssub.s32 %s17, %s31
    %p93 = scmp.eq.s32.totalorder %s92, 0
    %s95 = sadd.s32 %s94, 1
    %s96 = scalar_select %p93, %s94, %s95
    %p99 = pneg %p93
    %p100 = scmp.eq.s32.totalorder %s9, 1
    %p101 = por %p99, %p100
    %p102 = scmp.ne.s32.totalorder %s94, %s97
    %p103 = scmp.eq.s32.totalorder %s9, 0
    %p104 = por %p102, %p103
    %p105 = scmp.ne.s32.totalorder %s94, %s97
    %p106 = scmp.eq.s32.totalorder %s14, 1
    %p107 = por %p105, %p106
    %p108 = scmp.ne.s32.totalorder %s97, %s98
    %p109 = scmp.eq.s32.totalorder %s14, 0
    %p110 = por %p108, %p109
    %p111 = scmp.ne.s32.totalorder %s97, %s98
    %p112 = scmp.eq.s32.totalorder %s15, 1
    %p113 = por %p111, %p112
    %p115 = scmp.ne.s32.totalorder %s98, %s114
    %p116 = scmp.eq.s32.totalorder %s15, 0
    %p117 = por %p115, %p116
    %s118 = ssub.s32 %s16, %s35
    %s119 = ssub.s32 %s17, %s31
    %s120 = sor.u32 %s118, %s119
    %p121 = scmp.eq.s32.totalorder %s120, 0
    %s123 = sadd.s32 %s122, 1
    %s124 = scalar_select %p121, %s122, %s123
    %p127 = pneg %p121
    %p128 = scmp.eq.s32.totalorder %s9, 1
    %p129 = por %p127, %p128
    %p130 = scmp.ne.s32.totalorder %s122, %s125
    %p131 = scmp.eq.s32.totalorder %s9, 0
    %p132 = por %p130, %p131
    %p133 = scmp.ne.s32.totalorder %s122, %s125
    %p134 = scmp.eq.s32.totalorder %s14, 1
    %p135 = por %p133, %p134
    %p136 = scmp.ne.s32.totalorder %s125, %s126
    %p137 = scmp.eq.s32.totalorder %s14, 0
    %p138 = por %p136, %p137
    %p139 = scmp.ne.s32.totalorder %s125, %s126
    %p140 = scmp.eq.s32.totalorder %s15, 1
    %p141 = por %p139, %p140
    %p143 = scmp.ne.s32.totalorder %s126, %s142
    %p144 = scmp.eq.s32.totalorder %s15, 0
    %p145 = por %p143, %p144
    %p146 = scmp.le.s32.totalorder 1, %s9
    %p147 = scmp.lt.s32.totalorder %s9, 3
    %p148 = pnand %p146, %p147
    %p149 = pneg %p148
    // Predicated region
    $region9: #{transformer_forward.19} parent=5 // pred_check
      _
    $region10: #{transformer_forward.19} parent=5 // pred_check_branch
      %151 = sbr.rel (%p148) target = $region12
    $region11: #{transformer_forward.19} parent=5 // pred_region
      %s152 = ssub.s32 %s9, 1
      // Predicated region
      $region13: #{transformer_forward.19} parent=11 // pred_check
        %p153 = pneg %p84
      $region14: #{transformer_forward.19} parent=11 // pred_check_branch
        %155 = sbr.rel (%p153) target = $region16
      $region15: #{transformer_forward.19} parent=11 // pred_region
        %p156 = scmp.lt.s32.totalorder %s21, 0
        %s157 = scalar_select %p156, %s21, 0
        %p158 = scmp.lt.s32.totalorder %s20, 0
        %s159 = scalar_select %p158, %s20, 0
        %s160 = sadd.s32 %s159, %s157
        %s161 = smul.addr %s160, 4
        %s162 = scalar_lea.vmem %s1, %s161
      $region16: #{transformer_forward.19} parent=11 // pred_fallthru
        _
      // Predicated region
      $region17: #{transformer_forward.19} parent=11 // pred_check
        %p163 = pneg %p110
      $region18: #{transformer_forward.19} parent=11 // pred_check_branch
        %165 = sbr.rel (%p163) target = $region20
      $region19: #{transformer_forward.19} parent=11 // pred_region
        %p166 = scmp.lt.s32.totalorder %s20, 0
        %s167 = scalar_select %p166, %s20, 0
        %s168 = scalar_lea.vmem %s2, %s167
      $region20: #{transformer_forward.19} parent=11 // pred_fallthru
        _
    $region12: #{transformer_forward.19} parent=5 // pred_fallthru
      _
    %p169 = scmp.lt.s32.totalorder %s9, 2
    // Predicated region
    $region21: #{transformer_forward.19} parent=5 // pred_check
      %p170 = pneg %p169
    $region22: #{transformer_forward.19} parent=5 // pred_check_branch
      %172 = sbr.rel (%p170) target = $region24
    $region23: #{transformer_forward.19} parent=5 // pred_region
      // Predicated region
      $region25: #{transformer_forward.19} parent=23 // pred_check
        %p173 = pneg %p50
      $region26: #{transformer_forward.19} parent=23 // pred_check_branch
        %175 = sbr.rel (%p173) target = $region28
      $region27: #{transformer_forward.19} parent=23 // pred_region
        %p176 = scmp.lt.s32.totalorder %s16, 1
        %s177 = scalar_select %p176, %s16, 1
        %p178 = scmp.lt.s32.totalorder %s18, 0
        %s179 = scalar_select %p178, %s18, 0
        %s180 = sadd.s32 %s179, %s177
        %s181 = smul.addr %s180, 8
        %s182 = scalar_lea.vmem %s0, %s181
      $region28: #{transformer_forward.19} parent=23 // pred_fallthru
        _
    $region24: #{transformer_forward.19} parent=5 // pred_fallthru
      _
    %p183 = scmp.le.s32.totalorder 1, %s9
    %p184 = scmp.lt.s32.totalorder %s9, 3
    %p185 = pnand %p183, %p184
    %p186 = pneg %p185
    // Predicated region
    $region29: #{transformer_forward.19} parent=5 // pred_check
      _
    $region30: #{transformer_forward.19} parent=5 // pred_check_branch
      %188 = sbr.rel (%p185) target = $region32
    $region31: #{transformer_forward.19} parent=5 // pred_region
      %s189 = ssub.s32 %s9, 1
      %p190 = scmp.lt.s32.totalorder %s19, 1
      %s191 = scalar_select %p190, %s19, 1
      %p192 = scmp.lt.s32.totalorder %s21, 0
      %s193 = scalar_select %p192, %s21, 0
      %s194 = sadd.s32 %s193, %s191
      %s195 = smul.addr %s194, 8
      %s196 = scalar_lea.vmem %s0, %s195
      %p197 = pneg %p56
      %p198 = pneg %p53
      %p199 = scmp.lt.s32.totalorder %s21, 0
      %s200 = scalar_select %p199, %s21, 0
      %p201 = scmp.lt.s32.totalorder %s20, 0
      %s202 = scalar_select %p201, %s20, 0
      %s203 = sadd.s32 %s202, %s200
      %s204 = smul.addr %s203, 4
      %s205 = scalar_lea.vmem %s1, %s204
      %p206 = pneg %p84
      %p207 = pneg %p81
      %p208 = scmp.lt.s32.totalorder %s20, 0
      %s209 = scalar_select %p208, %s20, 0
      %s210 = scalar_lea.vmem %s2, %s209
      %p211 = pneg %p110
      %p212 = pneg %p107
      %p213 = pneg %p138
      %p214 = pneg %p135
      %p215 = scmp.lt.s32.totalorder %s19, 1
      %s216 = scalar_select %p215, %s19, 1
      %p217 = scmp.lt.s32.totalorder %s20, 0
      %s218 = scalar_select %p217, %s20, 0
      %s219 = sadd.s32 %s218, %s216
      %s220 = smul.addr %s219, 8
      %s221 = scalar_lea.vmem %s3, %s220
      %p222 = scmp.lt.s32.totalorder %s19, 1
      %s223 = scalar_select %p222, %s19, 1
      %p224 = scmp.lt.s32.totalorder %s21, 0
      %s225 = scalar_select %p224, %s21, 0
      %s226 = sadd.s32 %s225, %s223
      %s227 = smul.addr %s226, 8
      %s228 = scalar_lea.vmem %s0, %s227
      %p229 = scmp.lt.s32.totalorder %s21, 0
      %s230 = scalar_select %p229, %s21, 0
      %p231 = scmp.lt.s32.totalorder %s20, 0
      %s232 = scalar_select %p231, %s20, 0
      %s233 = sadd.s32 %s232, %s230
      %s234 = smul.addr %s233, 4
      %s235 = scalar_lea.vmem %s1, %s234
      %p236 = scmp.lt.s32.totalorder %s20, 0
      %s237 = scalar_select %p236, %s20, 0
      %s238 = scalar_lea.vmem %s2, %s237
      %p239 = scmp.lt.s32.totalorder %s19, 1
      %s240 = scalar_select %p239, %s19, 1
      %p241 = scmp.lt.s32.totalorder %s20, 0
      %s242 = scalar_select %p241, %s20, 0
      %s243 = sadd.s32 %s242, %s240
      %s244 = smul.addr %s243, 8
      %s245 = scalar_lea.vmem %s3, %s244
      %v247 = vld [vmem:[%s228] sm:$0xff]
      %v248 = vpack.c.bf16 %v247, %v247
      %v249 = vld [vmem:[%s235] sm:$0xf]
      %vm250 = vcmask 64512
      %v252 = vsel %vm250, %v248, 0
      %vm254 = vcmask 1043456
      %v256 = vsel %vm254, %v249, 0
      %258 = vmatprep.subr.bf16.mxu0 0
      %259 = vmatpush1.bf16.msra.mxu0 %v256
      %260 = vmatprep.subr.bf16.mxu0 0
      %261 = vmatpush1.bf16.msra.mxu0 0
      %262 = vmatprep.subr.bf16.mxu0 0
      %263 = vmatpush1.bf16.msra.mxu0 0
      %264 = vmatprep.subr.bf16.mxu0 0
      %265 = vmatpush1.bf16.msra.mxu0 0
      %266 = vmatprep.subr.bf16.mxu0 0
      %267 = vmatpush1.bf16.msra.mxu0 0
      %268 = vmatprep.subr.bf16.mxu0 0
      %269 = vmatpush1.bf16.msra.mxu0 0
      %270 = vmatprep.subr.bf16.mxu0 0
      %271 = vmatpush1.bf16.msra.mxu0 0
      %272 = vmatprep.subr.bf16.mxu0 0
      %273 = vmatpush1.bf16.msra.mxu0 0
      %274 = vmatprep.subr.bf16.mxu0 0
      %275 = vmatpush1.bf16.msra.mxu0 0
      %276 = vmatprep.subr.bf16.mxu0 0
      %277 = vmatpush1.bf16.msra.mxu0 0
      %278 = vmatprep.subr.bf16.mxu0 0
      %279 = vmatpush1.bf16.msra.mxu0 0
      %280 = vmatprep.subr.bf16.mxu0 0
      %281 = vmatpush1.bf16.msra.mxu0 0
      %282 = vmatprep.subr.bf16.mxu0 0
      %283 = vmatpush1.bf16.msra.mxu0 0
      %284 = vmatprep.subr.bf16.mxu0 0
      %285 = vmatpush1.bf16.msra.mxu0 0
      %286 = vmatprep.subr.bf16.mxu0 0
      %287 = vmatpush1.bf16.msra.mxu0 0
      %288 = vmatprep.subr.bf16.mxu0 0
      %289 = vmatpush1.bf16.msra.mxu0 0
      %290 = vmatprep.mubr.bf16.mxu0 0
      %291 = vmatmul.mubr.bf16.gmra.mrb[0].mxu0 %v252
      %v292 = vpop.f32.mrb[0].mxu0
      %v293 = vadd.f32 0.0, %v292
      %v294 = vpop.f32.mrb[0].mxu0
      %v295 = vpop.f32.mrb[0].mxu0
      %v296 = vpop.f32.mrb[0].mxu0
      %297 = vdwg.mxu0
      %p298 = scmp.eq.s32.totalorder %s21, 0
      // Predicated region
      $region33: #{transformer_forward.19} parent=31 // pred_check
        %p299 = pneg %p298
      $region34: #{transformer_forward.19} parent=31 // pred_check_branch
        %301 = sbr.rel (%p299) target = $region36
      $region35: #{transformer_forward.19} parent=31 // pred_region
        %v302 = vld [vmem:[%s238] sm:$0x1]
        %v304 = vlaneseq
        %v305 = vshrl.u32 %v304, 7
        %v306 = vsub.s32 0, %v305
        %v307 = vrot.slane %v302, %v306
        %v309 = vadd.f32 %v307, %v293
        %vm310 = vcmask 261120
        %311 = vst.msk [vmem:[%s245] sm:$0xff] %vm310, %v309
      $region36: #{transformer_forward.19} parent=31 // pred_fallthru
        _
      %p312 = scmp.gt.s32.totalorder %s21, 0
      // Predicated region
      $region37: #{transformer_forward.19} parent=31 // pred_check
        %p313 = pneg %p312
      $region38: #{transformer_forward.19} parent=31 // pred_check_branch
        %315 = sbr.rel (%p313) target = $region40
      $region39: #{transformer_forward.19} parent=31 // pred_region
        %v316 = vld [vmem:[%s245] sm:$0xff]
        %v317 = vadd.f32 %v316, %v293
        %vm318 = vcmask 261120
        %319 = vst.msk [vmem:[%s245] sm:$0xff] %vm318, %v317
      $region40: #{transformer_forward.19} parent=31 // pred_fallthru
        _
      %p320 = scmp.lt.s32.totalorder %s19, 1
      %s321 = scalar_select %p320, %s19, 1
      %p322 = scmp.lt.s32.totalorder %s20, 0
      %s323 = scalar_select %p322, %s20, 0
      %s324 = sadd.s32 %s323, %s321
      %s325 = smul.addr %s324, 8
      %s326 = scalar_lea.vmem %s3, %s325
      // Predicated region
      $region41: #{transformer_forward.19} parent=31 // pred_check
        %p327 = pneg %p135
      $region42: #{transformer_forward.19} parent=31 // pred_check_branch
        %329 = sbr.rel (%p327) target = $region44
      $region43: #{transformer_forward.19} parent=31 // pred_region
        _
      $region44: #{transformer_forward.19} parent=31 // pred_fallthru
        _
    $region32: #{transformer_forward.19} parent=5 // pred_fallthru
      _
    %p330 = scmp.le.s32.totalorder 2, %s9
    // Predicated region
    $region45: #{transformer_forward.19} parent=5 // pred_check
      %p331 = pneg %p330
    $region46: #{transformer_forward.19} parent=5 // pred_check_branch
      %333 = sbr.rel (%p331) target = $region48
    $region47: #{transformer_forward.19} parent=5 // pred_region
      %s334 = ssub.s32 %s9, 2
      // Predicated region
      $region49: #{transformer_forward.19} parent=47 // pred_check
        %p335 = pneg %p141
      $region50: #{transformer_forward.19} parent=47 // pred_check_branch
        %337 = sbr.rel (%p335) target = $region52
      $region51: #{transformer_forward.19} parent=47 // pred_region
        %p338 = scmp.lt.s32.totalorder %s22, 1
        %s339 = scalar_select %p338, %s22, 1
        %p340 = scmp.lt.s32.totalorder %s23, 0
        %s341 = scalar_select %p340, %s23, 0
        %s342 = sadd.s32 %s341, %s339
        %s343 = smul.addr %s342, 8
        %s344 = scalar_lea.vmem %s3, %s343
      $region52: #{transformer_forward.19} parent=47 // pred_fallthru
        _
    $region48: #{transformer_forward.19} parent=5 // pred_fallthru
      _
  $region6: #{transformer_forward.19} parent=0 // loop_footer
    %s13 = sadd.s32 1, %s9
  $region7: #{transformer_forward.19} parent=0 // loop_footer_branch
    %8 = sbr.rel target = $region3
  $region8: #{transformer_forward.19} parent=0 // loop_exit
    _

// kernel: transformer_forward.20
$region0: #{transformer_forward.20}
  #allocation0 [shape = 'u32[]', space=smem, size = 0x4, offset = 0x4, fixed_abs, tag = 'smem constant byte address 0x4 - core index']
  #allocation1 [shape = 'u32[144,128]{1,0:T(1,128)}', space=vmem, size = 0x12000, scoped, tag = 'internal scratch']
  %s0 = inlined_call_operand.vmem [shape: f32[16,32], index: 0, kind: input, shape index: {}]
  %s1 = inlined_call_operand.vmem [shape: bf16[32,16], index: 1, kind: input, shape index: {}]
  %s2 = inlined_call_operand.vmem [shape: f32[1,16], index: 2, kind: input, shape index: {}]
  %s3 = inlined_call_operand.vmem [shape: f32[16,16], index: 3, kind: output, shape index: {}]
  %s4 = sld [smem:[#allocation0]]
  $region53: #{transformer_forward.20} parent=0
    _
  %s6 = ssub.s32 1, %s4
  %s7 = scalar_select 0, %s6, %s4
  loop: start=0, step=1, limit=4
  $region2: #{transformer_forward.20} parent=0 // loop_pre_header
    _
  $region3: #{transformer_forward.20} parent=0 // loop_header
    %s9 = sphi 0, %s13
    %p10 = scmp.ge.s32.totalorder %s9, 4
    %s16 = sphi 0, %s35
    %s17 = sphi 0, %s31
    %s18 = sphi 0, %s27
    %s19 = sphi 0, %s16
    %s20 = sphi 0, %s17
    %s21 = sphi 0, %s18
    %s22 = sphi 0, %s19
    %s23 = sphi 0, %s20
    %s24 = sphi 0, %s21
    %s40 = sphi 0, %s42
    %s43 = sphi 0, %s40
    %s44 = sphi 0, %s43
    %s60 = sphi 0, %s44
    %s68 = sphi 0, %s70
    %s71 = sphi 0, %s68
    %s72 = sphi 0, %s71
    %s88 = sphi 0, %s72
    %s94 = sphi 0, %s96
    %s97 = sphi 0, %s94
    %s98 = sphi 0, %s97
    %s114 = sphi 0, %s98
    %s122 = sphi 0, %s124
    %s125 = sphi 0, %s122
    %s126 = sphi 0, %s125
    %s142 = sphi 0, %s126
  $region4: #{transformer_forward.20} parent=0 // loop_header_branch
    %12 = sbr.rel (%p10) target = $region8
  $region5: #{transformer_forward.20} parent=0 // loop_body
    %s14 = ssub.s32 %s9, 1
    %s15 = ssub.s32 %s9, 2
    %s25 = sadd.s32 1, %s18
    %p26 = scmp.ge.s32.totalorder %s25, 1
    %s27 = scalar_select %p26, 0, %s25
    %s28 = sadd.s32 1, %s17
    %s29 = scalar_select %p26, %s28, %s17
    %p30 = scmp.ge.s32.totalorder %s29, 1
    %s31 = scalar_select %p30, 0, %s29
    %s32 = sadd.s32 1, %s16
    %s33 = scalar_select %p30, %s32, %s16
    %p34 = scmp.ge.s32.totalorder %s33, 2
    %s35 = scalar_select %p34, 0, %s33
    %s36 = ssub.s32 %s16, %s35
    %s37 = ssub.s32 %s18, %s27
    %s38 = sor.u32 %s36, %s37
    %p39 = scmp.eq.s32.totalorder %s38, 0
    %s41 = sadd.s32 %s40, 1
    %s42 = scalar_select %p39, %s40, %s41
    %p45 = pneg %p39
    %p46 = scmp.eq.s32.totalorder %s9, 1
    %p47 = por %p45, %p46
    %p48 = scmp.ne.s32.totalorder %s40, %s43
    %p49 = scmp.eq.s32.totalorder %s9, 0
    %p50 = por %p48, %p49
    %p51 = scmp.ne.s32.totalorder %s40, %s43
    %p52 = scmp.eq.s32.totalorder %s14, 1
    %p53 = por %p51, %p52
    %p54 = scmp.ne.s32.totalorder %s43, %s44
    %p55 = scmp.eq.s32.totalorder %s14, 0
    %p56 = por %p54, %p55
    %p57 = scmp.ne.s32.totalorder %s43, %s44
    %p58 = scmp.eq.s32.totalorder %s15, 1
    %p59 = por %p57, %p58
    %p61 = scmp.ne.s32.totalorder %s44, %s60
    %p62 = scmp.eq.s32.totalorder %s15, 0
    %p63 = por %p61, %p62
    %s64 = ssub.s32 %s18, %s27
    %s65 = ssub.s32 %s17, %s31
    %s66 = sor.u32 %s64, %s65
    %p67 = scmp.eq.s32.totalorder %s66, 0
    %s69 = sadd.s32 %s68, 1
    %s70 = scalar_select %p67, %s68, %s69
    %p73 = pneg %p67
    %p74 = scmp.eq.s32.totalorder %s9, 1
    %p75 = por %p73, %p74
    %p76 = scmp.ne.s32.totalorder %s68, %s71
    %p77 = scmp.eq.s32.totalorder %s9, 0
    %p78 = por %p76, %p77
    %p79 = scmp.ne.s32.totalorder %s68, %s71
    %p80 = scmp.eq.s32.totalorder %s14, 1
    %p81 = por %p79, %p80
    %p82 = scmp.ne.s32.totalorder %s71, %s72
    %p83 = scmp.eq.s32.totalorder %s14, 0
    %p84 = por %p82, %p83
    %p85 = scmp.ne.s32.totalorder %s71, %s72
    %p86 = scmp.eq.s32.totalorder %s15, 1
    %p87 = por %p85, %p86
    %p89 = scmp.ne.s32.totalorder %s72, %s88
    %p90 = scmp.eq.s32.totalorder %s15, 0
    %p91 = por %p89, %p90
    %s92 = ssub.s32 %s17, %s31
    %p93 = scmp.eq.s32.totalorder %s92, 0
    %s95 = sadd.s32 %s94, 1
    %s96 = scalar_select %p93, %s94, %s95
    %p99 = pneg %p93
    %p100 = scmp.eq.s32.totalorder %s9, 1
    %p101 = por %p99, %p100
    %p102 = scmp.ne.s32.totalorder %s94, %s97
    %p103 = scmp.eq.s32.totalorder %s9, 0
    %p104 = por %p102, %p103
    %p105 = scmp.ne.s32.totalorder %s94, %s97
    %p106 = scmp.eq.s32.totalorder %s14, 1
    %p107 = por %p105, %p106
    %p108 = scmp.ne.s32.totalorder %s97, %s98
    %p109 = scmp.eq.s32.totalorder %s14, 0
    %p110 = por %p108, %p109
    %p111 = scmp.ne.s32.totalorder %s97, %s98
    %p112 = scmp.eq.s32.totalorder %s15, 1
    %p113 = por %p111, %p112
    %p115 = scmp.ne.s32.totalorder %s98, %s114
    %p116 = scmp.eq.s32.totalorder %s15, 0
    %p117 = por %p115, %p116
    %s118 = ssub.s32 %s16, %s35
    %s119 = ssub.s32 %s17, %s31
    %s120 = sor.u32 %s118, %s119
    %p121 = scmp.eq.s32.totalorder %s120, 0
    %s123 = sadd.s32 %s122, 1
    %s124 = scalar_select %p121, %s122, %s123
    %p127 = pneg %p121
    %p128 = scmp.eq.s32.totalorder %s9, 1
    %p129 = por %p127, %p128
    %p130 = scmp.ne.s32.totalorder %s122, %s125
    %p131 = scmp.eq.s32.totalorder %s9, 0
    %p132 = por %p130, %p131
    %p133 = scmp.ne.s32.totalorder %s122, %s125
    %p134 = scmp.eq.s32.totalorder %s14, 1
    %p135 = por %p133, %p134
    %p136 = scmp.ne.s32.totalorder %s125, %s126
    %p137 = scmp.eq.s32.totalorder %s14, 0
    %p138 = por %p136, %p137
    %p139 = scmp.ne.s32.totalorder %s125, %s126
    %p140 = scmp.eq.s32.totalorder %s15, 1
    %p141 = por %p139, %p140
    %p143 = scmp.ne.s32.totalorder %s126, %s142
    %p144 = scmp.eq.s32.totalorder %s15, 0
    %p145 = por %p143, %p144
    %p146 = scmp.le.s32.totalorder 1, %s9
    %p147 = scmp.lt.s32.totalorder %s9, 3
    %p148 = pnand %p146, %p147
    %p149 = pneg %p148
    // Predicated region
    $region9: #{transformer_forward.20} parent=5 // pred_check
      _
    $region10: #{transformer_forward.20} parent=5 // pred_check_branch
      %151 = sbr.rel (%p148) target = $region12
    $region11: #{transformer_forward.20} parent=5 // pred_region
      %s152 = ssub.s32 %s9, 1
      // Predicated region
      $region13: #{transformer_forward.20} parent=11 // pred_check
        %p153 = pneg %p84
      $region14: #{transformer_forward.20} parent=11 // pred_check_branch
        %155 = sbr.rel (%p153) target = $region16
      $region15: #{transformer_forward.20} parent=11 // pred_region
        %s156 = smul.u32 4, %s21
        %p157 = scmp.lt.s32.totalorder %s156, 3
        %s158 = scalar_select %p157, %s156, 3
        %p159 = scmp.lt.s32.totalorder %s20, 0
        %s160 = scalar_select %p159, %s20, 0
        %s161 = sadd.s32 %s160, %s158
        %s162 = smul.addr %s161, 4
        %s163 = scalar_lea.vmem %s1, %s162
        %s164 = smul.u32 4, %s21
      $region16: #{transformer_forward.20} parent=11 // pred_fallthru
        _
      // Predicated region
      $region17: #{transformer_forward.20} parent=11 // pred_check
        %p165 = pneg %p110
      $region18: #{transformer_forward.20} parent=11 // pred_check_branch
        %167 = sbr.rel (%p165) target = $region20
      $region19: #{transformer_forward.20} parent=11 // pred_region
        %p168 = scmp.lt.s32.totalorder %s20, 0
        %s169 = scalar_select %p168, %s20, 0
        %s170 = scalar_lea.vmem %s2, %s169
      $region20: #{transformer_forward.20} parent=11 // pred_fallthru
        _
    $region12: #{transformer_forward.20} parent=5 // pred_fallthru
      _
    %p171 = scmp.lt.s32.totalorder %s9, 2
    // Predicated region
    $region21: #{transformer_forward.20} parent=5 // pred_check
      %p172 = pneg %p171
    $region22: #{transformer_forward.20} parent=5 // pred_check_branch
      %174 = sbr.rel (%p172) target = $region24
    $region23: #{transformer_forward.20} parent=5 // pred_region
      // Predicated region
      $region25: #{transformer_forward.20} parent=23 // pred_check
        %p175 = pneg %p50
      $region26: #{transformer_forward.20} parent=23 // pred_check_branch
        %177 = sbr.rel (%p175) target = $region28
      $region27: #{transformer_forward.20} parent=23 // pred_region
        %p178 = scmp.lt.s32.totalorder %s16, 1
        %s179 = scalar_select %p178, %s16, 1
        %p180 = scmp.lt.s32.totalorder %s18, 0
        %s181 = scalar_select %p180, %s18, 0
        %s182 = sadd.s32 %s181, %s179
        %s183 = smul.addr %s182, 8
        %s184 = scalar_lea.vmem %s0, %s183
      $region28: #{transformer_forward.20} parent=23 // pred_fallthru
        _
    $region24: #{transformer_forward.20} parent=5 // pred_fallthru
      _
    %p185 = scmp.le.s32.totalorder 1, %s9
    %p186 = scmp.lt.s32.totalorder %s9, 3
    %p187 = pnand %p185, %p186
    %p188 = pneg %p187
    // Predicated region
    $region29: #{transformer_forward.20} parent=5 // pred_check
      _
    $region30: #{transformer_forward.20} parent=5 // pred_check_branch
      %190 = sbr.rel (%p187) target = $region32
    $region31: #{transformer_forward.20} parent=5 // pred_region
      %s191 = ssub.s32 %s9, 1
      %p192 = scmp.lt.s32.totalorder %s19, 1
      %s193 = scalar_select %p192, %s19, 1
      %p194 = scmp.lt.s32.totalorder %s21, 0
      %s195 = scalar_select %p194, %s21, 0
      %s196 = sadd.s32 %s195, %s193
      %s197 = smul.addr %s196, 8
      %s198 = scalar_lea.vmem %s0, %s197
      %p199 = pneg %p56
      %p200 = pneg %p53
      %s201 = smul.u32 4, %s21
      %p202 = scmp.lt.s32.totalorder %s201, 3
      %s203 = scalar_select %p202, %s201, 3
      %p204 = scmp.lt.s32.totalorder %s20, 0
      %s205 = scalar_select %p204, %s20, 0
      %s206 = sadd.s32 %s205, %s203
      %s207 = smul.addr %s206, 4
      %s208 = scalar_lea.vmem %s1, %s207
      %p209 = pneg %p84
      %p210 = pneg %p81
      %p211 = scmp.lt.s32.totalorder %s20, 0
      %s212 = scalar_select %p211, %s20, 0
      %s213 = scalar_lea.vmem %s2, %s212
      %p214 = pneg %p110
      %p215 = pneg %p107
      %p216 = pneg %p138
      %p217 = pneg %p135
      %p218 = scmp.lt.s32.totalorder %s19, 1
      %s219 = scalar_select %p218, %s19, 1
      %p220 = scmp.lt.s32.totalorder %s20, 0
      %s221 = scalar_select %p220, %s20, 0
      %s222 = sadd.s32 %s221, %s219
      %s223 = smul.addr %s222, 8
      %s224 = scalar_lea.vmem %s3, %s223
      %p225 = scmp.lt.s32.totalorder %s19, 1
      %s226 = scalar_select %p225, %s19, 1
      %p227 = scmp.lt.s32.totalorder %s21, 0
      %s228 = scalar_select %p227, %s21, 0
      %s229 = sadd.s32 %s228, %s226
      %s230 = smul.addr %s229, 8
      %s231 = scalar_lea.vmem %s0, %s230
      %s232 = smul.u32 4, %s21
      %p233 = scmp.lt.s32.totalorder %s232, 3
      %s234 = scalar_select %p233, %s232, 3
      %p235 = scmp.lt.s32.totalorder %s20, 0
      %s236 = scalar_select %p235, %s20, 0
      %s237 = sadd.s32 %s236, %s234
      %s238 = smul.addr %s237, 4
      %s239 = scalar_lea.vmem %s1, %s238
      %s240 = smul.u32 4, %s21
      %p241 = scmp.lt.s32.totalorder %s20, 0
      %s242 = scalar_select %p241, %s20, 0
      %s243 = scalar_lea.vmem %s2, %s242
      %p244 = scmp.lt.s32.totalorder %s19, 1
      %s245 = scalar_select %p244, %s19, 1
      %p246 = scmp.lt.s32.totalorder %s20, 0
      %s247 = scalar_select %p246, %s20, 0
      %s248 = sadd.s32 %s247, %s245
      %s249 = smul.addr %s248, 8
      %s250 = scalar_lea.vmem %s3, %s249
      %v252 = vld [vmem:[%s231] sm:$0xff]
      %v253 = vpack.c.bf16 %v252, %v252
      %v254 = vld [vmem:[%s239] sm:$0xf]
      %v255 = vld [vmem:[%s239 + $0x4] sm:$0xf]
      %v256 = vld [vmem:[%s239 + $0x8] sm:$0xf]
      %v257 = vld [vmem:[%s239 + $0xc] sm:$0xf]
      %v262 = vunpack.c.l.b16 %v254
      %v263 = vunpack.c.l.b16 %v255
      %v264 = vunpack.c.l.b16 %v256
      %v265 = vunpack.c.l.b16 %v257
      %v266 = vpack.c.b16 %v263, %v262
      %v267 = vpack.c.b16 %v265, %v264
      %vm270 = vcmask 261120
      %v272 = vsel %vm270, %v253, 0
      %274 = vmatprep.subr.bf16.mxu0 0
      %275 = vmatpush1.bf16.msra.mxu0 %v266
      %276 = vmatprep.subr.bf16.mxu0 0
      %277 = vmatpush1.bf16.msra.mxu0 %v267
      %278 = vmatprep.subr.bf16.mxu0 0
      %279 = vmatpush1.bf16.msra.mxu0 0
      %280 = vmatprep.subr.bf16.mxu0 0
      %281 = vmatpush1.bf16.msra.mxu0 0
      %282 = vmatprep.subr.bf16.mxu0 0
      %283 = vmatpush1.bf16.msra.mxu0 0
      %284 = vmatprep.subr.bf16.mxu0 0
      %285 = vmatpush1.bf16.msra.mxu0 0
      %286 = vmatprep.subr.bf16.mxu0 0
      %287 = vmatpush1.bf16.msra.mxu0 0
      %288 = vmatprep.subr.bf16.mxu0 0
      %289 = vmatpush1.bf16.msra.mxu0 0
      %290 = vmatprep.subr.bf16.mxu0 0
      %291 = vmatpush1.bf16.msra.mxu0 0
      %292 = vmatprep.subr.bf16.mxu0 0
      %293 = vmatpush1.bf16.msra.mxu0 0
      %294 = vmatprep.subr.bf16.mxu0 0
      %295 = vmatpush1.bf16.msra.mxu0 0
      %296 = vmatprep.subr.bf16.mxu0 0
      %297 = vmatpush1.bf16.msra.mxu0 0
      %298 = vmatprep.subr.bf16.mxu0 0
      %299 = vmatpush1.bf16.msra.mxu0 0
      %300 = vmatprep.subr.bf16.mxu0 0
      %301 = vmatpush1.bf16.msra.mxu0 0
      %302 = vmatprep.subr.bf16.mxu0 0
      %303 = vmatpush1.bf16.msra.mxu0 0
      %304 = vmatprep.subr.bf16.mxu0 0
      %305 = vmatpush1.bf16.msra.mxu0 0
      %306 = vmatprep.mubr.bf16.mxu0 0
      %307 = vmatmul.mubr.bf16.gmra.mrb[0].mxu0 %v272
      %v308 = vpop.f32.mrb[0].mxu0
      %v309 = vadd.f32 0.0, %v308
      %v310 = vpop.f32.mrb[0].mxu0
      %v311 = vpop.f32.mrb[0].mxu0
      %v312 = vpop.f32.mrb[0].mxu0
      %313 = vdwg.mxu0
      %p314 = scmp.eq.s32.totalorder %s21, 0
      // Predicated region
      $region33: #{transformer_forward.20} parent=31 // pred_check
        %p315 = pneg %p314
      $region34: #{transformer_forward.20} parent=31 // pred_check_branch
        %317 = sbr.rel (%p315) target = $region36
      $region35: #{transformer_forward.20} parent=31 // pred_region
        %v318 = vld [vmem:[%s243] sm:$0x1]
        %v320 = vlaneseq
        %v321 = vshrl.u32 %v320, 7
        %v322 = vsub.s32 0, %v321
        %v323 = vrot.slane %v318, %v322
        %v325 = vadd.f32 %v323, %v309
        %vm326 = vcmask 130048
        %327 = vst.msk [vmem:[%s250] sm:$0xff] %vm326, %v325
      $region36: #{transformer_forward.20} parent=31 // pred_fallthru
        _
      %p328 = scmp.gt.s32.totalorder %s21, 0
      // Predicated region
      $region37: #{transformer_forward.20} parent=31 // pred_check
        %p329 = pneg %p328
      $region38: #{transformer_forward.20} parent=31 // pred_check_branch
        %331 = sbr.rel (%p329) target = $region40
      $region39: #{transformer_forward.20} parent=31 // pred_region
        %v332 = vld [vmem:[%s250] sm:$0xff]
        %v333 = vadd.f32 %v332, %v309
        %vm334 = vcmask 130048
        %335 = vst.msk [vmem:[%s250] sm:$0xff] %vm334, %v333
      $region40: #{transformer_forward.20} parent=31 // pred_fallthru
        _
      %p336 = scmp.lt.s32.totalorder %s19, 1
      %s337 = scalar_select %p336, %s19, 1
      %p338 = scmp.lt.s32.totalorder %s20, 0
      %s339 = scalar_select %p338, %s20, 0
      %s340 = sadd.s32 %s339, %s337
      %s341 = smul.addr %s340, 8
      %s342 = scalar_lea.vmem %s3, %s341
      // Predicated region
      $region41: #{transformer_forward.20} parent=31 // pred_check
        %p343 = pneg %p135
      $region42: #{transformer_forward.20} parent=31 // pred_check_branch
        %345 = sbr.rel (%p343) target = $region44
      $region43: #{transformer_forward.20} parent=31 // pred_region
        _
      $region44: #{transformer_forward.20} parent=31 // pred_fallthru
        _
    $region32: #{transformer_forward.20} parent=5 // pred_fallthru
      _
    %p346 = scmp.le.s32.totalorder 2, %s9
    // Predicated region
    $region45: #{transformer_forward.20} parent=5 // pred_check
      %p347 = pneg %p346
    $region46: #{transformer_forward.20} parent=5 // pred_check_branch
      %349 = sbr.rel (%p347) target = $region48
    $region47: #{transformer_forward.20} parent=5 // pred_region
      %s350 = ssub.s32 %s9, 2
      // Predicated region
      $region49: #{transformer_forward.20} parent=47 // pred_check
        %p351 = pneg %p141
      $region50: #{transformer_forward.20} parent=47 // pred_check_branch
        %353 = sbr.rel (%p351) target = $region52
      $region51: #{transformer_forward.20} parent=47 // pred_region
        %p354 = scmp.lt.s32.totalorder %s22, 1
        %s355 = scalar_select %p354, %s22, 1
        %p356 = scmp.lt.s32.totalorder %s23, 0
        %s357 = scalar_select %p356, %s23, 0
        %s358 = sadd.s32 %s357, %s355
        %s359 = smul.addr %s358, 8
        %s360 = scalar_lea.vmem %s3, %s359
      $region52: #{transformer_forward.20} parent=47 // pred_fallthru
        _
    $region48: #{transformer_forward.20} parent=5 // pred_fallthru
      _
  $region6: #{transformer_forward.20} parent=0 // loop_footer
    %s13 = sadd.s32 1, %s9
  $region7: #{transformer_forward.20} parent=0 // loop_footer_branch
    %8 = sbr.rel target = $region3
  $region8: #{transformer_forward.20} parent=0 // loop_exit
    _

// kernel: transformer_forward.21
$region0: #{transformer_forward.21}
  #allocation0 [shape = 'u32[]', space=smem, size = 0x4, offset = 0x4, fixed_abs, tag = 'smem constant byte address 0x4 - core index']
  #allocation1 [shape = 'u32[144,128]{1,0:T(1,128)}', space=vmem, size = 0x12000, scoped, tag = 'internal scratch']
  %s0 = inlined_call_operand.vmem [shape: f32[16,16], index: 0, kind: input, shape index: {}]
  %s1 = inlined_call_operand.vmem [shape: bf16[16,48], index: 1, kind: input, shape index: {}]
  %s2 = inlined_call_operand.vmem [shape: f32[1,48], index: 2, kind: input, shape index: {}]
  %s3 = inlined_call_operand.vmem [shape: f32[16,48], index: 3, kind: output, shape index: {}]
  %s4 = sld [smem:[#allocation0]]
  $region53: #{transformer_forward.21} parent=0
    _
  %s6 = ssub.s32 1, %s4
  %s7 = scalar_select 0, %s6, %s4
  loop: start=0, step=1, limit=4
  $region2: #{transformer_forward.21} parent=0 // loop_pre_header
    _
  $region3: #{transformer_forward.21} parent=0 // loop_header
    %s9 = sphi 0, %s13
    %p10 = scmp.ge.s32.totalorder %s9, 4
    %s16 = sphi 0, %s35
    %s17 = sphi 0, %s31
    %s18 = sphi 0, %s27
    %s19 = sphi 0, %s16
    %s20 = sphi 0, %s17
    %s21 = sphi 0, %s18
    %s22 = sphi 0, %s19
    %s23 = sphi 0, %s20
    %s24 = sphi 0, %s21
    %s40 = sphi 0, %s42
    %s43 = sphi 0, %s40
    %s44 = sphi 0, %s43
    %s60 = sphi 0, %s44
    %s68 = sphi 0, %s70
    %s71 = sphi 0, %s68
    %s72 = sphi 0, %s71
    %s88 = sphi 0, %s72
    %s94 = sphi 0, %s96
    %s97 = sphi 0, %s94
    %s98 = sphi 0, %s97
    %s114 = sphi 0, %s98
    %s122 = sphi 0, %s124
    %s125 = sphi 0, %s122
    %s126 = sphi 0, %s125
    %s142 = sphi 0, %s126
  $region4: #{transformer_forward.21} parent=0 // loop_header_branch
    %12 = sbr.rel (%p10) target = $region8
  $region5: #{transformer_forward.21} parent=0 // loop_body
    %s14 = ssub.s32 %s9, 1
    %s15 = ssub.s32 %s9, 2
    %s25 = sadd.s32 1, %s18
    %p26 = scmp.ge.s32.totalorder %s25, 1
    %s27 = scalar_select %p26, 0, %s25
    %s28 = sadd.s32 1, %s17
    %s29 = scalar_select %p26, %s28, %s17
    %p30 = scmp.ge.s32.totalorder %s29, 1
    %s31 = scalar_select %p30, 0, %s29
    %s32 = sadd.s32 1, %s16
    %s33 = scalar_select %p30, %s32, %s16
    %p34 = scmp.ge.s32.totalorder %s33, 2
    %s35 = scalar_select %p34, 0, %s33
    %s36 = ssub.s32 %s16, %s35
    %s37 = ssub.s32 %s18, %s27
    %s38 = sor.u32 %s36, %s37
    %p39 = scmp.eq.s32.totalorder %s38, 0
    %s41 = sadd.s32 %s40, 1
    %s42 = scalar_select %p39, %s40, %s41
    %p45 = pneg %p39
    %p46 = scmp.eq.s32.totalorder %s9, 1
    %p47 = por %p45, %p46
    %p48 = scmp.ne.s32.totalorder %s40, %s43
    %p49 = scmp.eq.s32.totalorder %s9, 0
    %p50 = por %p48, %p49
    %p51 = scmp.ne.s32.totalorder %s40, %s43
    %p52 = scmp.eq.s32.totalorder %s14, 1
    %p53 = por %p51, %p52
    %p54 = scmp.ne.s32.totalorder %s43, %s44
    %p55 = scmp.eq.s32.totalorder %s14, 0
    %p56 = por %p54, %p55
    %p57 = scmp.ne.s32.totalorder %s43, %s44
    %p58 = scmp.eq.s32.totalorder %s15, 1
    %p59 = por %p57, %p58
    %p61 = scmp.ne.s32.totalorder %s44, %s60
    %p62 = scmp.eq.s32.totalorder %s15, 0
    %p63 = por %p61, %p62
    %s64 = ssub.s32 %s18, %s27
    %s65 = ssub.s32 %s17, %s31
    %s66 = sor.u32 %s64, %s65
    %p67 = scmp.eq.s32.totalorder %s66, 0
    %s69 = sadd.s32 %s68, 1
    %s70 = scalar_select %p67, %s68, %s69
    %p73 = pneg %p67
    %p74 = scmp.eq.s32.totalorder %s9, 1
    %p75 = por %p73, %p74
    %p76 = scmp.ne.s32.totalorder %s68, %s71
    %p77 = scmp.eq.s32.totalorder %s9, 0
    %p78 = por %p76, %p77
    %p79 = scmp.ne.s32.totalorder %s68, %s71
    %p80 = scmp.eq.s32.totalorder %s14, 1
    %p81 = por %p79, %p80
    %p82 = scmp.ne.s32.totalorder %s71, %s72
    %p83 = scmp.eq.s32.totalorder %s14, 0
    %p84 = por %p82, %p83
    %p85 = scmp.ne.s32.totalorder %s71, %s72
    %p86 = scmp.eq.s32.totalorder %s15, 1
    %p87 = por %p85, %p86
    %p89 = scmp.ne.s32.totalorder %s72, %s88
    %p90 = scmp.eq.s32.totalorder %s15, 0
    %p91 = por %p89, %p90
    %s92 = ssub.s32 %s17, %s31
    %p93 = scmp.eq.s32.totalorder %s92, 0
    %s95 = sadd.s32 %s94, 1
    %s96 = scalar_select %p93, %s94, %s95
    %p99 = pneg %p93
    %p100 = scmp.eq.s32.totalorder %s9, 1
    %p101 = por %p99, %p100
    %p102 = scmp.ne.s32.totalorder %s94, %s97
    %p103 = scmp.eq.s32.totalorder %s9, 0
    %p104 = por %p102, %p103
    %p105 = scmp.ne.s32.totalorder %s94, %s97
    %p106 = scmp.eq.s32.totalorder %s14, 1
    %p107 = por %p105, %p106
    %p108 = scmp.ne.s32.totalorder %s97, %s98
    %p109 = scmp.eq.s32.totalorder %s14, 0
    %p110 = por %p108, %p109
    %p111 = scmp.ne.s32.totalorder %s97, %s98
    %p112 = scmp.eq.s32.totalorder %s15, 1
    %p113 = por %p111, %p112
    %p115 = scmp.ne.s32.totalorder %s98, %s114
    %p116 = scmp.eq.s32.totalorder %s15, 0
    %p117 = por %p115, %p116
    %s118 = ssub.s32 %s16, %s35
    %s119 = ssub.s32 %s17, %s31
    %s120 = sor.u32 %s118, %s119
    %p121 = scmp.eq.s32.totalorder %s120, 0
    %s123 = sadd.s32 %s122, 1
    %s124 = scalar_select %p121, %s122, %s123
    %p127 = pneg %p121
    %p128 = scmp.eq.s32.totalorder %s9, 1
    %p129 = por %p127, %p128
    %p130 = scmp.ne.s32.totalorder %s122, %s125
    %p131 = scmp.eq.s32.totalorder %s9, 0
    %p132 = por %p130, %p131
    %p133 = scmp.ne.s32.totalorder %s122, %s125
    %p134 = scmp.eq.s32.totalorder %s14, 1
    %p135 = por %p133, %p134
    %p136 = scmp.ne.s32.totalorder %s125, %s126
    %p137 = scmp.eq.s32.totalorder %s14, 0
    %p138 = por %p136, %p137
    %p139 = scmp.ne.s32.totalorder %s125, %s126
    %p140 = scmp.eq.s32.totalorder %s15, 1
    %p141 = por %p139, %p140
    %p143 = scmp.ne.s32.totalorder %s126, %s142
    %p144 = scmp.eq.s32.totalorder %s15, 0
    %p145 = por %p143, %p144
    %p146 = scmp.le.s32.totalorder 1, %s9
    %p147 = scmp.lt.s32.totalorder %s9, 3
    %p148 = pnand %p146, %p147
    %p149 = pneg %p148
    // Predicated region
    $region9: #{transformer_forward.21} parent=5 // pred_check
      _
    $region10: #{transformer_forward.21} parent=5 // pred_check_branch
      %151 = sbr.rel (%p148) target = $region12
    $region11: #{transformer_forward.21} parent=5 // pred_region
      %s152 = ssub.s32 %s9, 1
      // Predicated region
      $region13: #{transformer_forward.21} parent=11 // pred_check
        %p153 = pneg %p84
      $region14: #{transformer_forward.21} parent=11 // pred_check_branch
        %155 = sbr.rel (%p153) target = $region16
      $region15: #{transformer_forward.21} parent=11 // pred_region
        %s156 = smul.u32 2, %s21
        %p157 = scmp.lt.s32.totalorder %s156, 1
        %s158 = scalar_select %p157, %s156, 1
        %p159 = scmp.lt.s32.totalorder %s20, 0
        %s160 = scalar_select %p159, %s20, 0
        %s161 = sadd.s32 %s160, %s158
        %s162 = smul.addr %s161, 4
        %s163 = scalar_lea.vmem %s1, %s162
        %s164 = smul.u32 2, %s21
      $region16: #{transformer_forward.21} parent=11 // pred_fallthru
        _
      // Predicated region
      $region17: #{transformer_forward.21} parent=11 // pred_check
        %p165 = pneg %p110
      $region18: #{transformer_forward.21} parent=11 // pred_check_branch
        %167 = sbr.rel (%p165) target = $region20
      $region19: #{transformer_forward.21} parent=11 // pred_region
        %p168 = scmp.lt.s32.totalorder %s20, 0
        %s169 = scalar_select %p168, %s20, 0
        %s170 = scalar_lea.vmem %s2, %s169
      $region20: #{transformer_forward.21} parent=11 // pred_fallthru
        _
    $region12: #{transformer_forward.21} parent=5 // pred_fallthru
      _
    %p171 = scmp.lt.s32.totalorder %s9, 2
    // Predicated region
    $region21: #{transformer_forward.21} parent=5 // pred_check
      %p172 = pneg %p171
    $region22: #{transformer_forward.21} parent=5 // pred_check_branch
      %174 = sbr.rel (%p172) target = $region24
    $region23: #{transformer_forward.21} parent=5 // pred_region
      // Predicated region
      $region25: #{transformer_forward.21} parent=23 // pred_check
        %p175 = pneg %p50
      $region26: #{transformer_forward.21} parent=23 // pred_check_branch
        %177 = sbr.rel (%p175) target = $region28
      $region27: #{transformer_forward.21} parent=23 // pred_region
        %p178 = scmp.lt.s32.totalorder %s16, 1
        %s179 = scalar_select %p178, %s16, 1
        %p180 = scmp.lt.s32.totalorder %s18, 0
        %s181 = scalar_select %p180, %s18, 0
        %s182 = sadd.s32 %s181, %s179
        %s183 = smul.addr %s182, 8
        %s184 = scalar_lea.vmem %s0, %s183
      $region28: #{transformer_forward.21} parent=23 // pred_fallthru
        _
    $region24: #{transformer_forward.21} parent=5 // pred_fallthru
      _
    %p185 = scmp.le.s32.totalorder 1, %s9
    %p186 = scmp.lt.s32.totalorder %s9, 3
    %p187 = pnand %p185, %p186
    %p188 = pneg %p187
    // Predicated region
    $region29: #{transformer_forward.21} parent=5 // pred_check
      _
    $region30: #{transformer_forward.21} parent=5 // pred_check_branch
      %190 = sbr.rel (%p187) target = $region32
    $region31: #{transformer_forward.21} parent=5 // pred_region
      %s191 = ssub.s32 %s9, 1
      %p192 = scmp.lt.s32.totalorder %s19, 1
      %s193 = scalar_select %p192, %s19, 1
      %p194 = scmp.lt.s32.totalorder %s21, 0
      %s195 = scalar_select %p194, %s21, 0
      %s196 = sadd.s32 %s195, %s193
      %s197 = smul.addr %s196, 8
      %s198 = scalar_lea.vmem %s0, %s197
      %p199 = pneg %p56
      %p200 = pneg %p53
      %s201 = smul.u32 2, %s21
      %p202 = scmp.lt.s32.totalorder %s201, 1
      %s203 = scalar_select %p202, %s201, 1
      %p204 = scmp.lt.s32.totalorder %s20, 0
      %s205 = scalar_select %p204, %s20, 0
      %s206 = sadd.s32 %s205, %s203
      %s207 = smul.addr %s206, 4
      %s208 = scalar_lea.vmem %s1, %s207
      %p209 = pneg %p84
      %p210 = pneg %p81
      %p211 = scmp.lt.s32.totalorder %s20, 0
      %s212 = scalar_select %p211, %s20, 0
      %s213 = scalar_lea.vmem %s2, %s212
      %p214 = pneg %p110
      %p215 = pneg %p107
      %p216 = pneg %p138
      %p217 = pneg %p135
      %p218 = scmp.lt.s32.totalorder %s19, 1
      %s219 = scalar_select %p218, %s19, 1
      %p220 = scmp.lt.s32.totalorder %s20, 0
      %s221 = scalar_select %p220, %s20, 0
      %s222 = sadd.s32 %s221, %s219
      %s223 = smul.addr %s222, 8
      %s224 = scalar_lea.vmem %s3, %s223
      %p225 = scmp.lt.s32.totalorder %s19, 1
      %s226 = scalar_select %p225, %s19, 1
      %p227 = scmp.lt.s32.totalorder %s21, 0
      %s228 = scalar_select %p227, %s21, 0
      %s229 = sadd.s32 %s228, %s226
      %s230 = smul.addr %s229, 8
      %s231 = scalar_lea.vmem %s0, %s230
      %s232 = smul.u32 2, %s21
      %p233 = scmp.lt.s32.totalorder %s232, 1
      %s234 = scalar_select %p233, %s232, 1
      %p235 = scmp.lt.s32.totalorder %s20, 0
      %s236 = scalar_select %p235, %s20, 0
      %s237 = sadd.s32 %s236, %s234
      %s238 = smul.addr %s237, 4
      %s239 = scalar_lea.vmem %s1, %s238
      %s240 = smul.u32 2, %s21
      %p241 = scmp.lt.s32.totalorder %s20, 0
      %s242 = scalar_select %p241, %s20, 0
      %s243 = scalar_lea.vmem %s2, %s242
      %p244 = scmp.lt.s32.totalorder %s19, 1
      %s245 = scalar_select %p244, %s19, 1
      %p246 = scmp.lt.s32.totalorder %s20, 0
      %s247 = scalar_select %p246, %s20, 0
      %s248 = sadd.s32 %s247, %s245
      %s249 = smul.addr %s248, 8
      %s250 = scalar_lea.vmem %s3, %s249
      %v252 = vld [vmem:[%s231] sm:$0xff]
      %v253 = vpack.c.bf16 %v252, %v252
      %v254 = vld [vmem:[%s239] sm:$0xf]
      %v255 = vld [vmem:[%s239 + $0x4] sm:$0xf]
      %v258 = vunpack.c.l.b16 %v254
      %v259 = vunpack.c.l.b16 %v255
      %v260 = vpack.c.b16 %v259, %v258
      %vm262 = vcmask 130048
      %v264 = vsel %vm262, %v253, 0
      %266 = vmatprep.subr.bf16.mxu0 0
      %267 = vmatpush1.bf16.msra.mxu0 %v260
      %268 = vmatprep.subr.bf16.mxu0 0
      %269 = vmatpush1.bf16.msra.mxu0 0
      %270 = vmatprep.subr.bf16.mxu0 0
      %271 = vmatpush1.bf16.msra.mxu0 0
      %272 = vmatprep.subr.bf16.mxu0 0
      %273 = vmatpush1.bf16.msra.mxu0 0
      %274 = vmatprep.subr.bf16.mxu0 0
      %275 = vmatpush1.bf16.msra.mxu0 0
      %276 = vmatprep.subr.bf16.mxu0 0
      %277 = vmatpush1.bf16.msra.mxu0 0
      %278 = vmatprep.subr.bf16.mxu0 0
      %279 = vmatpush1.bf16.msra.mxu0 0
      %280 = vmatprep.subr.bf16.mxu0 0
      %281 = vmatpush1.bf16.msra.mxu0 0
      %282 = vmatprep.subr.bf16.mxu0 0
      %283 = vmatpush1.bf16.msra.mxu0 0
      %284 = vmatprep.subr.bf16.mxu0 0
      %285 = vmatpush1.bf16.msra.mxu0 0
      %286 = vmatprep.subr.bf16.mxu0 0
      %287 = vmatpush1.bf16.msra.mxu0 0
      %288 = vmatprep.subr.bf16.mxu0 0
      %289 = vmatpush1.bf16.msra.mxu0 0
      %290 = vmatprep.subr.bf16.mxu0 0
      %291 = vmatpush1.bf16.msra.mxu0 0
      %292 = vmatprep.subr.bf16.mxu0 0
      %293 = vmatpush1.bf16.msra.mxu0 0
      %294 = vmatprep.subr.bf16.mxu0 0
      %295 = vmatpush1.bf16.msra.mxu0 0
      %296 = vmatprep.subr.bf16.mxu0 0
      %297 = vmatpush1.bf16.msra.mxu0 0
      %298 = vmatprep.mubr.bf16.mxu0 0
      %299 = vmatmul.mubr.bf16.gmra.mrb[0].mxu0 %v264
      %v300 = vpop.f32.mrb[0].mxu0
      %v301 = vadd.f32 0.0, %v300
      %v302 = vpop.f32.mrb[0].mxu0
      %v303 = vpop.f32.mrb[0].mxu0
      %v304 = vpop.f32.mrb[0].mxu0
      %305 = vdwg.mxu0
      %p306 = scmp.eq.s32.totalorder %s21, 0
      // Predicated region
      $region33: #{transformer_forward.21} parent=31 // pred_check
        %p307 = pneg %p306
      $region34: #{transformer_forward.21} parent=31 // pred_check_branch
        %309 = sbr.rel (%p307) target = $region36
      $region35: #{transformer_forward.21} parent=31 // pred_region
        %v310 = vld [vmem:[%s243] sm:$0x1]
        %v312 = vlaneseq
        %v313 = vshrl.u32 %v312, 7
        %v314 = vsub.s32 0, %v313
        %v315 = vrot.slane %v310, %v314
        %v317 = vadd.f32 %v315, %v301
        %vm318 = vcmask 392192
        %319 = vst.msk [vmem:[%s250] sm:$0xff] %vm318, %v317
      $region36: #{transformer_forward.21} parent=31 // pred_fallthru
        _
      %p320 = scmp.gt.s32.totalorder %s21, 0
      // Predicated region
      $region37: #{transformer_forward.21} parent=31 // pred_check
        %p321 = pneg %p320
      $region38: #{transformer_forward.21} parent=31 // pred_check_branch
        %323 = sbr.rel (%p321) target = $region40
      $region39: #{transformer_forward.21} parent=31 // pred_region
        %v324 = vld [vmem:[%s250] sm:$0xff]
        %v325 = vadd.f32 %v324, %v301
        %vm326 = vcmask 392192
        %327 = vst.msk [vmem:[%s250] sm:$0xff] %vm326, %v325
      $region40: #{transformer_forward.21} parent=31 // pred_fallthru
        _
      %p328 = scmp.lt.s32.totalorder %s19, 1
      %s329 = scalar_select %p328, %s19, 1
      %p330 = scmp.lt.s32.totalorder %s20, 0
      %s331 = scalar_select %p330, %s20, 0
      %s332 = sadd.s32 %s331, %s329
      %s333 = smul.addr %s332, 8
      %s334 = scalar_lea.vmem %s3, %s333
      // Predicated region
      $region41: #{transformer_forward.21} parent=31 // pred_check
        %p335 = pneg %p135
      $region42: #{transformer_forward.21} parent=31 // pred_check_branch
        %337 = sbr.rel (%p335) target = $region44
      $region43: #{transformer_forward.21} parent=31 // pred_region
        _
      $region44: #{transformer_forward.21} parent=31 // pred_fallthru
        _
    $region32: #{transformer_forward.21} parent=5 // pred_fallthru
      _
    %p338 = scmp.le.s32.totalorder 2, %s9
    // Predicated region
    $region45: #{transformer_forward.21} parent=5 // pred_check
      %p339 = pneg %p338
    $region46: #{transformer_forward.21} parent=5 // pred_check_branch
      %341 = sbr.rel (%p339) target = $region48
    $region47: #{transformer_forward.21} parent=5 // pred_region
      %s342 = ssub.s32 %s9, 2
      // Predicated region
      $region49: #{transformer_forward.21} parent=47 // pred_check
        %p343 = pneg %p141
      $region50: #{transformer_forward.21} parent=47 // pred_check_branch
        %345 = sbr.rel (%p343) target = $region52
      $region51: #{transformer_forward.21} parent=47 // pred_region
        %p346 = scmp.lt.s32.totalorder %s22, 1
        %s347 = scalar_select %p346, %s22, 1
        %p348 = scmp.lt.s32.totalorder %s23, 0
        %s349 = scalar_select %p348, %s23, 0
        %s350 = sadd.s32 %s349, %s347
        %s351 = smul.addr %s350, 8
        %s352 = scalar_lea.vmem %s3, %s351
      $region52: #{transformer_forward.21} parent=47 // pred_fallthru
        _
    $region48: #{transformer_forward.21} parent=5 // pred_fallthru
      _
  $region6: #{transformer_forward.21} parent=0 // loop_footer
    %s13 = sadd.s32 1, %s9
  $region7: #{transformer_forward.21} parent=0 // loop_footer_branch
    %8 = sbr.rel target = $region3
  $region8: #{transformer_forward.21} parent=0 // loop_exit
    _

// kernel: transformer_forward.22
$region0: #{transformer_forward.22}
  #allocation0 [shape = 'u32[]', space=smem, size = 0x4, offset = 0x4, fixed_abs, tag = 'smem constant byte address 0x4 - core index']
  #allocation1 [shape = 'u32[144,128]{1,0:T(1,128)}', space=vmem, size = 0x12000, scoped, tag = 'internal scratch']
  %s0 = inlined_call_operand.vmem [shape: f32[16,16], index: 0, kind: input, shape index: {}]
  %s1 = inlined_call_operand.vmem [shape: bf16[16,8], index: 1, kind: input, shape index: {}]
  %s2 = inlined_call_operand.vmem [shape: f32[1,8], index: 2, kind: input, shape index: {}]
  %s3 = inlined_call_operand.vmem [shape: f32[16,8], index: 3, kind: output, shape index: {}]
  %s4 = sld [smem:[#allocation0]]
  $region53: #{transformer_forward.22} parent=0
    _
  %s6 = ssub.s32 1, %s4
  %s7 = scalar_select 0, %s6, %s4
  loop: start=0, step=1, limit=4
  $region2: #{transformer_forward.22} parent=0 // loop_pre_header
    _
  $region3: #{transformer_forward.22} parent=0 // loop_header
    %s9 = sphi 0, %s13
    %p10 = scmp.ge.s32.totalorder %s9, 4
    %s16 = sphi 0, %s35
    %s17 = sphi 0, %s31
    %s18 = sphi 0, %s27
    %s19 = sphi 0, %s16
    %s20 = sphi 0, %s17
    %s21 = sphi 0, %s18
    %s22 = sphi 0, %s19
    %s23 = sphi 0, %s20
    %s24 = sphi 0, %s21
    %s40 = sphi 0, %s42
    %s43 = sphi 0, %s40
    %s44 = sphi 0, %s43
    %s60 = sphi 0, %s44
    %s68 = sphi 0, %s70
    %s71 = sphi 0, %s68
    %s72 = sphi 0, %s71
    %s88 = sphi 0, %s72
    %s94 = sphi 0, %s96
    %s97 = sphi 0, %s94
    %s98 = sphi 0, %s97
    %s114 = sphi 0, %s98
    %s122 = sphi 0, %s124
    %s125 = sphi 0, %s122
    %s126 = sphi 0, %s125
    %s142 = sphi 0, %s126
  $region4: #{transformer_forward.22} parent=0 // loop_header_branch
    %12 = sbr.rel (%p10) target = $region8
  $region5: #{transformer_forward.22} parent=0 // loop_body
    %s14 = ssub.s32 %s9, 1
    %s15 = ssub.s32 %s9, 2
    %s25 = sadd.s32 1, %s18
    %p26 = scmp.ge.s32.totalorder %s25, 1
    %s27 = scalar_select %p26, 0, %s25
    %s28 = sadd.s32 1, %s17
    %s29 = scalar_select %p26, %s28, %s17
    %p30 = scmp.ge.s32.totalorder %s29, 1
    %s31 = scalar_select %p30, 0, %s29
    %s32 = sadd.s32 1, %s16
    %s33 = scalar_select %p30, %s32, %s16
    %p34 = scmp.ge.s32.totalorder %s33, 2
    %s35 = scalar_select %p34, 0, %s33
    %s36 = ssub.s32 %s16, %s35
    %s37 = ssub.s32 %s18, %s27
    %s38 = sor.u32 %s36, %s37
    %p39 = scmp.eq.s32.totalorder %s38, 0
    %s41 = sadd.s32 %s40, 1
    %s42 = scalar_select %p39, %s40, %s41
    %p45 = pneg %p39
    %p46 = scmp.eq.s32.totalorder %s9, 1
    %p47 = por %p45, %p46
    %p48 = scmp.ne.s32.totalorder %s40, %s43
    %p49 = scmp.eq.s32.totalorder %s9, 0
    %p50 = por %p48, %p49
    %p51 = scmp.ne.s32.totalorder %s40, %s43
    %p52 = scmp.eq.s32.totalorder %s14, 1
    %p53 = por %p51, %p52
    %p54 = scmp.ne.s32.totalorder %s43, %s44
    %p55 = scmp.eq.s32.totalorder %s14, 0
    %p56 = por %p54, %p55
    %p57 = scmp.ne.s32.totalorder %s43, %s44
    %p58 = scmp.eq.s32.totalorder %s15, 1
    %p59 = por %p57, %p58
    %p61 = scmp.ne.s32.totalorder %s44, %s60
    %p62 = scmp.eq.s32.totalorder %s15, 0
    %p63 = por %p61, %p62
    %s64 = ssub.s32 %s18, %s27
    %s65 = ssub.s32 %s17, %s31
    %s66 = sor.u32 %s64, %s65
    %p67 = scmp.eq.s32.totalorder %s66, 0
    %s69 = sadd.s32 %s68, 1
    %s70 = scalar_select %p67, %s68, %s69
    %p73 = pneg %p67
    %p74 = scmp.eq.s32.totalorder %s9, 1
    %p75 = por %p73, %p74
    %p76 = scmp.ne.s32.totalorder %s68, %s71
    %p77 = scmp.eq.s32.totalorder %s9, 0
    %p78 = por %p76, %p77
    %p79 = scmp.ne.s32.totalorder %s68, %s71
    %p80 = scmp.eq.s32.totalorder %s14, 1
    %p81 = por %p79, %p80
    %p82 = scmp.ne.s32.totalorder %s71, %s72
    %p83 = scmp.eq.s32.totalorder %s14, 0
    %p84 = por %p82, %p83
    %p85 = scmp.ne.s32.totalorder %s71, %s72
    %p86 = scmp.eq.s32.totalorder %s15, 1
    %p87 = por %p85, %p86
    %p89 = scmp.ne.s32.totalorder %s72, %s88
    %p90 = scmp.eq.s32.totalorder %s15, 0
    %p91 = por %p89, %p90
    %s92 = ssub.s32 %s17, %s31
    %p93 = scmp.eq.s32.totalorder %s92, 0
    %s95 = sadd.s32 %s94, 1
    %s96 = scalar_select %p93, %s94, %s95
    %p99 = pneg %p93
    %p100 = scmp.eq.s32.totalorder %s9, 1
    %p101 = por %p99, %p100
    %p102 = scmp.ne.s32.totalorder %s94, %s97
    %p103 = scmp.eq.s32.totalorder %s9, 0
    %p104 = por %p102, %p103
    %p105 = scmp.ne.s32.totalorder %s94, %s97
    %p106 = scmp.eq.s32.totalorder %s14, 1
    %p107 = por %p105, %p106
    %p108 = scmp.ne.s32.totalorder %s97, %s98
    %p109 = scmp.eq.s32.totalorder %s14, 0
    %p110 = por %p108, %p109
    %p111 = scmp.ne.s32.totalorder %s97, %s98
    %p112 = scmp.eq.s32.totalorder %s15, 1
    %p113 = por %p111, %p112
    %p115 = scmp.ne.s32.totalorder %s98, %s114
    %p116 = scmp.eq.s32.totalorder %s15, 0
    %p117 = por %p115, %p116
    %s118 = ssub.s32 %s16, %s35
    %s119 = ssub.s32 %s17, %s31
    %s120 = sor.u32 %s118, %s119
    %p121 = scmp.eq.s32.totalorder %s120, 0
    %s123 = sadd.s32 %s122, 1
    %s124 = scalar_select %p121, %s122, %s123
    %p127 = pneg %p121
    %p128 = scmp.eq.s32.totalorder %s9, 1
    %p129 = por %p127, %p128
    %p130 = scmp.ne.s32.totalorder %s122, %s125
    %p131 = scmp.eq.s32.totalorder %s9, 0
    %p132 = por %p130, %p131
    %p133 = scmp.ne.s32.totalorder %s122, %s125
    %p134 = scmp.eq.s32.totalorder %s14, 1
    %p135 = por %p133, %p134
    %p136 = scmp.ne.s32.totalorder %s125, %s126
    %p137 = scmp.eq.s32.totalorder %s14, 0
    %p138 = por %p136, %p137
    %p139 = scmp.ne.s32.totalorder %s125, %s126
    %p140 = scmp.eq.s32.totalorder %s15, 1
    %p141 = por %p139, %p140
    %p143 = scmp.ne.s32.totalorder %s126, %s142
    %p144 = scmp.eq.s32.totalorder %s15, 0
    %p145 = por %p143, %p144
    %p146 = scmp.le.s32.totalorder 1, %s9
    %p147 = scmp.lt.s32.totalorder %s9, 3
    %p148 = pnand %p146, %p147
    %p149 = pneg %p148
    // Predicated region
    $region9: #{transformer_forward.22} parent=5 // pred_check
      _
    $region10: #{transformer_forward.22} parent=5 // pred_check_branch
      %151 = sbr.rel (%p148) target = $region12
    $region11: #{transformer_forward.22} parent=5 // pred_region
      %s152 = ssub.s32 %s9, 1
      // Predicated region
      $region13: #{transformer_forward.22} parent=11 // pred_check
        %p153 = pneg %p84
      $region14: #{transformer_forward.22} parent=11 // pred_check_branch
        %155 = sbr.rel (%p153) target = $region16
      $region15: #{transformer_forward.22} parent=11 // pred_region
        %s156 = smul.u32 2, %s21
        %p157 = scmp.lt.s32.totalorder %s156, 1
        %s158 = scalar_select %p157, %s156, 1
        %p159 = scmp.lt.s32.totalorder %s20, 0
        %s160 = scalar_select %p159, %s20, 0
        %s161 = sadd.s32 %s160, %s158
        %s162 = smul.addr %s161, 4
        %s163 = scalar_lea.vmem %s1, %s162
        %s164 = smul.u32 2, %s21
      $region16: #{transformer_forward.22} parent=11 // pred_fallthru
        _
      // Predicated region
      $region17: #{transformer_forward.22} parent=11 // pred_check
        %p165 = pneg %p110
      $region18: #{transformer_forward.22} parent=11 // pred_check_branch
        %167 = sbr.rel (%p165) target = $region20
      $region19: #{transformer_forward.22} parent=11 // pred_region
        %p168 = scmp.lt.s32.totalorder %s20, 0
        %s169 = scalar_select %p168, %s20, 0
        %s170 = scalar_lea.vmem %s2, %s169
      $region20: #{transformer_forward.22} parent=11 // pred_fallthru
        _
    $region12: #{transformer_forward.22} parent=5 // pred_fallthru
      _
    %p171 = scmp.lt.s32.totalorder %s9, 2
    // Predicated region
    $region21: #{transformer_forward.22} parent=5 // pred_check
      %p172 = pneg %p171
    $region22: #{transformer_forward.22} parent=5 // pred_check_branch
      %174 = sbr.rel (%p172) target = $region24
    $region23: #{transformer_forward.22} parent=5 // pred_region
      // Predicated region
      $region25: #{transformer_forward.22} parent=23 // pred_check
        %p175 = pneg %p50
      $region26: #{transformer_forward.22} parent=23 // pred_check_branch
        %177 = sbr.rel (%p175) target = $region28
      $region27: #{transformer_forward.22} parent=23 // pred_region
        %p178 = scmp.lt.s32.totalorder %s16, 1
        %s179 = scalar_select %p178, %s16, 1
        %p180 = scmp.lt.s32.totalorder %s18, 0
        %s181 = scalar_select %p180, %s18, 0
        %s182 = sadd.s32 %s181, %s179
        %s183 = smul.addr %s182, 8
        %s184 = scalar_lea.vmem %s0, %s183
      $region28: #{transformer_forward.22} parent=23 // pred_fallthru
        _
    $region24: #{transformer_forward.22} parent=5 // pred_fallthru
      _
    %p185 = scmp.le.s32.totalorder 1, %s9
    %p186 = scmp.lt.s32.totalorder %s9, 3
    %p187 = pnand %p185, %p186
    %p188 = pneg %p187
    // Predicated region
    $region29: #{transformer_forward.22} parent=5 // pred_check
      _
    $region30: #{transformer_forward.22} parent=5 // pred_check_branch
      %190 = sbr.rel (%p187) target = $region32
    $region31: #{transformer_forward.22} parent=5 // pred_region
      %s191 = ssub.s32 %s9, 1
      %p192 = scmp.lt.s32.totalorder %s19, 1
      %s193 = scalar_select %p192, %s19, 1
      %p194 = scmp.lt.s32.totalorder %s21, 0
      %s195 = scalar_select %p194, %s21, 0
      %s196 = sadd.s32 %s195, %s193
      %s197 = smul.addr %s196, 8
      %s198 = scalar_lea.vmem %s0, %s197
      %p199 = pneg %p56
      %p200 = pneg %p53
      %s201 = smul.u32 2, %s21
      %p202 = scmp.lt.s32.totalorder %s201, 1
      %s203 = scalar_select %p202, %s201, 1
      %p204 = scmp.lt.s32.totalorder %s20, 0
      %s205 = scalar_select %p204, %s20, 0
      %s206 = sadd.s32 %s205, %s203
      %s207 = smul.addr %s206, 4
      %s208 = scalar_lea.vmem %s1, %s207
      %p209 = pneg %p84
      %p210 = pneg %p81
      %p211 = scmp.lt.s32.totalorder %s20, 0
      %s212 = scalar_select %p211, %s20, 0
      %s213 = scalar_lea.vmem %s2, %s212
      %p214 = pneg %p110
      %p215 = pneg %p107
      %p216 = pneg %p138
      %p217 = pneg %p135
      %p218 = scmp.lt.s32.totalorder %s19, 1
      %s219 = scalar_select %p218, %s19, 1
      %p220 = scmp.lt.s32.totalorder %s20, 0
      %s221 = scalar_select %p220, %s20, 0
      %s222 = sadd.s32 %s221, %s219
      %s223 = smul.addr %s222, 8
      %s224 = scalar_lea.vmem %s3, %s223
      %p225 = scmp.lt.s32.totalorder %s19, 1
      %s226 = scalar_select %p225, %s19, 1
      %p227 = scmp.lt.s32.totalorder %s21, 0
      %s228 = scalar_select %p227, %s21, 0
      %s229 = sadd.s32 %s228, %s226
      %s230 = smul.addr %s229, 8
      %s231 = scalar_lea.vmem %s0, %s230
      %s232 = smul.u32 2, %s21
      %p233 = scmp.lt.s32.totalorder %s232, 1
      %s234 = scalar_select %p233, %s232, 1
      %p235 = scmp.lt.s32.totalorder %s20, 0
      %s236 = scalar_select %p235, %s20, 0
      %s237 = sadd.s32 %s236, %s234
      %s238 = smul.addr %s237, 4
      %s239 = scalar_lea.vmem %s1, %s238
      %s240 = smul.u32 2, %s21
      %p241 = scmp.lt.s32.totalorder %s20, 0
      %s242 = scalar_select %p241, %s20, 0
      %s243 = scalar_lea.vmem %s2, %s242
      %p244 = scmp.lt.s32.totalorder %s19, 1
      %s245 = scalar_select %p244, %s19, 1
      %p246 = scmp.lt.s32.totalorder %s20, 0
      %s247 = scalar_select %p246, %s20, 0
      %s248 = sadd.s32 %s247, %s245
      %s249 = smul.addr %s248, 8
      %s250 = scalar_lea.vmem %s3, %s249
      %v252 = vld [vmem:[%s231] sm:$0xff]
      %v253 = vmax.f32 %v252, 0.0
      %v254 = vpack.c.bf16 %v253, %v253
      %v255 = vld [vmem:[%s239] sm:$0xf]
      %v256 = vld [vmem:[%s239 + $0x4] sm:$0xf]
      %v259 = vunpack.c.l.b16 %v255
      %v260 = vunpack.c.l.b16 %v256
      %v261 = vpack.c.b16 %v260, %v259
      %vm263 = vcmask 130048
      %v265 = vsel %vm263, %v254, 0
      %267 = vmatprep.subr.bf16.mxu0 0
      %268 = vmatpush1.bf16.msra.mxu0 %v261
      %269 = vmatprep.subr.bf16.mxu0 0
      %270 = vmatpush1.bf16.msra.mxu0 0
      %271 = vmatprep.subr.bf16.mxu0 0
      %272 = vmatpush1.bf16.msra.mxu0 0
      %273 = vmatprep.subr.bf16.mxu0 0
      %274 = vmatpush1.bf16.msra.mxu0 0
      %275 = vmatprep.subr.bf16.mxu0 0
      %276 = vmatpush1.bf16.msra.mxu0 0
      %277 = vmatprep.subr.bf16.mxu0 0
      %278 = vmatpush1.bf16.msra.mxu0 0
      %279 = vmatprep.subr.bf16.mxu0 0
      %280 = vmatpush1.bf16.msra.mxu0 0
      %281 = vmatprep.subr.bf16.mxu0 0
      %282 = vmatpush1.bf16.msra.mxu0 0
      %283 = vmatprep.subr.bf16.mxu0 0
      %284 = vmatpush1.bf16.msra.mxu0 0
      %285 = vmatprep.subr.bf16.mxu0 0
      %286 = vmatpush1.bf16.msra.mxu0 0
      %287 = vmatprep.subr.bf16.mxu0 0
      %288 = vmatpush1.bf16.msra.mxu0 0
      %289 = vmatprep.subr.bf16.mxu0 0
      %290 = vmatpush1.bf16.msra.mxu0 0
      %291 = vmatprep.subr.bf16.mxu0 0
      %292 = vmatpush1.bf16.msra.mxu0 0
      %293 = vmatprep.subr.bf16.mxu0 0
      %294 = vmatpush1.bf16.msra.mxu0 0
      %295 = vmatprep.subr.bf16.mxu0 0
      %296 = vmatpush1.bf16.msra.mxu0 0
      %297 = vmatprep.subr.bf16.mxu0 0
      %298 = vmatpush1.bf16.msra.mxu0 0
      %299 = vmatprep.mubr.bf16.mxu0 0
      %300 = vmatmul.mubr.bf16.gmra.mrb[0].mxu0 %v265
      %v301 = vpop.f32.mrb[0].mxu0
      %v302 = vadd.f32 0.0, %v301
      %v303 = vpop.f32.mrb[0].mxu0
      %v304 = vpop.f32.mrb[0].mxu0
      %v305 = vpop.f32.mrb[0].mxu0
      %306 = vdwg.mxu0
      %p307 = scmp.eq.s32.totalorder %s21, 0
      // Predicated region
      $region33: #{transformer_forward.22} parent=31 // pred_check
        %p308 = pneg %p307
      $region34: #{transformer_forward.22} parent=31 // pred_check_branch
        %310 = sbr.rel (%p308) target = $region36
      $region35: #{transformer_forward.22} parent=31 // pred_region
        %v311 = vld [vmem:[%s243] sm:$0x1]
        %v313 = vlaneseq
        %v314 = vshrl.u32 %v313, 7
        %v315 = vsub.s32 0, %v314
        %v316 = vrot.slane %v311, %v315
        %v318 = vadd.f32 %v316, %v302
        %vm319 = vcmask 64512
        %320 = vst.msk [vmem:[%s250] sm:$0xff] %vm319, %v318
      $region36: #{transformer_forward.22} parent=31 // pred_fallthru
        _
      %p321 = scmp.gt.s32.totalorder %s21, 0
      // Predicated region
      $region37: #{transformer_forward.22} parent=31 // pred_check
        %p322 = pneg %p321
      $region38: #{transformer_forward.22} parent=31 // pred_check_branch
        %324 = sbr.rel (%p322) target = $region40
      $region39: #{transformer_forward.22} parent=31 // pred_region
        %v325 = vld [vmem:[%s250] sm:$0xff]
        %v326 = vadd.f32 %v325, %v302
        %vm327 = vcmask 64512
        %328 = vst.msk [vmem:[%s250] sm:$0xff] %vm327, %v326
      $region40: #{transformer_forward.22} parent=31 // pred_fallthru
        _
      %p329 = scmp.lt.s32.totalorder %s19, 1
      %s330 = scalar_select %p329, %s19, 1
      %p331 = scmp.lt.s32.totalorder %s20, 0
      %s332 = scalar_select %p331, %s20, 0
      %s333 = sadd.s32 %s332, %s330
      %s334 = smul.addr %s333, 8
      %s335 = scalar_lea.vmem %s3, %s334
      // Predicated region
      $region41: #{transformer_forward.22} parent=31 // pred_check
        %p336 = pneg %p135
      $region42: #{transformer_forward.22} parent=31 // pred_check_branch
        %338 = sbr.rel (%p336) target = $region44
      $region43: #{transformer_forward.22} parent=31 // pred_region
        _
      $region44: #{transformer_forward.22} parent=31 // pred_fallthru
        _
    $region32: #{transformer_forward.22} parent=5 // pred_fallthru
      _
    %p339 = scmp.le.s32.totalorder 2, %s9
    // Predicated region
    $region45: #{transformer_forward.22} parent=5 // pred_check
      %p340 = pneg %p339
    $region46: #{transformer_forward.22} parent=5 // pred_check_branch
      %342 = sbr.rel (%p340) target = $region48
    $region47: #{transformer_forward.22} parent=5 // pred_region
      %s343 = ssub.s32 %s9, 2
      // Predicated region
      $region49: #{transformer_forward.22} parent=47 // pred_check
        %p344 = pneg %p141
      $region50: #{transformer_forward.22} parent=47 // pred_check_branch
        %346 = sbr.rel (%p344) target = $region52
      $region51: #{transformer_forward.22} parent=47 // pred_region
        %p347 = scmp.lt.s32.totalorder %s22, 1
        %s348 = scalar_select %p347, %s22, 1
        %p349 = scmp.lt.s32.totalorder %s23, 0
        %s350 = scalar_select %p349, %s23, 0
        %s351 = sadd.s32 %s350, %s348
        %s352 = smul.addr %s351, 8
        %s353 = scalar_lea.vmem %s3, %s352
      $region52: #{transformer_forward.22} parent=47 // pred_fallthru
        _
    $region48: #{transformer_forward.22} parent=5 // pred_fallthru
      _
  $region6: #{transformer_forward.22} parent=0 // loop_footer
    %s13 = sadd.s32 1, %s9
  $region7: #{transformer_forward.22} parent=0 // loop_footer_branch
    %8 = sbr.rel target = $region3
  $region8: #{transformer_forward.22} parent=0 // loop_exit
    _

// kernel: transformer_forward.24
$region0: #{transformer_forward.24}
  #allocation0 [shape = 'u32[]', space=smem, size = 0x4, offset = 0x4, fixed_abs, tag = 'smem constant byte address 0x4 - core index']
  #allocation1 [shape = 'u32[144,128]{1,0:T(1,128)}', space=vmem, size = 0x12000, scoped, tag = 'internal scratch']
  %s0 = inlined_call_operand.vmem [shape: f32[16,16], index: 0, kind: input, shape index: {}]
  %s1 = inlined_call_operand.vmem [shape: bf16[16,32], index: 1, kind: input, shape index: {}]
  %s2 = inlined_call_operand.vmem [shape: f32[1,32], index: 2, kind: input, shape index: {}]
  %s3 = inlined_call_operand.vmem [shape: f32[16,32], index: 3, kind: output, shape index: {}]
  %s4 = sld [smem:[#allocation0]]
  $region53: #{transformer_forward.24} parent=0
    _
  %s6 = ssub.s32 1, %s4
  %s7 = scalar_select 0, %s6, %s4
  loop: start=0, step=1, limit=4
  $region2: #{transformer_forward.24} parent=0 // loop_pre_header
    _
  $region3: #{transformer_forward.24} parent=0 // loop_header
    %s9 = sphi 0, %s13
    %p10 = scmp.ge.s32.totalorder %s9, 4
    %s16 = sphi 0, %s35
    %s17 = sphi 0, %s31
    %s18 = sphi 0, %s27
    %s19 = sphi 0, %s16
    %s20 = sphi 0, %s17
    %s21 = sphi 0, %s18
    %s22 = sphi 0, %s19
    %s23 = sphi 0, %s20
    %s24 = sphi 0, %s21
    %s40 = sphi 0, %s42
    %s43 = sphi 0, %s40
    %s44 = sphi 0, %s43
    %s60 = sphi 0, %s44
    %s68 = sphi 0, %s70
    %s71 = sphi 0, %s68
    %s72 = sphi 0, %s71
    %s88 = sphi 0, %s72
    %s94 = sphi 0, %s96
    %s97 = sphi 0, %s94
    %s98 = sphi 0, %s97
    %s114 = sphi 0, %s98
    %s122 = sphi 0, %s124
    %s125 = sphi 0, %s122
    %s126 = sphi 0, %s125
    %s142 = sphi 0, %s126
  $region4: #{transformer_forward.24} parent=0 // loop_header_branch
    %12 = sbr.rel (%p10) target = $region8
  $region5: #{transformer_forward.24} parent=0 // loop_body
    %s14 = ssub.s32 %s9, 1
    %s15 = ssub.s32 %s9, 2
    %s25 = sadd.s32 1, %s18
    %p26 = scmp.ge.s32.totalorder %s25, 1
    %s27 = scalar_select %p26, 0, %s25
    %s28 = sadd.s32 1, %s17
    %s29 = scalar_select %p26, %s28, %s17
    %p30 = scmp.ge.s32.totalorder %s29, 1
    %s31 = scalar_select %p30, 0, %s29
    %s32 = sadd.s32 1, %s16
    %s33 = scalar_select %p30, %s32, %s16
    %p34 = scmp.ge.s32.totalorder %s33, 2
    %s35 = scalar_select %p34, 0, %s33
    %s36 = ssub.s32 %s16, %s35
    %s37 = ssub.s32 %s18, %s27
    %s38 = sor.u32 %s36, %s37
    %p39 = scmp.eq.s32.totalorder %s38, 0
    %s41 = sadd.s32 %s40, 1
    %s42 = scalar_select %p39, %s40, %s41
    %p45 = pneg %p39
    %p46 = scmp.eq.s32.totalorder %s9, 1
    %p47 = por %p45, %p46
    %p48 = scmp.ne.s32.totalorder %s40, %s43
    %p49 = scmp.eq.s32.totalorder %s9, 0
    %p50 = por %p48, %p49
    %p51 = scmp.ne.s32.totalorder %s40, %s43
    %p52 = scmp.eq.s32.totalorder %s14, 1
    %p53 = por %p51, %p52
    %p54 = scmp.ne.s32.totalorder %s43, %s44
    %p55 = scmp.eq.s32.totalorder %s14, 0
    %p56 = por %p54, %p55
    %p57 = scmp.ne.s32.totalorder %s43, %s44
    %p58 = scmp.eq.s32.totalorder %s15, 1
    %p59 = por %p57, %p58
    %p61 = scmp.ne.s32.totalorder %s44, %s60
    %p62 = scmp.eq.s32.totalorder %s15, 0
    %p63 = por %p61, %p62
    %s64 = ssub.s32 %s18, %s27
    %s65 = ssub.s32 %s17, %s31
    %s66 = sor.u32 %s64, %s65
    %p67 = scmp.eq.s32.totalorder %s66, 0
    %s69 = sadd.s32 %s68, 1
    %s70 = scalar_select %p67, %s68, %s69
    %p73 = pneg %p67
    %p74 = scmp.eq.s32.totalorder %s9, 1
    %p75 = por %p73, %p74
    %p76 = scmp.ne.s32.totalorder %s68, %s71
    %p77 = scmp.eq.s32.totalorder %s9, 0
    %p78 = por %p76, %p77
    %p79 = scmp.ne.s32.totalorder %s68, %s71
    %p80 = scmp.eq.s32.totalorder %s14, 1
    %p81 = por %p79, %p80
    %p82 = scmp.ne.s32.totalorder %s71, %s72
    %p83 = scmp.eq.s32.totalorder %s14, 0
    %p84 = por %p82, %p83
    %p85 = scmp.ne.s32.totalorder %s71, %s72
    %p86 = scmp.eq.s32.totalorder %s15, 1
    %p87 = por %p85, %p86
    %p89 = scmp.ne.s32.totalorder %s72, %s88
    %p90 = scmp.eq.s32.totalorder %s15, 0
    %p91 = por %p89, %p90
    %s92 = ssub.s32 %s17, %s31
    %p93 = scmp.eq.s32.totalorder %s92, 0
    %s95 = sadd.s32 %s94, 1
    %s96 = scalar_select %p93, %s94, %s95
    %p99 = pneg %p93
    %p100 = scmp.eq.s32.totalorder %s9, 1
    %p101 = por %p99, %p100
    %p102 = scmp.ne.s32.totalorder %s94, %s97
    %p103 = scmp.eq.s32.totalorder %s9, 0
    %p104 = por %p102, %p103
    %p105 = scmp.ne.s32.totalorder %s94, %s97
    %p106 = scmp.eq.s32.totalorder %s14, 1
    %p107 = por %p105, %p106
    %p108 = scmp.ne.s32.totalorder %s97, %s98
    %p109 = scmp.eq.s32.totalorder %s14, 0
    %p110 = por %p108, %p109
    %p111 = scmp.ne.s32.totalorder %s97, %s98
    %p112 = scmp.eq.s32.totalorder %s15, 1
    %p113 = por %p111, %p112
    %p115 = scmp.ne.s32.totalorder %s98, %s114
    %p116 = scmp.eq.s32.totalorder %s15, 0
    %p117 = por %p115, %p116
    %s118 = ssub.s32 %s16, %s35
    %s119 = ssub.s32 %s17, %s31
    %s120 = sor.u32 %s118, %s119
    %p121 = scmp.eq.s32.totalorder %s120, 0
    %s123 = sadd.s32 %s122, 1
    %s124 = scalar_select %p121, %s122, %s123
    %p127 = pneg %p121
    %p128 = scmp.eq.s32.totalorder %s9, 1
    %p129 = por %p127, %p128
    %p130 = scmp.ne.s32.totalorder %s122, %s125
    %p131 = scmp.eq.s32.totalorder %s9, 0
    %p132 = por %p130, %p131
    %p133 = scmp.ne.s32.totalorder %s122, %s125
    %p134 = scmp.eq.s32.totalorder %s14, 1
    %p135 = por %p133, %p134
    %p136 = scmp.ne.s32.totalorder %s125, %s126
    %p137 = scmp.eq.s32.totalorder %s14, 0
    %p138 = por %p136, %p137
    %p139 = scmp.ne.s32.totalorder %s125, %s126
    %p140 = scmp.eq.s32.totalorder %s15, 1
    %p141 = por %p139, %p140
    %p143 = scmp.ne.s32.totalorder %s126, %s142
    %p144 = scmp.eq.s32.totalorder %s15, 0
    %p145 = por %p143, %p144
    %p146 = scmp.le.s32.totalorder 1, %s9
    %p147 = scmp.lt.s32.totalorder %s9, 3
    %p148 = pnand %p146, %p147
    %p149 = pneg %p148
    // Predicated region
    $region9: #{transformer_forward.24} parent=5 // pred_check
      _
    $region10: #{transformer_forward.24} parent=5 // pred_check_branch
      %151 = sbr.rel (%p148) target = $region12
    $region11: #{transformer_forward.24} parent=5 // pred_region
      %s152 = ssub.s32 %s9, 1
      // Predicated region
      $region13: #{transformer_forward.24} parent=11 // pred_check
        %p153 = pneg %p84
      $region14: #{transformer_forward.24} parent=11 // pred_check_branch
        %155 = sbr.rel (%p153) target = $region16
      $region15: #{transformer_forward.24} parent=11 // pred_region
        %s156 = smul.u32 2, %s21
        %p157 = scmp.lt.s32.totalorder %s156, 1
        %s158 = scalar_select %p157, %s156, 1
        %p159 = scmp.lt.s32.totalorder %s20, 0
        %s160 = scalar_select %p159, %s20, 0
        %s161 = sadd.s32 %s160, %s158
        %s162 = smul.addr %s161, 4
        %s163 = scalar_lea.vmem %s1, %s162
        %s164 = smul.u32 2, %s21
      $region16: #{transformer_forward.24} parent=11 // pred_fallthru
        _
      // Predicated region
      $region17: #{transformer_forward.24} parent=11 // pred_check
        %p165 = pneg %p110
      $region18: #{transformer_forward.24} parent=11 // pred_check_branch
        %167 = sbr.rel (%p165) target = $region20
      $region19: #{transformer_forward.24} parent=11 // pred_region
        %p168 = scmp.lt.s32.totalorder %s20, 0
        %s169 = scalar_select %p168, %s20, 0
        %s170 = scalar_lea.vmem %s2, %s169
      $region20: #{transformer_forward.24} parent=11 // pred_fallthru
        _
    $region12: #{transformer_forward.24} parent=5 // pred_fallthru
      _
    %p171 = scmp.lt.s32.totalorder %s9, 2
    // Predicated region
    $region21: #{transformer_forward.24} parent=5 // pred_check
      %p172 = pneg %p171
    $region22: #{transformer_forward.24} parent=5 // pred_check_branch
      %174 = sbr.rel (%p172) target = $region24
    $region23: #{transformer_forward.24} parent=5 // pred_region
      // Predicated region
      $region25: #{transformer_forward.24} parent=23 // pred_check
        %p175 = pneg %p50
      $region26: #{transformer_forward.24} parent=23 // pred_check_branch
        %177 = sbr.rel (%p175) target = $region28
      $region27: #{transformer_forward.24} parent=23 // pred_region
        %p178 = scmp.lt.s32.totalorder %s16, 1
        %s179 = scalar_select %p178, %s16, 1
        %p180 = scmp.lt.s32.totalorder %s18, 0
        %s181 = scalar_select %p180, %s18, 0
        %s182 = sadd.s32 %s181, %s179
        %s183 = smul.addr %s182, 8
        %s184 = scalar_lea.vmem %s0, %s183
      $region28: #{transformer_forward.24} parent=23 // pred_fallthru
        _
    $region24: #{transformer_forward.24} parent=5 // pred_fallthru
      _
    %p185 = scmp.le.s32.totalorder 1, %s9
    %p186 = scmp.lt.s32.totalorder %s9, 3
    %p187 = pnand %p185, %p186
    %p188 = pneg %p187
    // Predicated region
    $region29: #{transformer_forward.24} parent=5 // pred_check
      _
    $region30: #{transformer_forward.24} parent=5 // pred_check_branch
      %190 = sbr.rel (%p187) target = $region32
    $region31: #{transformer_forward.24} parent=5 // pred_region
      %s191 = ssub.s32 %s9, 1
      %p192 = scmp.lt.s32.totalorder %s19, 1
      %s193 = scalar_select %p192, %s19, 1
      %p194 = scmp.lt.s32.totalorder %s21, 0
      %s195 = scalar_select %p194, %s21, 0
      %s196 = sadd.s32 %s195, %s193
      %s197 = smul.addr %s196, 8
      %s198 = scalar_lea.vmem %s0, %s197
      %p199 = pneg %p56
      %p200 = pneg %p53
      %s201 = smul.u32 2, %s21
      %p202 = scmp.lt.s32.totalorder %s201, 1
      %s203 = scalar_select %p202, %s201, 1
      %p204 = scmp.lt.s32.totalorder %s20, 0
      %s205 = scalar_select %p204, %s20, 0
      %s206 = sadd.s32 %s205, %s203
      %s207 = smul.addr %s206, 4
      %s208 = scalar_lea.vmem %s1, %s207
      %p209 = pneg %p84
      %p210 = pneg %p81
      %p211 = scmp.lt.s32.totalorder %s20, 0
      %s212 = scalar_select %p211, %s20, 0
      %s213 = scalar_lea.vmem %s2, %s212
      %p214 = pneg %p110
      %p215 = pneg %p107
      %p216 = pneg %p138
      %p217 = pneg %p135
      %p218 = scmp.lt.s32.totalorder %s19, 1
      %s219 = scalar_select %p218, %s19, 1
      %p220 = scmp.lt.s32.totalorder %s20, 0
      %s221 = scalar_select %p220, %s20, 0
      %s222 = sadd.s32 %s221, %s219
      %s223 = smul.addr %s222, 8
      %s224 = scalar_lea.vmem %s3, %s223
      %p225 = scmp.lt.s32.totalorder %s19, 1
      %s226 = scalar_select %p225, %s19, 1
      %p227 = scmp.lt.s32.totalorder %s21, 0
      %s228 = scalar_select %p227, %s21, 0
      %s229 = sadd.s32 %s228, %s226
      %s230 = smul.addr %s229, 8
      %s231 = scalar_lea.vmem %s0, %s230
      %s232 = smul.u32 2, %s21
      %p233 = scmp.lt.s32.totalorder %s232, 1
      %s234 = scalar_select %p233, %s232, 1
      %p235 = scmp.lt.s32.totalorder %s20, 0
      %s236 = scalar_select %p235, %s20, 0
      %s237 = sadd.s32 %s236, %s234
      %s238 = smul.addr %s237, 4
      %s239 = scalar_lea.vmem %s1, %s238
      %s240 = smul.u32 2, %s21
      %p241 = scmp.lt.s32.totalorder %s20, 0
      %s242 = scalar_select %p241, %s20, 0
      %s243 = scalar_lea.vmem %s2, %s242
      %p244 = scmp.lt.s32.totalorder %s19, 1
      %s245 = scalar_select %p244, %s19, 1
      %p246 = scmp.lt.s32.totalorder %s20, 0
      %s247 = scalar_select %p246, %s20, 0
      %s248 = sadd.s32 %s247, %s245
      %s249 = smul.addr %s248, 8
      %s250 = scalar_lea.vmem %s3, %s249
      %v252 = vld [vmem:[%s231] sm:$0xff]
      %v253 = vpack.c.bf16 %v252, %v252
      %v254 = vld [vmem:[%s239] sm:$0xf]
      %v255 = vld [vmem:[%s239 + $0x4] sm:$0xf]
      %v258 = vunpack.c.l.b16 %v254
      %v259 = vunpack.c.l.b16 %v255
      %v260 = vpack.c.b16 %v259, %v258
      %vm262 = vcmask 130048
      %v264 = vsel %vm262, %v253, 0
      %266 = vmatprep.subr.bf16.mxu0 0
      %267 = vmatpush1.bf16.msra.mxu0 %v260
      %268 = vmatprep.subr.bf16.mxu0 0
      %269 = vmatpush1.bf16.msra.mxu0 0
      %270 = vmatprep.subr.bf16.mxu0 0
      %271 = vmatpush1.bf16.msra.mxu0 0
      %272 = vmatprep.subr.bf16.mxu0 0
      %273 = vmatpush1.bf16.msra.mxu0 0
      %274 = vmatprep.subr.bf16.mxu0 0
      %275 = vmatpush1.bf16.msra.mxu0 0
      %276 = vmatprep.subr.bf16.mxu0 0
      %277 = vmatpush1.bf16.msra.mxu0 0
      %278 = vmatprep.subr.bf16.mxu0 0
      %279 = vmatpush1.bf16.msra.mxu0 0
      %280 = vmatprep.subr.bf16.mxu0 0
      %281 = vmatpush1.bf16.msra.mxu0 0
      %282 = vmatprep.subr.bf16.mxu0 0
      %283 = vmatpush1.bf16.msra.mxu0 0
      %284 = vmatprep.subr.bf16.mxu0 0
      %285 = vmatpush1.bf16.msra.mxu0 0
      %286 = vmatprep.subr.bf16.mxu0 0
      %287 = vmatpush1.bf16.msra.mxu0 0
      %288 = vmatprep.subr.bf16.mxu0 0
      %289 = vmatpush1.bf16.msra.mxu0 0
      %290 = vmatprep.subr.bf16.mxu0 0
      %291 = vmatpush1.bf16.msra.mxu0 0
      %292 = vmatprep.subr.bf16.mxu0 0
      %293 = vmatpush1.bf16.msra.mxu0 0
      %294 = vmatprep.subr.bf16.mxu0 0
      %295 = vmatpush1.bf16.msra.mxu0 0
      %296 = vmatprep.subr.bf16.mxu0 0
      %297 = vmatpush1.bf16.msra.mxu0 0
      %298 = vmatprep.mubr.bf16.mxu0 0
      %299 = vmatmul.mubr.bf16.gmra.mrb[0].mxu0 %v264
      %v300 = vpop.f32.mrb[0].mxu0
      %v301 = vadd.f32 0.0, %v300
      %v302 = vpop.f32.mrb[0].mxu0
      %v303 = vpop.f32.mrb[0].mxu0
      %v304 = vpop.f32.mrb[0].mxu0
      %305 = vdwg.mxu0
      %p306 = scmp.eq.s32.totalorder %s21, 0
      // Predicated region
      $region33: #{transformer_forward.24} parent=31 // pred_check
        %p307 = pneg %p306
      $region34: #{transformer_forward.24} parent=31 // pred_check_branch
        %309 = sbr.rel (%p307) target = $region36
      $region35: #{transformer_forward.24} parent=31 // pred_region
        %v310 = vld [vmem:[%s243] sm:$0x1]
        %v312 = vlaneseq
        %v313 = vshrl.u32 %v312, 7
        %v314 = vsub.s32 0, %v313
        %v315 = vrot.slane %v310, %v314
        %v317 = vadd.f32 %v315, %v301
        %vm318 = vcmask 261120
        %319 = vst.msk [vmem:[%s250] sm:$0xff] %vm318, %v317
      $region36: #{transformer_forward.24} parent=31 // pred_fallthru
        _
      %p320 = scmp.gt.s32.totalorder %s21, 0
      // Predicated region
      $region37: #{transformer_forward.24} parent=31 // pred_check
        %p321 = pneg %p320
      $region38: #{transformer_forward.24} parent=31 // pred_check_branch
        %323 = sbr.rel (%p321) target = $region40
      $region39: #{transformer_forward.24} parent=31 // pred_region
        %v324 = vld [vmem:[%s250] sm:$0xff]
        %v325 = vadd.f32 %v324, %v301
        %vm326 = vcmask 261120
        %327 = vst.msk [vmem:[%s250] sm:$0xff] %vm326, %v325
      $region40: #{transformer_forward.24} parent=31 // pred_fallthru
        _
      %p328 = scmp.lt.s32.totalorder %s19, 1
      %s329 = scalar_select %p328, %s19, 1
      %p330 = scmp.lt.s32.totalorder %s20, 0
      %s331 = scalar_select %p330, %s20, 0
      %s332 = sadd.s32 %s331, %s329
      %s333 = smul.addr %s332, 8
      %s334 = scalar_lea.vmem %s3, %s333
      // Predicated region
      $region41: #{transformer_forward.24} parent=31 // pred_check
        %p335 = pneg %p135
      $region42: #{transformer_forward.24} parent=31 // pred_check_branch
        %337 = sbr.rel (%p335) target = $region44
      $region43: #{transformer_forward.24} parent=31 // pred_region
        _
      $region44: #{transformer_forward.24} parent=31 // pred_fallthru
        _
    $region32: #{transformer_forward.24} parent=5 // pred_fallthru
      _
    %p338 = scmp.le.s32.totalorder 2, %s9
    // Predicated region
    $region45: #{transformer_forward.24} parent=5 // pred_check
      %p339 = pneg %p338
    $region46: #{transformer_forward.24} parent=5 // pred_check_branch
      %341 = sbr.rel (%p339) target = $region48
    $region47: #{transformer_forward.24} parent=5 // pred_region
      %s342 = ssub.s32 %s9, 2
      // Predicated region
      $region49: #{transformer_forward.24} parent=47 // pred_check
        %p343 = pneg %p141
      $region50: #{transformer_forward.24} parent=47 // pred_check_branch
        %345 = sbr.rel (%p343) target = $region52
      $region51: #{transformer_forward.24} parent=47 // pred_region
        %p346 = scmp.lt.s32.totalorder %s22, 1
        %s347 = scalar_select %p346, %s22, 1
        %p348 = scmp.lt.s32.totalorder %s23, 0
        %s349 = scalar_select %p348, %s23, 0
        %s350 = sadd.s32 %s349, %s347
        %s351 = smul.addr %s350, 8
        %s352 = scalar_lea.vmem %s3, %s351
      $region52: #{transformer_forward.24} parent=47 // pred_fallthru
        _
    $region48: #{transformer_forward.24} parent=5 // pred_fallthru
      _
  $region6: #{transformer_forward.24} parent=0 // loop_footer
    %s13 = sadd.s32 1, %s9
  $region7: #{transformer_forward.24} parent=0 // loop_footer_branch
    %8 = sbr.rel target = $region3
  $region8: #{transformer_forward.24} parent=0 // loop_exit
    _

// kernel: transformer_forward.25
$region0: #{transformer_forward.25}
  #allocation0 [shape = 'u32[]', space=smem, size = 0x4, offset = 0x4, fixed_abs, tag = 'smem constant byte address 0x4 - core index']
  #allocation1 [shape = 'u32[144,128]{1,0:T(1,128)}', space=vmem, size = 0x12000, scoped, tag = 'internal scratch']
  %s0 = inlined_call_operand.vmem [shape: f32[16,32], index: 0, kind: input, shape index: {}]
  %s1 = inlined_call_operand.vmem [shape: f32[16,32], index: 1, kind: input, shape index: {}]
  %s2 = inlined_call_operand.vmem [shape: f32[1,32], index: 2, kind: input, shape index: {}]
  %s3 = inlined_call_operand.vmem [shape: f32[1,32], index: 3, kind: input, shape index: {}]
  %s4 = inlined_call_operand.vmem [shape: f32[16,32], index: 4, kind: output, shape index: {}]
  %s5 = sld [smem:[#allocation0]]
  $region49: #{transformer_forward.25} parent=0
    _
  %s7 = ssub.s32 1, %s5
  %s8 = scalar_select 0, %s7, %s5
  loop: start=0, step=1, limit=4
  $region2: #{transformer_forward.25} parent=0 // loop_pre_header
    _
  $region3: #{transformer_forward.25} parent=0 // loop_header
    %s10 = sphi 0, %s14
    %p11 = scmp.ge.s32.totalorder %s10, 4
    %s20 = sphi 0, %s22
    %s23 = sphi 0, %s20
    %s24 = sphi 0, %s23
    %s40 = sphi 0, %s24
    %s46 = sphi 0, %s48
    %s49 = sphi 0, %s46
    %s50 = sphi 0, %s49
    %s66 = sphi 0, %s50
    %s70 = sphi 0, %s70
    %s72 = sphi 0, %s70
    %s73 = sphi 0, %s72
    %s87 = sphi 0, %s73
    %s91 = sphi 0, %s91
    %s93 = sphi 0, %s91
    %s94 = sphi 0, %s93
    %s108 = sphi 0, %s94
    %s114 = sphi 0, %s116
    %s117 = sphi 0, %s114
    %s118 = sphi 0, %s117
    %s134 = sphi 0, %s118
  $region4: #{transformer_forward.25} parent=0 // loop_header_branch
    %13 = sbr.rel (%p11) target = $region8
  $region5: #{transformer_forward.25} parent=0 // loop_body
    %s15 = ssub.s32 %s10, 1
    %s16 = ssub.s32 %s10, 2
    %s17 = sadd.s32 %s10, 1
    %s18 = ssub.s32 %s10, %s17
    %p19 = scmp.eq.s32.totalorder %s18, 0
    %s21 = sadd.s32 %s20, 1
    %s22 = scalar_select %p19, %s20, %s21
    %p25 = pneg %p19
    %p26 = scmp.eq.s32.totalorder %s10, 1
    %p27 = por %p25, %p26
    %p28 = scmp.ne.s32.totalorder %s20, %s23
    %p29 = scmp.eq.s32.totalorder %s10, 0
    %p30 = por %p28, %p29
    %p31 = scmp.ne.s32.totalorder %s20, %s23
    %p32 = scmp.eq.s32.totalorder %s15, 1
    %p33 = por %p31, %p32
    %p34 = scmp.ne.s32.totalorder %s23, %s24
    %p35 = scmp.eq.s32.totalorder %s15, 0
    %p36 = por %p34, %p35
    %p37 = scmp.ne.s32.totalorder %s23, %s24
    %p38 = scmp.eq.s32.totalorder %s16, 1
    %p39 = por %p37, %p38
    %p41 = scmp.ne.s32.totalorder %s24, %s40
    %p42 = scmp.eq.s32.totalorder %s16, 0
    %p43 = por %p41, %p42
    %s44 = ssub.s32 %s10, %s17
    %p45 = scmp.eq.s32.totalorder %s44, 0
    %s47 = sadd.s32 %s46, 1
    %s48 = scalar_select %p45, %s46, %s47
    %p51 = pneg %p45
    %p52 = scmp.eq.s32.totalorder %s10, 1
    %p53 = por %p51, %p52
    %p54 = scmp.ne.s32.totalorder %s46, %s49
    %p55 = scmp.eq.s32.totalorder %s10, 0
    %p56 = por %p54, %p55
    %p57 = scmp.ne.s32.totalorder %s46, %s49
    %p58 = scmp.eq.s32.totalorder %s15, 1
    %p59 = por %p57, %p58
    %p60 = scmp.ne.s32.totalorder %s49, %s50
    %p61 = scmp.eq.s32.totalorder %s15, 0
    %p62 = por %p60, %p61
    %p63 = scmp.ne.s32.totalorder %s49, %s50
    %p64 = scmp.eq.s32.totalorder %s16, 1
    %p65 = por %p63, %p64
    %p67 = scmp.ne.s32.totalorder %s50, %s66
    %p68 = scmp.eq.s32.totalorder %s16, 0
    %p69 = por %p67, %p68
    %s71 = sadd.s32 %s70, 1
    %p74 = scmp.eq.s32.totalorder %s10, 1
    %p75 = scmp.ne.s32.totalorder %s70, %s72
    %p76 = scmp.eq.s32.totalorder %s10, 0
    %p77 = por %p75, %p76
    %p78 = scmp.ne.s32.totalorder %s70, %s72
    %p79 = scmp.eq.s32.totalorder %s15, 1
    %p80 = por %p78, %p79
    %p81 = scmp.ne.s32.totalorder %s72, %s73
    %p82 = scmp.eq.s32.totalorder %s15, 0
    %p83 = por %p81, %p82
    %p84 = scmp.ne.s32.totalorder %s72, %s73
    %p85 = scmp.eq.s32.totalorder %s16, 1
    %p86 = por %p84, %p85
    %p88 = scmp.ne.s32.totalorder %s73, %s87
    %p89 = scmp.eq.s32.totalorder %s16, 0
    %p90 = por %p88, %p89
    %s92 = sadd.s32 %s91, 1
    %p95 = scmp.eq.s32.totalorder %s10, 1
    %p96 = scmp.ne.s32.totalorder %s91, %s93
    %p97 = scmp.eq.s32.totalorder %s10, 0
    %p98 = por %p96, %p97
    %p99 = scmp.ne.s32.totalorder %s91, %s93
    %p100 = scmp.eq.s32.totalorder %s15, 1
    %p101 = por %p99, %p100
    %p102 = scmp.ne.s32.totalorder %s93, %s94
    %p103 = scmp.eq.s32.totalorder %s15, 0
    %p104 = por %p102, %p103
    %p105 = scmp.ne.s32.totalorder %s93, %s94
    %p106 = scmp.eq.s32.totalorder %s16, 1
    %p107 = por %p105, %p106
    %p109 = scmp.ne.s32.totalorder %s94, %s108
    %p110 = scmp.eq.s32.totalorder %s16, 0
    %p111 = por %p109, %p110
    %s112 = ssub.s32 %s10, %s17
    %p113 = scmp.eq.s32.totalorder %s112, 0
    %s115 = sadd.s32 %s114, 1
    %s116 = scalar_select %p113, %s114, %s115
    %p119 = pneg %p113
    %p120 = scmp.eq.s32.totalorder %s10, 1
    %p121 = por %p119, %p120
    %p122 = scmp.ne.s32.totalorder %s114, %s117
    %p123 = scmp.eq.s32.totalorder %s10, 0
    %p124 = por %p122, %p123
    %p125 = scmp.ne.s32.totalorder %s114, %s117
    %p126 = scmp.eq.s32.totalorder %s15, 1
    %p127 = por %p125, %p126
    %p128 = scmp.ne.s32.totalorder %s117, %s118
    %p129 = scmp.eq.s32.totalorder %s15, 0
    %p130 = por %p128, %p129
    %p131 = scmp.ne.s32.totalorder %s117, %s118
    %p132 = scmp.eq.s32.totalorder %s16, 1
    %p133 = por %p131, %p132
    %p135 = scmp.ne.s32.totalorder %s118, %s134
    %p136 = scmp.eq.s32.totalorder %s16, 0
    %p137 = por %p135, %p136
    %p138 = scmp.le.s32.totalorder 1, %s10
    %p139 = scmp.lt.s32.totalorder %s10, 3
    %p140 = pnand %p138, %p139
    %p141 = pneg %p140
    // Predicated region
    $region9: #{transformer_forward.25} parent=5 // pred_check
      _
    $region10: #{transformer_forward.25} parent=5 // pred_check_branch
      %143 = sbr.rel (%p140) target = $region12
    $region11: #{transformer_forward.25} parent=5 // pred_region
      %s144 = ssub.s32 %s10, 1
      // Predicated region
      $region13: #{transformer_forward.25} parent=11 // pred_check
        %p145 = pneg %p83
      $region14: #{transformer_forward.25} parent=11 // pred_check_branch
        %147 = sbr.rel (%p145) target = $region16
      $region15: #{transformer_forward.25} parent=11 // pred_region
        _
      $region16: #{transformer_forward.25} parent=11 // pred_fallthru
        _
      // Predicated region
      $region17: #{transformer_forward.25} parent=11 // pred_check
        %p148 = pneg %p104
      $region18: #{transformer_forward.25} parent=11 // pred_check_branch
        %150 = sbr.rel (%p148) target = $region20
      $region19: #{transformer_forward.25} parent=11 // pred_region
        _
      $region20: #{transformer_forward.25} parent=11 // pred_fallthru
        _
    $region12: #{transformer_forward.25} parent=5 // pred_fallthru
      _
    %p151 = scmp.lt.s32.totalorder %s10, 2
    // Predicated region
    $region21: #{transformer_forward.25} parent=5 // pred_check
      %p152 = pneg %p151
    $region22: #{transformer_forward.25} parent=5 // pred_check_branch
      %154 = sbr.rel (%p152) target = $region24
    $region23: #{transformer_forward.25} parent=5 // pred_region
      // Predicated region
      $region25: #{transformer_forward.25} parent=23 // pred_check
        %p155 = pneg %p30
      $region26: #{transformer_forward.25} parent=23 // pred_check_branch
        %157 = sbr.rel (%p155) target = $region28
      $region27: #{transformer_forward.25} parent=23 // pred_region
        %p158 = scmp.lt.s32.totalorder %s10, 1
        %s159 = scalar_select %p158, %s10, 1
        %s160 = smul.addr %s159, 8
        %s161 = scalar_lea.vmem %s0, %s160
      $region28: #{transformer_forward.25} parent=23 // pred_fallthru
        _
      // Predicated region
      $region29: #{transformer_forward.25} parent=23 // pred_check
        %p162 = pneg %p56
      $region30: #{transformer_forward.25} parent=23 // pred_check_branch
        %164 = sbr.rel (%p162) target = $region32
      $region31: #{transformer_forward.25} parent=23 // pred_region
        %p165 = scmp.lt.s32.totalorder %s10, 1
        %s166 = scalar_select %p165, %s10, 1
        %s167 = smul.addr %s166, 8
        %s168 = scalar_lea.vmem %s1, %s167
      $region32: #{transformer_forward.25} parent=23 // pred_fallthru
        _
    $region24: #{transformer_forward.25} parent=5 // pred_fallthru
      _
    %p169 = scmp.le.s32.totalorder 1, %s10
    %p170 = scmp.lt.s32.totalorder %s10, 3
    %p171 = pnand %p169, %p170
    %p172 = pneg %p171
    // Predicated region
    $region33: #{transformer_forward.25} parent=5 // pred_check
      _
    $region34: #{transformer_forward.25} parent=5 // pred_check_branch
      %174 = sbr.rel (%p171) target = $region36
    $region35: #{transformer_forward.25} parent=5 // pred_region
      %s175 = ssub.s32 %s10, 1
      %p176 = scmp.lt.s32.totalorder %s15, 1
      %s177 = scalar_select %p176, %s15, 1
      %s178 = smul.addr %s177, 8
      %s179 = scalar_lea.vmem %s0, %s178
      %p180 = pneg %p36
      %p181 = pneg %p33
      %p182 = scmp.lt.s32.totalorder %s15, 1
      %s183 = scalar_select %p182, %s15, 1
      %s184 = smul.addr %s183, 8
      %s185 = scalar_lea.vmem %s1, %s184
      %p186 = pneg %p62
      %p187 = pneg %p59
      %p188 = pneg %p83
      %p189 = pneg %p80
      %p190 = pneg %p104
      %p191 = pneg %p101
      %p192 = pneg %p130
      %p193 = pneg %p127
      %p194 = scmp.lt.s32.totalorder %s15, 1
      %s195 = scalar_select %p194, %s15, 1
      %s196 = smul.addr %s195, 8
      %s197 = scalar_lea.vmem %s4, %s196
      %p198 = scmp.lt.s32.totalorder %s15, 1
      %s199 = scalar_select %p198, %s15, 1
      %s200 = smul.addr %s199, 8
      %s201 = scalar_lea.vmem %s0, %s200
      %p202 = scmp.lt.s32.totalorder %s15, 1
      %s203 = scalar_select %p202, %s15, 1
      %s204 = smul.addr %s203, 8
      %s205 = scalar_lea.vmem %s1, %s204
      %p206 = scmp.lt.s32.totalorder %s15, 1
      %s207 = scalar_select %p206, %s15, 1
      %s208 = smul.addr %s207, 8
      %s209 = scalar_lea.vmem %s4, %s208
      %v210 = vld [vmem:[%s201] sm:$0xff]
      %v211 = vld [vmem:[%s205] sm:$0xff]
      %v212 = vadd.f32 %v210, %v211
      %vm213 = vcmask 261120
      %v214 = vsel %vm213, %v212, 0.0
      %215 = vadd.xlane.f32.xlu0 %v214
      %v216 = vpop.xlane.xlu0 %215
      %v217 = vrcp.pop 32.0
      %v218 = vmul.f32 %v216, %v217
      %v219 = vsub.f32 %v212, %v218
      %v220 = vmul.f32 %v219, %v219
      %v221 = vsel %vm213, %v220, 0.0
      %222 = vadd.xlane.f32.xlu0 %v221
      %v223 = vpop.xlane.xlu0 %222
      %v224 = vmul.f32 %v223, %v217
      %v225 = vadd.f32 %v224, 1e-05
      %v226 = vrsqrt.pop %v225
      %v227 = vmul.f32 %v219, %v226
      %v228 = vld [vmem:[%s2] sm:$0x1]
      %v230 = vlaneseq
      %v231 = vshrl.u32 %v230, 7
      %v232 = vsub.s32 0, %v231
      %v233 = vrot.slane %v228, %v232
      %v235 = vmul.f32 %v227, %v233
      %v236 = vld [vmem:[%s3] sm:$0x1]
      %v238 = vlaneseq
      %v239 = vshrl.u32 %v238, 7
      %v240 = vsub.s32 0, %v239
      %v241 = vrot.slane %v236, %v240
      %v243 = vadd.f32 %v235, %v241
      %244 = vst.msk [vmem:[%s209] sm:$0xff] %vm213, %v243
      %p245 = scmp.lt.s32.totalorder %s15, 1
      %s246 = scalar_select %p245, %s15, 1
      %s247 = smul.addr %s246, 8
      %s248 = scalar_lea.vmem %s4, %s247
      // Predicated region
      $region37: #{transformer_forward.25} parent=35 // pred_check
        %p249 = pneg %p127
      $region38: #{transformer_forward.25} parent=35 // pred_check_branch
        %251 = sbr.rel (%p249) target = $region40
      $region39: #{transformer_forward.25} parent=35 // pred_region
        _
      $region40: #{transformer_forward.25} parent=35 // pred_fallthru
        _
    $region36: #{transformer_forward.25} parent=5 // pred_fallthru
      _
    %p252 = scmp.le.s32.totalorder 2, %s10
    // Predicated region
    $region41: #{transformer_forward.25} parent=5 // pred_check
      %p253 = pneg %p252
    $region42: #{transformer_forward.25} parent=5 // pred_check_branch
      %255 = sbr.rel (%p253) target = $region44
    $region43: #{transformer_forward.25} parent=5 // pred_region
      %s256 = ssub.s32 %s10, 2
      // Predicated region
      $region45: #{transformer_forward.25} parent=43 // pred_check
        %p257 = pneg %p133
      $region46: #{transformer_forward.25} parent=43 // pred_check_branch
        %259 = sbr.rel (%p257) target = $region48
      $region47: #{transformer_forward.25} parent=43 // pred_region
        %p260 = scmp.lt.s32.totalorder %s16, 1
        %s261 = scalar_select %p260, %s16, 1
        %s262 = smul.addr %s261, 8
        %s263 = scalar_lea.vmem %s4, %s262
      $region48: #{transformer_forward.25} parent=43 // pred_fallthru
        _
    $region44: #{transformer_forward.25} parent=5 // pred_fallthru
      _
  $region6: #{transformer_forward.25} parent=0 // loop_footer
    %s14 = sadd.s32 1, %s10
  $region7: #{transformer_forward.25} parent=0 // loop_footer_branch
    %9 = sbr.rel target = $region3
  $region8: #{transformer_forward.25} parent=0 // loop_exit
    _

// kernel: transformer_forward.23
$region0: #{transformer_forward.23}
  #allocation0 [shape = 'u32[]', space=smem, size = 0x4, offset = 0x4, fixed_abs, tag = 'smem constant byte address 0x4 - core index']
  #allocation1 [shape = 'u32[144,128]{1,0:T(1,128)}', space=vmem, size = 0x12000, scoped, tag = 'internal scratch']
  %s0 = inlined_call_operand.vmem [shape: f32[2,8,48], index: 0, kind: input, shape index: {}, may-alias: {0,1}]
  %s1 = inlined_call_operand.vmem [shape: f32[2,8,48], index: 1, kind: input, shape index: {}, may-alias: {0,1}]
  %s2 = inlined_call_operand.vmem [shape: f32[2,8,1], index: 2, kind: input, shape index: {}]
  %s3 = inlined_call_operand.vmem [shape: f32[2,8,16], index: 3, kind: output, shape index: {}]
  %s4 = sld [smem:[#allocation0]]
  $region45: #{transformer_forward.23} parent=0
    _
  %s6 = ssub.s32 1, %s4
  %s7 = scalar_select 0, %s6, %s4
  loop: start=0, step=1, limit=4
  $region2: #{transformer_forward.23} parent=0 // loop_pre_header
    _
  $region3: #{transformer_forward.23} parent=0 // loop_header
    %s9 = sphi 0, %s13
    %p10 = scmp.ge.s32.totalorder %s9, 4
    %s16 = sphi 0, %s28
    %s17 = sphi 0, %s24
    %s18 = sphi 0, %s16
    %s19 = sphi 0, %s17
    %s20 = sphi 0, %s18
    %s21 = sphi 0, %s19
    %s33 = sphi 0, %s35
    %s36 = sphi 0, %s33
    %s37 = sphi 0, %s36
    %s53 = sphi 0, %s37
    %s59 = sphi 0, %s61
    %s62 = sphi 0, %s59
    %s63 = sphi 0, %s62
    %s79 = sphi 0, %s63
    %s87 = sphi 0, %s89
    %s90 = sphi 0, %s87
    %s91 = sphi 0, %s90
    %s107 = sphi 0, %s91
    %s115 = sphi 0, %s117
    %s118 = sphi 0, %s115
    %s119 = sphi 0, %s118
    %s135 = sphi 0, %s119
  $region4: #{transformer_forward.23} parent=0 // loop_header_branch
    %12 = sbr.rel (%p10) target = $region8
  $region5: #{transformer_forward.23} parent=0 // loop_body
    %s14 = ssub.s32 %s9, 1
    %s15 = ssub.s32 %s9, 2
    %s22 = sadd.s32 1, %s17
    %p23 = scmp.ge.s32.totalorder %s22, 1
    %s24 = scalar_select %p23, 0, %s22
    %s25 = sadd.s32 1, %s16
    %s26 = scalar_select %p23, %s25, %s16
    %p27 = scmp.ge.s32.totalorder %s26, 2
    %s28 = scalar_select %p27, 0, %s26
    %s29 = ssub.s32 %s16, %s28
    %s30 = ssub.s32 %s17, %s24
    %s31 = sor.u32 %s29, %s30
    %p32 = scmp.eq.s32.totalorder %s31, 0
    %s34 = sadd.s32 %s33, 1
    %s35 = scalar_select %p32, %s33, %s34
    %p38 = pneg %p32
    %p39 = scmp.eq.s32.totalorder %s9, 1
    %p40 = por %p38, %p39
    %p41 = scmp.ne.s32.totalorder %s33, %s36
    %p42 = scmp.eq.s32.totalorder %s9, 0
    %p43 = por %p41, %p42
    %p44 = scmp.ne.s32.totalorder %s33, %s36
    %p45 = scmp.eq.s32.totalorder %s14, 1
    %p46 = por %p44, %p45
    %p47 = scmp.ne.s32.totalorder %s36, %s37
    %p48 = scmp.eq.s32.totalorder %s14, 0
    %p49 = por %p47, %p48
    %p50 = scmp.ne.s32.totalorder %s36, %s37
    %p51 = scmp.eq.s32.totalorder %s15, 1
    %p52 = por %p50, %p51
    %p54 = scmp.ne.s32.totalorder %s37, %s53
    %p55 = scmp.eq.s32.totalorder %s15, 0
    %p56 = por %p54, %p55
    %s57 = ssub.s32 %s16, %s28
    %p58 = scmp.eq.s32.totalorder %s57, 0
    %s60 = sadd.s32 %s59, 1
    %s61 = scalar_select %p58, %s59, %s60
    %p64 = pneg %p58
    %p65 = scmp.eq.s32.totalorder %s9, 1
    %p66 = por %p64, %p65
    %p67 = scmp.ne.s32.totalorder %s59, %s62
    %p68 = scmp.eq.s32.totalorder %s9, 0
    %p69 = por %p67, %p68
    %p70 = scmp.ne.s32.totalorder %s59, %s62
    %p71 = scmp.eq.s32.totalorder %s14, 1
    %p72 = por %p70, %p71
    %p73 = scmp.ne.s32.totalorder %s62, %s63
    %p74 = scmp.eq.s32.totalorder %s14, 0
    %p75 = por %p73, %p74
    %p76 = scmp.ne.s32.totalorder %s62, %s63
    %p77 = scmp.eq.s32.totalorder %s15, 1
    %p78 = por %p76, %p77
    %p80 = scmp.ne.s32.totalorder %s63, %s79
    %p81 = scmp.eq.s32.totalorder %s15, 0
    %p82 = por %p80, %p81
    %s83 = ssub.s32 %s16, %s28
    %s84 = ssub.s32 %s17, %s24
    %s85 = sor.u32 %s83, %s84
    %p86 = scmp.eq.s32.totalorder %s85, 0
    %s88 = sadd.s32 %s87, 1
    %s89 = scalar_select %p86, %s87, %s88
    %p92 = pneg %p86
    %p93 = scmp.eq.s32.totalorder %s9, 1
    %p94 = por %p92, %p93
    %p95 = scmp.ne.s32.totalorder %s87, %s90
    %p96 = scmp.eq.s32.totalorder %s9, 0
    %p97 = por %p95, %p96
    %p98 = scmp.ne.s32.totalorder %s87, %s90
    %p99 = scmp.eq.s32.totalorder %s14, 1
    %p100 = por %p98, %p99
    %p101 = scmp.ne.s32.totalorder %s90, %s91
    %p102 = scmp.eq.s32.totalorder %s14, 0
    %p103 = por %p101, %p102
    %p104 = scmp.ne.s32.totalorder %s90, %s91
    %p105 = scmp.eq.s32.totalorder %s15, 1
    %p106 = por %p104, %p105
    %p108 = scmp.ne.s32.totalorder %s91, %s107
    %p109 = scmp.eq.s32.totalorder %s15, 0
    %p110 = por %p108, %p109
    %s111 = ssub.s32 %s16, %s28
    %s112 = ssub.s32 %s17, %s24
    %s113 = sor.u32 %s111, %s112
    %p114 = scmp.eq.s32.totalorder %s113, 0
    %s116 = sadd.s32 %s115, 1
    %s117 = scalar_select %p114, %s115, %s116
    %p120 = pneg %p114
    %p121 = scmp.eq.s32.totalorder %s9, 1
    %p122 = por %p120, %p121
    %p123 = scmp.ne.s32.totalorder %s115, %s118
    %p124 = scmp.eq.s32.totalorder %s9, 0
    %p125 = por %p123, %p124
    %p126 = scmp.ne.s32.totalorder %s115, %s118
    %p127 = scmp.eq.s32.totalorder %s14, 1
    %p128 = por %p126, %p127
    %p129 = scmp.ne.s32.totalorder %s118, %s119
    %p130 = scmp.eq.s32.totalorder %s14, 0
    %p131 = por %p129, %p130
    %p132 = scmp.ne.s32.totalorder %s118, %s119
    %p133 = scmp.eq.s32.totalorder %s15, 1
    %p134 = por %p132, %p133
    %p136 = scmp.ne.s32.totalorder %s119, %s135
    %p137 = scmp.eq.s32.totalorder %s15, 0
    %p138 = por %p136, %p137
    %p139 = scmp.le.s32.totalorder 1, %s9
    %p140 = scmp.lt.s32.totalorder %s9, 3
    %p141 = pnand %p139, %p140
    %p142 = pneg %p141
    // Predicated region
    $region9: #{transformer_forward.23} parent=5 // pred_check
      _
    $region10: #{transformer_forward.23} parent=5 // pred_check_branch
      %144 = sbr.rel (%p141) target = $region12
    $region11: #{transformer_forward.23} parent=5 // pred_region
      %s145 = ssub.s32 %s9, 1
    $region12: #{transformer_forward.23} parent=5 // pred_fallthru
      _
    %p146 = scmp.lt.s32.totalorder %s9, 2
    // Predicated region
    $region13: #{transformer_forward.23} parent=5 // pred_check
      %p147 = pneg %p146
    $region14: #{transformer_forward.23} parent=5 // pred_check_branch
      %149 = sbr.rel (%p147) target = $region16
    $region15: #{transformer_forward.23} parent=5 // pred_region
      // Predicated region
      $region17: #{transformer_forward.23} parent=15 // pred_check
        %p150 = pneg %p43
      $region18: #{transformer_forward.23} parent=15 // pred_check_branch
        %152 = sbr.rel (%p150) target = $region20
      $region19: #{transformer_forward.23} parent=15 // pred_region
        %p153 = scmp.lt.s32.totalorder %s16, 1
        %s154 = scalar_select %p153, %s16, 1
        %p155 = scmp.lt.s32.totalorder %s17, 0
        %s156 = scalar_select %p155, %s17, 0
        %s157 = sadd.s32 %s156, %s154
        %s158 = smul.addr %s157, 8
        %s159 = scalar_lea.vmem %s0, %s158
      $region20: #{transformer_forward.23} parent=15 // pred_fallthru
        _
      // Predicated region
      $region21: #{transformer_forward.23} parent=15 // pred_check
        %p160 = pneg %p69
      $region22: #{transformer_forward.23} parent=15 // pred_check_branch
        %162 = sbr.rel (%p160) target = $region24
      $region23: #{transformer_forward.23} parent=15 // pred_region
        %p163 = scmp.lt.s32.totalorder %s16, 1
        %s164 = scalar_select %p163, %s16, 1
        %s165 = smul.addr %s164, 8
        %s166 = scalar_lea.vmem %s1, %s165
      $region24: #{transformer_forward.23} parent=15 // pred_fallthru
        _
      // Predicated region
      $region25: #{transformer_forward.23} parent=15 // pred_check
        %p167 = pneg %p97
      $region26: #{transformer_forward.23} parent=15 // pred_check_branch
        %169 = sbr.rel (%p167) target = $region28
      $region27: #{transformer_forward.23} parent=15 // pred_region
        %p170 = scmp.lt.s32.totalorder %s16, 1
        %s171 = scalar_select %p170, %s16, 1
        %p172 = scmp.lt.s32.totalorder %s17, 0
        %s173 = scalar_select %p172, %s17, 0
        %s174 = sadd.s32 %s173, %s171
        %s175 = smul.addr %s174, 8
        %s176 = scalar_lea.vmem %s2, %s175
      $region28: #{transformer_forward.23} parent=15 // pred_fallthru
        _
    $region16: #{transformer_forward.23} parent=5 // pred_fallthru
      _
    %p177 = scmp.le.s32.totalorder 1, %s9
    %p178 = scmp.lt.s32.totalorder %s9, 3
    %p179 = pnand %p177, %p178
    %p180 = pneg %p179
    // Predicated region
    $region29: #{transformer_forward.23} parent=5 // pred_check
      _
    $region30: #{transformer_forward.23} parent=5 // pred_check_branch
      %182 = sbr.rel (%p179) target = $region32
    $region31: #{transformer_forward.23} parent=5 // pred_region
      %s183 = ssub.s32 %s9, 1
      %p184 = scmp.lt.s32.totalorder %s18, 1
      %s185 = scalar_select %p184, %s18, 1
      %p186 = scmp.lt.s32.totalorder %s19, 0
      %s187 = scalar_select %p186, %s19, 0
      %s188 = sadd.s32 %s187, %s185
      %s189 = smul.addr %s188, 8
      %s190 = scalar_lea.vmem %s0, %s189
      %p191 = pneg %p49
      %p192 = pneg %p46
      %p193 = scmp.lt.s32.totalorder %s18, 1
      %s194 = scalar_select %p193, %s18, 1
      %s195 = smul.addr %s194, 8
      %s196 = scalar_lea.vmem %s1, %s195
      %p197 = pneg %p75
      %p198 = pneg %p72
      %p199 = scmp.lt.s32.totalorder %s18, 1
      %s200 = scalar_select %p199, %s18, 1
      %p201 = scmp.lt.s32.totalorder %s19, 0
      %s202 = scalar_select %p201, %s19, 0
      %s203 = sadd.s32 %s202, %s200
      %s204 = smul.addr %s203, 8
      %s205 = scalar_lea.vmem %s2, %s204
      %p206 = pneg %p103
      %p207 = pneg %p100
      %p208 = pneg %p131
      %p209 = pneg %p128
      %p210 = scmp.lt.s32.totalorder %s18, 1
      %s211 = scalar_select %p210, %s18, 1
      %p212 = scmp.lt.s32.totalorder %s19, 0
      %s213 = scalar_select %p212, %s19, 0
      %s214 = sadd.s32 %s213, %s211
      %s215 = smul.addr %s214, 8
      %s216 = scalar_lea.vmem %s3, %s215
      %p217 = scmp.lt.s32.totalorder %s18, 1
      %s218 = scalar_select %p217, %s18, 1
      %p219 = scmp.lt.s32.totalorder %s19, 0
      %s220 = scalar_select %p219, %s19, 0
      %s221 = sadd.s32 %s220, %s218
      %s222 = smul.addr %s221, 8
      %s223 = scalar_lea.vmem %s0, %s222
      %p224 = scmp.lt.s32.totalorder %s18, 1
      %s225 = scalar_select %p224, %s18, 1
      %s226 = smul.addr %s225, 8
      %s227 = scalar_lea.vmem %s1, %s226
      %p228 = scmp.lt.s32.totalorder %s18, 1
      %s229 = scalar_select %p228, %s18, 1
      %p230 = scmp.lt.s32.totalorder %s19, 0
      %s231 = scalar_select %p230, %s19, 0
      %s232 = sadd.s32 %s231, %s229
      %s233 = smul.addr %s232, 8
      %s234 = scalar_lea.vmem %s2, %s233
      %p235 = scmp.lt.s32.totalorder %s18, 1
      %s236 = scalar_select %p235, %s18, 1
      %p237 = scmp.lt.s32.totalorder %s19, 0
      %s238 = scalar_select %p237, %s19, 0
      %s239 = sadd.s32 %s238, %s236
      %s240 = smul.addr %s239, 8
      %s241 = scalar_lea.vmem %s3, %s240
      %s243 = smul.u32 %s19, 8
      %v244 = vld [vmem:[%s223] sm:$0xff]
      %v245 = vld [vmem:[%s227] sm:$0xff]
      %v246 = vld [vmem:[%s234] sm:$0xff]
      %v247 = vlaneseq
      %v248 = vshrl.u32 %v247, 7
      %v249 = vstv %s243
      %v250 = vadd.s32 %v249, %v248
      %v251 = vlaneseq
      %v252 = vand.u32 %v251, 127
      %vm253 = vcmp.lt.s32.totalorder %v252, %v250
      %v254 = vsub.s32 %v250, %v252
      %vm255 = vcmp.lt.s32.totalorder %v254, 0
      %v256 = vsub.s32 0, %v254
      %v257 = vsel %vm255, %v256, %v254
      %v258 = vcvt.s32.f32 %v257
      %v259 = vmul.f32 %v244, 0.35355338
      %v260 = vpack.c.bf16 %v259, %v259
      %v261 = vpack.c.bf16 %v245, %v245
      %v262 = vadd.f32 %v246, 2.0
      %264 = vrot.lane.b32.xlu0 %v261, 112
      %v265 = vpop.permute.xlu0 %264
      %vm266 = vcmask 64512
      %v268 = vsel %vm266, %v260, 0
      %v271 = vsel %vm266, %v265, 0
      %273 = vmatprep.subr.bf16.mxu0 0
      %274 = vmatpush1.bf16.xpose.msra.mxu0 %v271
      %275 = vmatprep.subr.bf16.mxu0 0
      %276 = vmatpush1.bf16.xpose.msra.mxu0 0
      %277 = vmatprep.subr.bf16.mxu0 0
      %278 = vmatpush1.bf16.xpose.msra.mxu0 0
      %279 = vmatprep.subr.bf16.mxu0 0
      %280 = vmatpush1.bf16.xpose.msra.mxu0 0
      %281 = vmatprep.subr.bf16.mxu0 0
      %282 = vmatpush1.bf16.xpose.msra.mxu0 0
      %283 = vmatprep.subr.bf16.mxu0 0
      %284 = vmatpush1.bf16.xpose.msra.mxu0 0
      %285 = vmatprep.subr.bf16.mxu0 0
      %286 = vmatpush1.bf16.xpose.msra.mxu0 0
      %287 = vmatprep.subr.bf16.mxu0 0
      %288 = vmatpush1.bf16.xpose.msra.mxu0 0
      %289 = vmatprep.subr.bf16.mxu0 0
      %290 = vmatpush1.bf16.xpose.msra.mxu0 0
      %291 = vmatprep.subr.bf16.mxu0 0
      %292 = vmatpush1.bf16.xpose.msra.mxu0 0
      %293 = vmatprep.subr.bf16.mxu0 0
      %294 = vmatpush1.bf16.xpose.msra.mxu0 0
      %295 = vmatprep.subr.bf16.mxu0 0
      %296 = vmatpush1.bf16.xpose.msra.mxu0 0
      %297 = vmatprep.subr.bf16.mxu0 0
      %298 = vmatpush1.bf16.xpose.msra.mxu0 0
      %299 = vmatprep.subr.bf16.mxu0 0
      %300 = vmatpush1.bf16.xpose.msra.mxu0 0
      %301 = vmatprep.subr.bf16.mxu0 0
      %302 = vmatpush1.bf16.xpose.msra.mxu0 0
      %303 = vmatprep.subr.bf16.mxu0 0
      %304 = vmatpush1.bf16.xpose.msra.mxu0 0
      %305 = vmatprep.mubr.bf16.mxu0 0
      %306 = vmatmul.mubr.bf16.gmra.mrb[0].mxu0 %v268
      %v307 = vpop.f32.mrb[0].mxu0
      %v308 = vadd.f32 0.0, %v307
      %v309 = vpop.f32.mrb[0].mxu0
      %v310 = vpop.f32.mrb[0].mxu0
      %v311 = vpop.f32.mrb[0].mxu0
      %312 = vdwg.mxu0
      %314 = vset.pattern.permute.xlu0 0
      %315 = vperm.xlu0 %314, %v262
      %v316 = vpop.permute.xlu0 %315
      %vm318 = vcmp.gt.f32.partialorder %v258, %v316
      %vm319 = vmor %vm253, %vm318
      %v320 = vsel %vm319, -1e+18, %v308
      %v321 = vadd.f32 %v320, %v308
      %v322 = vsel %vm266, %v321, -inf
      %323 = vmax.xlane.f32.xlu0 %v322
      %v324 = vpop.xlane.xlu0 %323
      %v325 = vsub.f32 %v321, %v324
      %v326 = vmul.f32 %v325, 1.442695
      %v327 = vpow.pop %v326
      %v328 = vsel %vm266, %v327, 0.0
      %329 = vadd.xlane.f32.xlu0 %v328
      %v330 = vpop.xlane.xlu0 %329
      %v331 = vrcp.pop %v330
      %v332 = vmul.f32 %v327, %v331
      %v333 = vpack.c.bf16 %v332, %v332
      %334 = vrot.lane.b32.xlu0 %v261, 96
      %v335 = vpop.permute.xlu0 %334
      %v337 = vsel %vm266, %v333, 0
      %vm339 = vcmask 1043456
      %v341 = vsel %vm339, %v335, 0
      %343 = vmatprep.subr.bf16.mxu0 0
      %344 = vmatpush1.bf16.msra.mxu0 %v341
      %345 = vmatprep.subr.bf16.mxu0 0
      %346 = vmatpush1.bf16.msra.mxu0 0
      %347 = vmatprep.subr.bf16.mxu0 0
      %348 = vmatpush1.bf16.msra.mxu0 0
      %349 = vmatprep.subr.bf16.mxu0 0
      %350 = vmatpush1.bf16.msra.mxu0 0
      %351 = vmatprep.subr.bf16.mxu0 0
      %352 = vmatpush1.bf16.msra.mxu0 0
      %353 = vmatprep.subr.bf16.mxu0 0
      %354 = vmatpush1.bf16.msra.mxu0 0
      %355 = vmatprep.subr.bf16.mxu0 0
      %356 = vmatpush1.bf16.msra.mxu0 0
      %357 = vmatprep.subr.bf16.mxu0 0
      %358 = vmatpush1.bf16.msra.mxu0 0
      %359 = vmatprep.subr.bf16.mxu0 0
      %360 = vmatpush1.bf16.msra.mxu0 0
      %361 = vmatprep.subr.bf16.mxu0 0
      %362 = vmatpush1.bf16.msra.mxu0 0
      %363 = vmatprep.subr.bf16.mxu0 0
      %364 = vmatpush1.bf16.msra.mxu0 0
      %365 = vmatprep.subr.bf16.mxu0 0
      %366 = vmatpush1.bf16.msra.mxu0 0
      %367 = vmatprep.subr.bf16.mxu0 0
      %368 = vmatpush1.bf16.msra.mxu0 0
      %369 = vmatprep.subr.bf16.mxu0 0
      %370 = vmatpush1.bf16.msra.mxu0 0
      %371 = vmatprep.subr.bf16.mxu0 0
      %372 = vmatpush1.bf16.msra.mxu0 0
      %373 = vmatprep.subr.bf16.mxu0 0
      %374 = vmatpush1.bf16.msra.mxu0 0
      %375 = vmatprep.mubr.bf16.mxu0 0
      %376 = vmatmul.mubr.bf16.gmra.mrb[0].mxu0 %v337
      %v377 = vpop.f32.mrb[0].mxu0
      %v378 = vadd.f32 0.0, %v377
      %v379 = vpop.f32.mrb[0].mxu0
      %v380 = vpop.f32.mrb[0].mxu0
      %v381 = vpop.f32.mrb[0].mxu0
      %382 = vdwg.mxu0
      %v383 = vadd.f32 %v246, 4.0
      %385 = vrot.lane.b32.xlu0 %v260, 120
      %v386 = vpop.permute.xlu0 %385
      %387 = vrot.lane.b32.xlu0 %v261, 104
      %v388 = vpop.permute.xlu0 %387
      %v390 = vsel %vm266, %v386, 0
      %v393 = vsel %vm266, %v388, 0
      %395 = vmatprep.subr.bf16.mxu0 0
      %396 = vmatpush1.bf16.xpose.msra.mxu0 %v393
      %397 = vmatprep.subr.bf16.mxu0 0
      %398 = vmatpush1.bf16.xpose.msra.mxu0 0
      %399 = vmatprep.subr.bf16.mxu0 0
      %400 = vmatpush1.bf16.xpose.msra.mxu0 0
      %401 = vmatprep.subr.bf16.mxu0 0
      %402 = vmatpush1.bf16.xpose.msra.mxu0 0
      %403 = vmatprep.subr.bf16.mxu0 0
      %404 = vmatpush1.bf16.xpose.msra.mxu0 0
      %405 = vmatprep.subr.bf16.mxu0 0
      %406 = vmatpush1.bf16.xpose.msra.mxu0 0
      %407 = vmatprep.subr.bf16.mxu0 0
      %408 = vmatpush1.bf16.xpose.msra.mxu0 0
      %409 = vmatprep.subr.bf16.mxu0 0
      %410 = vmatpush1.bf16.xpose.msra.mxu0 0
      %411 = vmatprep.subr.bf16.mxu0 0
      %412 = vmatpush1.bf16.xpose.msra.mxu0 0
      %413 = vmatprep.subr.bf16.mxu0 0
      %414 = vmatpush1.bf16.xpose.msra.mxu0 0
      %415 = vmatprep.subr.bf16.mxu0 0
      %416 = vmatpush1.bf16.xpose.msra.mxu0 0
      %417 = vmatprep.subr.bf16.mxu0 0
      %418 = vmatpush1.bf16.xpose.msra.mxu0 0
      %419 = vmatprep.subr.bf16.mxu0 0
      %420 = vmatpush1.bf16.xpose.msra.mxu0 0
      %421 = vmatprep.subr.bf16.mxu0 0
      %422 = vmatpush1.bf16.xpose.msra.mxu0 0
      %423 = vmatprep.subr.bf16.mxu0 0
      %424 = vmatpush1.bf16.xpose.msra.mxu0 0
      %425 = vmatprep.subr.bf16.mxu0 0
      %426 = vmatpush1.bf16.xpose.msra.mxu0 0
      %427 = vmatprep.mubr.bf16.mxu0 0
      %428 = vmatmul.mubr.bf16.gmra.mrb[0].mxu0 %v390
      %v429 = vpop.f32.mrb[0].mxu0
      %v430 = vadd.f32 0.0, %v429
      %v431 = vpop.f32.mrb[0].mxu0
      %v432 = vpop.f32.mrb[0].mxu0
      %v433 = vpop.f32.mrb[0].mxu0
      %434 = vdwg.mxu0
      %436 = vset.pattern.permute.xlu0 0
      %437 = vperm.xlu0 %436, %v383
      %v438 = vpop.permute.xlu0 %437
      %vm440 = vcmp.gt.f32.partialorder %v258, %v438
      %vm441 = vmor %vm253, %vm440
      %v442 = vsel %vm441, -1e+18, %v430
      %v443 = vadd.f32 %v442, %v430
      %v444 = vsel %vm266, %v443, -inf
      %445 = vmax.xlane.f32.xlu0 %v444
      %v446 = vpop.xlane.xlu0 %445
      %v447 = vsub.f32 %v443, %v446
      %v448 = vmul.f32 %v447, 1.442695
      %v449 = vpow.pop %v448
      %v450 = vsel %vm266, %v449, 0.0
      %451 = vadd.xlane.f32.xlu0 %v450
      %v452 = vpop.xlane.xlu0 %451
      %v453 = vrcp.pop %v452
      %v454 = vmul.f32 %v449, %v453
      %v455 = vpack.c.bf16 %v454, %v454
      %456 = vrot.lane.b32.xlu0 %v261, 88
      %v457 = vpop.permute.xlu0 %456
      %v459 = vsel %vm266, %v455, 0
      %v462 = vsel %vm339, %v457, 0
      %464 = vmatprep.subr.bf16.mxu0 0
      %465 = vmatpush1.bf16.msra.mxu0 %v462
      %466 = vmatprep.subr.bf16.mxu0 0
      %467 = vmatpush1.bf16.msra.mxu0 0
      %468 = vmatprep.subr.bf16.mxu0 0
      %469 = vmatpush1.bf16.msra.mxu0 0
      %470 = vmatprep.subr.bf16.mxu0 0
      %471 = vmatpush1.bf16.msra.mxu0 0
      %472 = vmatprep.subr.bf16.mxu0 0
      %473 = vmatpush1.bf16.msra.mxu0 0
      %474 = vmatprep.subr.bf16.mxu0 0
      %475 = vmatpush1.bf16.msra.mxu0 0
      %476 = vmatprep.subr.bf16.mxu0 0
      %477 = vmatpush1.bf16.msra.mxu0 0
      %478 = vmatprep.subr.bf16.mxu0 0
      %479 = vmatpush1.bf16.msra.mxu0 0
      %480 = vmatprep.subr.bf16.mxu0 0
      %481 = vmatpush1.bf16.msra.mxu0 0
      %482 = vmatprep.subr.bf16.mxu0 0
      %483 = vmatpush1.bf16.msra.mxu0 0
      %484 = vmatprep.subr.bf16.mxu0 0
      %485 = vmatpush1.bf16.msra.mxu0 0
      %486 = vmatprep.subr.bf16.mxu0 0
      %487 = vmatpush1.bf16.msra.mxu0 0
      %488 = vmatprep.subr.bf16.mxu0 0
      %489 = vmatpush1.bf16.msra.mxu0 0
      %490 = vmatprep.subr.bf16.mxu0 0
      %491 = vmatpush1.bf16.msra.mxu0 0
      %492 = vmatprep.subr.bf16.mxu0 0
      %493 = vmatpush1.bf16.msra.mxu0 0
      %494 = vmatprep.subr.bf16.mxu0 0
      %495 = vmatpush1.bf16.msra.mxu0 0
      %496 = vmatprep.mubr.bf16.mxu0 0
      %497 = vmatmul.mubr.bf16.gmra.mrb[0].mxu0 %v459
      %v498 = vpop.f32.mrb[0].mxu0
      %v499 = vadd.f32 0.0, %v498
      %v500 = vpop.f32.mrb[0].mxu0
      %v501 = vpop.f32.mrb[0].mxu0
      %v502 = vpop.f32.mrb[0].mxu0
      %503 = vdwg.mxu0
      %505 = vrot.lane.b32.xlu0 %v499, 8
      %v506 = vpop.permute.xlu0 %505
      %v508 = vsel %vm266, %v378, %v506
      %vm509 = vcmask 130048
      %510 = vst.msk [vmem:[%s241] sm:$0xff] %vm509, %v508
      %p511 = scmp.lt.s32.totalorder %s18, 1
      %s512 = scalar_select %p511, %s18, 1
      %p513 = scmp.lt.s32.totalorder %s19, 0
      %s514 = scalar_select %p513, %s19, 0
      %s515 = sadd.s32 %s514, %s512
      %s516 = smul.addr %s515, 8
      %s517 = scalar_lea.vmem %s3, %s516
      // Predicated region
      $region33: #{transformer_forward.23} parent=31 // pred_check
        %p518 = pneg %p128
      $region34: #{transformer_forward.23} parent=31 // pred_check_branch
        %520 = sbr.rel (%p518) target = $region36
      $region35: #{transformer_forward.23} parent=31 // pred_region
        _
      $region36: #{transformer_forward.23} parent=31 // pred_fallthru
        _
    $region32: #{transformer_forward.23} parent=5 // pred_fallthru
      _
    %p521 = scmp.le.s32.totalorder 2, %s9
    // Predicated region
    $region37: #{transformer_forward.23} parent=5 // pred_check
      %p522 = pneg %p521
    $region38: #{transformer_forward.23} parent=5 // pred_check_branch
      %524 = sbr.rel (%p522) target = $region40
    $region39: #{transformer_forward.23} parent=5 // pred_region
      %s525 = ssub.s32 %s9, 2
      // Predicated region
      $region41: #{transformer_forward.23} parent=39 // pred_check
        %p526 = pneg %p134
      $region42: #{transformer_forward.23} parent=39 // pred_check_branch
        %528 = sbr.rel (%p526) target = $region44
      $region43: #{transformer_forward.23} parent=39 // pred_region
        %p529 = scmp.lt.s32.totalorder %s20, 1
        %s530 = scalar_select %p529, %s20, 1
        %p531 = scmp.lt.s32.totalorder %s21, 0
        %s532 = scalar_select %p531, %s21, 0
        %s533 = sadd.s32 %s532, %s530
        %s534 = smul.addr %s533, 8
        %s535 = scalar_lea.vmem %s3, %s534
      $region44: #{transformer_forward.23} parent=39 // pred_fallthru
        _
    $region40: #{transformer_forward.23} parent=5 // pred_fallthru
      _
  $region6: #{transformer_forward.23} parent=0 // loop_footer
    %s13 = sadd.s32 1, %s9
  $region7: #{transformer_forward.23} parent=0 // loop_footer_branch
    %8 = sbr.rel target = $region3
  $region8: #{transformer_forward.23} parent=0 // loop_exit
    _

// kernel: transformer_forward.26
$region0: #{transformer_forward.26}
  #allocation0 [shape = 'u32[]', space=smem, size = 0x4, offset = 0x4, fixed_abs, tag = 'smem constant byte address 0x4 - core index']
  #allocation1 [shape = 'u32[144,128]{1,0:T(1,128)}', space=vmem, size = 0x12000, scoped, tag = 'internal scratch']
  %s0 = inlined_call_operand.vmem [shape: f32[16,32], index: 0, kind: input, shape index: {}]
  %s1 = inlined_call_operand.vmem [shape: bf16[32,32], index: 1, kind: input, shape index: {}]
  %s2 = inlined_call_operand.vmem [shape: f32[1,32], index: 2, kind: input, shape index: {}]
  %s3 = inlined_call_operand.vmem [shape: f32[16,32], index: 3, kind: output, shape index: {}]
  %s4 = sld [smem:[#allocation0]]
  $region53: #{transformer_forward.26} parent=0
    _
  %s6 = ssub.s32 1, %s4
  %s7 = scalar_select 0, %s6, %s4
  loop: start=0, step=1, limit=4
  $region2: #{transformer_forward.26} parent=0 // loop_pre_header
    _
  $region3: #{transformer_forward.26} parent=0 // loop_header
    %s9 = sphi 0, %s13
    %p10 = scmp.ge.s32.totalorder %s9, 4
    %s16 = sphi 0, %s35
    %s17 = sphi 0, %s31
    %s18 = sphi 0, %s27
    %s19 = sphi 0, %s16
    %s20 = sphi 0, %s17
    %s21 = sphi 0, %s18
    %s22 = sphi 0, %s19
    %s23 = sphi 0, %s20
    %s24 = sphi 0, %s21
    %s40 = sphi 0, %s42
    %s43 = sphi 0, %s40
    %s44 = sphi 0, %s43
    %s60 = sphi 0, %s44
    %s68 = sphi 0, %s70
    %s71 = sphi 0, %s68
    %s72 = sphi 0, %s71
    %s88 = sphi 0, %s72
    %s94 = sphi 0, %s96
    %s97 = sphi 0, %s94
    %s98 = sphi 0, %s97
    %s114 = sphi 0, %s98
    %s122 = sphi 0, %s124
    %s125 = sphi 0, %s122
    %s126 = sphi 0, %s125
    %s142 = sphi 0, %s126
  $region4: #{transformer_forward.26} parent=0 // loop_header_branch
    %12 = sbr.rel (%p10) target = $region8
  $region5: #{transformer_forward.26} parent=0 // loop_body
    %s14 = ssub.s32 %s9, 1
    %s15 = ssub.s32 %s9, 2
    %s25 = sadd.s32 1, %s18
    %p26 = scmp.ge.s32.totalorder %s25, 1
    %s27 = scalar_select %p26, 0, %s25
    %s28 = sadd.s32 1, %s17
    %s29 = scalar_select %p26, %s28, %s17
    %p30 = scmp.ge.s32.totalorder %s29, 1
    %s31 = scalar_select %p30, 0, %s29
    %s32 = sadd.s32 1, %s16
    %s33 = scalar_select %p30, %s32, %s16
    %p34 = scmp.ge.s32.totalorder %s33, 2
    %s35 = scalar_select %p34, 0, %s33
    %s36 = ssub.s32 %s16, %s35
    %s37 = ssub.s32 %s18, %s27
    %s38 = sor.u32 %s36, %s37
    %p39 = scmp.eq.s32.totalorder %s38, 0
    %s41 = sadd.s32 %s40, 1
    %s42 = scalar_select %p39, %s40, %s41
    %p45 = pneg %p39
    %p46 = scmp.eq.s32.totalorder %s9, 1
    %p47 = por %p45, %p46
    %p48 = scmp.ne.s32.totalorder %s40, %s43
    %p49 = scmp.eq.s32.totalorder %s9, 0
    %p50 = por %p48, %p49
    %p51 = scmp.ne.s32.totalorder %s40, %s43
    %p52 = scmp.eq.s32.totalorder %s14, 1
    %p53 = por %p51, %p52
    %p54 = scmp.ne.s32.totalorder %s43, %s44
    %p55 = scmp.eq.s32.totalorder %s14, 0
    %p56 = por %p54, %p55
    %p57 = scmp.ne.s32.totalorder %s43, %s44
    %p58 = scmp.eq.s32.totalorder %s15, 1
    %p59 = por %p57, %p58
    %p61 = scmp.ne.s32.totalorder %s44, %s60
    %p62 = scmp.eq.s32.totalorder %s15, 0
    %p63 = por %p61, %p62
    %s64 = ssub.s32 %s18, %s27
    %s65 = ssub.s32 %s17, %s31
    %s66 = sor.u32 %s64, %s65
    %p67 = scmp.eq.s32.totalorder %s66, 0
    %s69 = sadd.s32 %s68, 1
    %s70 = scalar_select %p67, %s68, %s69
    %p73 = pneg %p67
    %p74 = scmp.eq.s32.totalorder %s9, 1
    %p75 = por %p73, %p74
    %p76 = scmp.ne.s32.totalorder %s68, %s71
    %p77 = scmp.eq.s32.totalorder %s9, 0
    %p78 = por %p76, %p77
    %p79 = scmp.ne.s32.totalorder %s68, %s71
    %p80 = scmp.eq.s32.totalorder %s14, 1
    %p81 = por %p79, %p80
    %p82 = scmp.ne.s32.totalorder %s71, %s72
    %p83 = scmp.eq.s32.totalorder %s14, 0
    %p84 = por %p82, %p83
    %p85 = scmp.ne.s32.totalorder %s71, %s72
    %p86 = scmp.eq.s32.totalorder %s15, 1
    %p87 = por %p85, %p86
    %p89 = scmp.ne.s32.totalorder %s72, %s88
    %p90 = scmp.eq.s32.totalorder %s15, 0
    %p91 = por %p89, %p90
    %s92 = ssub.s32 %s17, %s31
    %p93 = scmp.eq.s32.totalorder %s92, 0
    %s95 = sadd.s32 %s94, 1
    %s96 = scalar_select %p93, %s94, %s95
    %p99 = pneg %p93
    %p100 = scmp.eq.s32.totalorder %s9, 1
    %p101 = por %p99, %p100
    %p102 = scmp.ne.s32.totalorder %s94, %s97
    %p103 = scmp.eq.s32.totalorder %s9, 0
    %p104 = por %p102, %p103
    %p105 = scmp.ne.s32.totalorder %s94, %s97
    %p106 = scmp.eq.s32.totalorder %s14, 1
    %p107 = por %p105, %p106
    %p108 = scmp.ne.s32.totalorder %s97, %s98
    %p109 = scmp.eq.s32.totalorder %s14, 0
    %p110 = por %p108, %p109
    %p111 = scmp.ne.s32.totalorder %s97, %s98
    %p112 = scmp.eq.s32.totalorder %s15, 1
    %p113 = por %p111, %p112
    %p115 = scmp.ne.s32.totalorder %s98, %s114
    %p116 = scmp.eq.s32.totalorder %s15, 0
    %p117 = por %p115, %p116
    %s118 = ssub.s32 %s16, %s35
    %s119 = ssub.s32 %s17, %s31
    %s120 = sor.u32 %s118, %s119
    %p121 = scmp.eq.s32.totalorder %s120, 0
    %s123 = sadd.s32 %s122, 1
    %s124 = scalar_select %p121, %s122, %s123
    %p127 = pneg %p121
    %p128 = scmp.eq.s32.totalorder %s9, 1
    %p129 = por %p127, %p128
    %p130 = scmp.ne.s32.totalorder %s122, %s125
    %p131 = scmp.eq.s32.totalorder %s9, 0
    %p132 = por %p130, %p131
    %p133 = scmp.ne.s32.totalorder %s122, %s125
    %p134 = scmp.eq.s32.totalorder %s14, 1
    %p135 = por %p133, %p134
    %p136 = scmp.ne.s32.totalorder %s125, %s126
    %p137 = scmp.eq.s32.totalorder %s14, 0
    %p138 = por %p136, %p137
    %p139 = scmp.ne.s32.totalorder %s125, %s126
    %p140 = scmp.eq.s32.totalorder %s15, 1
    %p141 = por %p139, %p140
    %p143 = scmp.ne.s32.totalorder %s126, %s142
    %p144 = scmp.eq.s32.totalorder %s15, 0
    %p145 = por %p143, %p144
    %p146 = scmp.le.s32.totalorder 1, %s9
    %p147 = scmp.lt.s32.totalorder %s9, 3
    %p148 = pnand %p146, %p147
    %p149 = pneg %p148
    // Predicated region
    $region9: #{transformer_forward.26} parent=5 // pred_check
      _
    $region10: #{transformer_forward.26} parent=5 // pred_check_branch
      %151 = sbr.rel (%p148) target = $region12
    $region11: #{transformer_forward.26} parent=5 // pred_region
      %s152 = ssub.s32 %s9, 1
      // Predicated region
      $region13: #{transformer_forward.26} parent=11 // pred_check
        %p153 = pneg %p84
      $region14: #{transformer_forward.26} parent=11 // pred_check_branch
        %155 = sbr.rel (%p153) target = $region16
      $region15: #{transformer_forward.26} parent=11 // pred_region
        %s156 = smul.u32 4, %s21
        %p157 = scmp.lt.s32.totalorder %s156, 3
        %s158 = scalar_select %p157, %s156, 3
        %p159 = scmp.lt.s32.totalorder %s20, 0
        %s160 = scalar_select %p159, %s20, 0
        %s161 = sadd.s32 %s160, %s158
        %s162 = smul.addr %s161, 4
        %s163 = scalar_lea.vmem %s1, %s162
        %s164 = smul.u32 4, %s21
      $region16: #{transformer_forward.26} parent=11 // pred_fallthru
        _
      // Predicated region
      $region17: #{transformer_forward.26} parent=11 // pred_check
        %p165 = pneg %p110
      $region18: #{transformer_forward.26} parent=11 // pred_check_branch
        %167 = sbr.rel (%p165) target = $region20
      $region19: #{transformer_forward.26} parent=11 // pred_region
        %p168 = scmp.lt.s32.totalorder %s20, 0
        %s169 = scalar_select %p168, %s20, 0
        %s170 = scalar_lea.vmem %s2, %s169
      $region20: #{transformer_forward.26} parent=11 // pred_fallthru
        _
    $region12: #{transformer_forward.26} parent=5 // pred_fallthru
      _
    %p171 = scmp.lt.s32.totalorder %s9, 2
    // Predicated region
    $region21: #{transformer_forward.26} parent=5 // pred_check
      %p172 = pneg %p171
    $region22: #{transformer_forward.26} parent=5 // pred_check_branch
      %174 = sbr.rel (%p172) target = $region24
    $region23: #{transformer_forward.26} parent=5 // pred_region
      // Predicated region
      $region25: #{transformer_forward.26} parent=23 // pred_check
        %p175 = pneg %p50
      $region26: #{transformer_forward.26} parent=23 // pred_check_branch
        %177 = sbr.rel (%p175) target = $region28
      $region27: #{transformer_forward.26} parent=23 // pred_region
        %p178 = scmp.lt.s32.totalorder %s16, 1
        %s179 = scalar_select %p178, %s16, 1
        %p180 = scmp.lt.s32.totalorder %s18, 0
        %s181 = scalar_select %p180, %s18, 0
        %s182 = sadd.s32 %s181, %s179
        %s183 = smul.addr %s182, 8
        %s184 = scalar_lea.vmem %s0, %s183
      $region28: #{transformer_forward.26} parent=23 // pred_fallthru
        _
    $region24: #{transformer_forward.26} parent=5 // pred_fallthru
      _
    %p185 = scmp.le.s32.totalorder 1, %s9
    %p186 = scmp.lt.s32.totalorder %s9, 3
    %p187 = pnand %p185, %p186
    %p188 = pneg %p187
    // Predicated region
    $region29: #{transformer_forward.26} parent=5 // pred_check
      _
    $region30: #{transformer_forward.26} parent=5 // pred_check_branch
      %190 = sbr.rel (%p187) target = $region32
    $region31: #{transformer_forward.26} parent=5 // pred_region
      %s191 = ssub.s32 %s9, 1
      %p192 = scmp.lt.s32.totalorder %s19, 1
      %s193 = scalar_select %p192, %s19, 1
      %p194 = scmp.lt.s32.totalorder %s21, 0
      %s195 = scalar_select %p194, %s21, 0
      %s196 = sadd.s32 %s195, %s193
      %s197 = smul.addr %s196, 8
      %s198 = scalar_lea.vmem %s0, %s197
      %p199 = pneg %p56
      %p200 = pneg %p53
      %s201 = smul.u32 4, %s21
      %p202 = scmp.lt.s32.totalorder %s201, 3
      %s203 = scalar_select %p202, %s201, 3
      %p204 = scmp.lt.s32.totalorder %s20, 0
      %s205 = scalar_select %p204, %s20, 0
      %s206 = sadd.s32 %s205, %s203
      %s207 = smul.addr %s206, 4
      %s208 = scalar_lea.vmem %s1, %s207
      %p209 = pneg %p84
      %p210 = pneg %p81
      %p211 = scmp.lt.s32.totalorder %s20, 0
      %s212 = scalar_select %p211, %s20, 0
      %s213 = scalar_lea.vmem %s2, %s212
      %p214 = pneg %p110
      %p215 = pneg %p107
      %p216 = pneg %p138
      %p217 = pneg %p135
      %p218 = scmp.lt.s32.totalorder %s19, 1
      %s219 = scalar_select %p218, %s19, 1
      %p220 = scmp.lt.s32.totalorder %s20, 0
      %s221 = scalar_select %p220, %s20, 0
      %s222 = sadd.s32 %s221, %s219
      %s223 = smul.addr %s222, 8
      %s224 = scalar_lea.vmem %s3, %s223
      %p225 = scmp.lt.s32.totalorder %s19, 1
      %s226 = scalar_select %p225, %s19, 1
      %p227 = scmp.lt.s32.totalorder %s21, 0
      %s228 = scalar_select %p227, %s21, 0
      %s229 = sadd.s32 %s228, %s226
      %s230 = smul.addr %s229, 8
      %s231 = scalar_lea.vmem %s0, %s230
      %s232 = smul.u32 4, %s21
      %p233 = scmp.lt.s32.totalorder %s232, 3
      %s234 = scalar_select %p233, %s232, 3
      %p235 = scmp.lt.s32.totalorder %s20, 0
      %s236 = scalar_select %p235, %s20, 0
      %s237 = sadd.s32 %s236, %s234
      %s238 = smul.addr %s237, 4
      %s239 = scalar_lea.vmem %s1, %s238
      %s240 = smul.u32 4, %s21
      %p241 = scmp.lt.s32.totalorder %s20, 0
      %s242 = scalar_select %p241, %s20, 0
      %s243 = scalar_lea.vmem %s2, %s242
      %p244 = scmp.lt.s32.totalorder %s19, 1
      %s245 = scalar_select %p244, %s19, 1
      %p246 = scmp.lt.s32.totalorder %s20, 0
      %s247 = scalar_select %p246, %s20, 0
      %s248 = sadd.s32 %s247, %s245
      %s249 = smul.addr %s248, 8
      %s250 = scalar_lea.vmem %s3, %s249
      %v252 = vld [vmem:[%s231] sm:$0xff]
      %v253 = vpack.c.bf16 %v252, %v252
      %v254 = vld [vmem:[%s239] sm:$0xf]
      %v255 = vld [vmem:[%s239 + $0x4] sm:$0xf]
      %v256 = vld [vmem:[%s239 + $0x8] sm:$0xf]
      %v257 = vld [vmem:[%s239 + $0xc] sm:$0xf]
      %v262 = vunpack.c.l.b16 %v254
      %v263 = vunpack.c.l.b16 %v255
      %v264 = vunpack.c.l.b16 %v256
      %v265 = vunpack.c.l.b16 %v257
      %v266 = vpack.c.b16 %v263, %v262
      %v267 = vpack.c.b16 %v265, %v264
      %vm270 = vcmask 261120
      %v272 = vsel %vm270, %v253, 0
      %274 = vmatprep.subr.bf16.mxu0 0
      %275 = vmatpush1.bf16.msra.mxu0 %v266
      %276 = vmatprep.subr.bf16.mxu0 0
      %277 = vmatpush1.bf16.msra.mxu0 %v267
      %278 = vmatprep.subr.bf16.mxu0 0
      %279 = vmatpush1.bf16.msra.mxu0 0
      %280 = vmatprep.subr.bf16.mxu0 0
      %281 = vmatpush1.bf16.msra.mxu0 0
      %282 = vmatprep.subr.bf16.mxu0 0
      %283 = vmatpush1.bf16.msra.mxu0 0
      %284 = vmatprep.subr.bf16.mxu0 0
      %285 = vmatpush1.bf16.msra.mxu0 0
      %286 = vmatprep.subr.bf16.mxu0 0
      %287 = vmatpush1.bf16.msra.mxu0 0
      %288 = vmatprep.subr.bf16.mxu0 0
      %289 = vmatpush1.bf16.msra.mxu0 0
      %290 = vmatprep.subr.bf16.mxu0 0
      %291 = vmatpush1.bf16.msra.mxu0 0
      %292 = vmatprep.subr.bf16.mxu0 0
      %293 = vmatpush1.bf16.msra.mxu0 0
      %294 = vmatprep.subr.bf16.mxu0 0
      %295 = vmatpush1.bf16.msra.mxu0 0
      %296 = vmatprep.subr.bf16.mxu0 0
      %297 = vmatpush1.bf16.msra.mxu0 0
      %298 = vmatprep.subr.bf16.mxu0 0
      %299 = vmatpush1.bf16.msra.mxu0 0
      %300 = vmatprep.subr.bf16.mxu0 0
      %301 = vmatpush1.bf16.msra.mxu0 0
      %302 = vmatprep.subr.bf16.mxu0 0
      %303 = vmatpush1.bf16.msra.mxu0 0
      %304 = vmatprep.subr.bf16.mxu0 0
      %305 = vmatpush1.bf16.msra.mxu0 0
      %306 = vmatprep.mubr.bf16.mxu0 0
      %307 = vmatmul.mubr.bf16.gmra.mrb[0].mxu0 %v272
      %v308 = vpop.f32.mrb[0].mxu0
      %v309 = vadd.f32 0.0, %v308
      %v310 = vpop.f32.mrb[0].mxu0
      %v311 = vpop.f32.mrb[0].mxu0
      %v312 = vpop.f32.mrb[0].mxu0
      %313 = vdwg.mxu0
      %p314 = scmp.eq.s32.totalorder %s21, 0
      // Predicated region
      $region33: #{transformer_forward.26} parent=31 // pred_check
        %p315 = pneg %p314
      $region34: #{transformer_forward.26} parent=31 // pred_check_branch
        %317 = sbr.rel (%p315) target = $region36
      $region35: #{transformer_forward.26} parent=31 // pred_region
        %v318 = vld [vmem:[%s243] sm:$0x1]
        %v320 = vlaneseq
        %v321 = vshrl.u32 %v320, 7
        %v322 = vsub.s32 0, %v321
        %v323 = vrot.slane %v318, %v322
        %v325 = vadd.f32 %v323, %v309
        %326 = vst.msk [vmem:[%s250] sm:$0xff] %vm270, %v325
      $region36: #{transformer_forward.26} parent=31 // pred_fallthru
        _
      %p327 = scmp.gt.s32.totalorder %s21, 0
      // Predicated region
      $region37: #{transformer_forward.26} parent=31 // pred_check
        %p328 = pneg %p327
      $region38: #{transformer_forward.26} parent=31 // pred_check_branch
        %330 = sbr.rel (%p328) target = $region40
      $region39: #{transformer_forward.26} parent=31 // pred_region
        %v331 = vld [vmem:[%s250] sm:$0xff]
        %v332 = vadd.f32 %v331, %v309
        %333 = vst.msk [vmem:[%s250] sm:$0xff] %vm270, %v332
      $region40: #{transformer_forward.26} parent=31 // pred_fallthru
        _
      %p334 = scmp.lt.s32.totalorder %s19, 1
      %s335 = scalar_select %p334, %s19, 1
      %p336 = scmp.lt.s32.totalorder %s20, 0
      %s337 = scalar_select %p336, %s20, 0
      %s338 = sadd.s32 %s337, %s335
      %s339 = smul.addr %s338, 8
      %s340 = scalar_lea.vmem %s3, %s339
      // Predicated region
      $region41: #{transformer_forward.26} parent=31 // pred_check
        %p341 = pneg %p135
      $region42: #{transformer_forward.26} parent=31 // pred_check_branch
        %343 = sbr.rel (%p341) target = $region44
      $region43: #{transformer_forward.26} parent=31 // pred_region
        _
      $region44: #{transformer_forward.26} parent=31 // pred_fallthru
        _
    $region32: #{transformer_forward.26} parent=5 // pred_fallthru
      _
    %p344 = scmp.le.s32.totalorder 2, %s9
    // Predicated region
    $region45: #{transformer_forward.26} parent=5 // pred_check
      %p345 = pneg %p344
    $region46: #{transformer_forward.26} parent=5 // pred_check_branch
      %347 = sbr.rel (%p345) target = $region48
    $region47: #{transformer_forward.26} parent=5 // pred_region
      %s348 = ssub.s32 %s9, 2
      // Predicated region
      $region49: #{transformer_forward.26} parent=47 // pred_check
        %p349 = pneg %p141
      $region50: #{transformer_forward.26} parent=47 // pred_check_branch
        %351 = sbr.rel (%p349) target = $region52
      $region51: #{transformer_forward.26} parent=47 // pred_region
        %p352 = scmp.lt.s32.totalorder %s22, 1
        %s353 = scalar_select %p352, %s22, 1
        %p354 = scmp.lt.s32.totalorder %s23, 0
        %s355 = scalar_select %p354, %s23, 0
        %s356 = sadd.s32 %s355, %s353
        %s357 = smul.addr %s356, 8
        %s358 = scalar_lea.vmem %s3, %s357
      $region52: #{transformer_forward.26} parent=47 // pred_fallthru
        _
    $region48: #{transformer_forward.26} parent=5 // pred_fallthru
      _
  $region6: #{transformer_forward.26} parent=0 // loop_footer
    %s13 = sadd.s32 1, %s9
  $region7: #{transformer_forward.26} parent=0 // loop_footer_branch
    %8 = sbr.rel target = $region3
  $region8: #{transformer_forward.26} parent=0 // loop_exit
    _

// kernel: transformer_forward.27
$region0: #{transformer_forward.27}
  #allocation0 [shape = 'u32[]', space=smem, size = 0x4, offset = 0x4, fixed_abs, tag = 'smem constant byte address 0x4 - core index']
  #allocation1 [shape = 'u32[144,128]{1,0:T(1,128)}', space=vmem, size = 0x12000, scoped, tag = 'internal scratch']
  %s0 = inlined_call_operand.vmem [shape: f32[16,32], index: 0, kind: input, shape index: {}]
  %s1 = inlined_call_operand.vmem [shape: bf16[32,32], index: 1, kind: input, shape index: {}]
  %s2 = inlined_call_operand.vmem [shape: f32[1,32], index: 2, kind: input, shape index: {}]
  %s3 = inlined_call_operand.vmem [shape: f32[16,32], index: 3, kind: output, shape index: {}]
  %s4 = sld [smem:[#allocation0]]
  $region53: #{transformer_forward.27} parent=0
    _
  %s6 = ssub.s32 1, %s4
  %s7 = scalar_select 0, %s6, %s4
  loop: start=0, step=1, limit=4
  $region2: #{transformer_forward.27} parent=0 // loop_pre_header
    _
  $region3: #{transformer_forward.27} parent=0 // loop_header
    %s9 = sphi 0, %s13
    %p10 = scmp.ge.s32.totalorder %s9, 4
    %s16 = sphi 0, %s35
    %s17 = sphi 0, %s31
    %s18 = sphi 0, %s27
    %s19 = sphi 0, %s16
    %s20 = sphi 0, %s17
    %s21 = sphi 0, %s18
    %s22 = sphi 0, %s19
    %s23 = sphi 0, %s20
    %s24 = sphi 0, %s21
    %s40 = sphi 0, %s42
    %s43 = sphi 0, %s40
    %s44 = sphi 0, %s43
    %s60 = sphi 0, %s44
    %s68 = sphi 0, %s70
    %s71 = sphi 0, %s68
    %s72 = sphi 0, %s71
    %s88 = sphi 0, %s72
    %s94 = sphi 0, %s96
    %s97 = sphi 0, %s94
    %s98 = sphi 0, %s97
    %s114 = sphi 0, %s98
    %s122 = sphi 0, %s124
    %s125 = sphi 0, %s122
    %s126 = sphi 0, %s125
    %s142 = sphi 0, %s126
  $region4: #{transformer_forward.27} parent=0 // loop_header_branch
    %12 = sbr.rel (%p10) target = $region8
  $region5: #{transformer_forward.27} parent=0 // loop_body
    %s14 = ssub.s32 %s9, 1
    %s15 = ssub.s32 %s9, 2
    %s25 = sadd.s32 1, %s18
    %p26 = scmp.ge.s32.totalorder %s25, 1
    %s27 = scalar_select %p26, 0, %s25
    %s28 = sadd.s32 1, %s17
    %s29 = scalar_select %p26, %s28, %s17
    %p30 = scmp.ge.s32.totalorder %s29, 1
    %s31 = scalar_select %p30, 0, %s29
    %s32 = sadd.s32 1, %s16
    %s33 = scalar_select %p30, %s32, %s16
    %p34 = scmp.ge.s32.totalorder %s33, 2
    %s35 = scalar_select %p34, 0, %s33
    %s36 = ssub.s32 %s16, %s35
    %s37 = ssub.s32 %s18, %s27
    %s38 = sor.u32 %s36, %s37
    %p39 = scmp.eq.s32.totalorder %s38, 0
    %s41 = sadd.s32 %s40, 1
    %s42 = scalar_select %p39, %s40, %s41
    %p45 = pneg %p39
    %p46 = scmp.eq.s32.totalorder %s9, 1
    %p47 = por %p45, %p46
    %p48 = scmp.ne.s32.totalorder %s40, %s43
    %p49 = scmp.eq.s32.totalorder %s9, 0
    %p50 = por %p48, %p49
    %p51 = scmp.ne.s32.totalorder %s40, %s43
    %p52 = scmp.eq.s32.totalorder %s14, 1
    %p53 = por %p51, %p52
    %p54 = scmp.ne.s32.totalorder %s43, %s44
    %p55 = scmp.eq.s32.totalorder %s14, 0
    %p56 = por %p54, %p55
    %p57 = scmp.ne.s32.totalorder %s43, %s44
    %p58 = scmp.eq.s32.totalorder %s15, 1
    %p59 = por %p57, %p58
    %p61 = scmp.ne.s32.totalorder %s44, %s60
    %p62 = scmp.eq.s32.totalorder %s15, 0
    %p63 = por %p61, %p62
    %s64 = ssub.s32 %s18, %s27
    %s65 = ssub.s32 %s17, %s31
    %s66 = sor.u32 %s64, %s65
    %p67 = scmp.eq.s32.totalorder %s66, 0
    %s69 = sadd.s32 %s68, 1
    %s70 = scalar_select %p67, %s68, %s69
    %p73 = pneg %p67
    %p74 = scmp.eq.s32.totalorder %s9, 1
    %p75 = por %p73, %p74
    %p76 = scmp.ne.s32.totalorder %s68, %s71
    %p77 = scmp.eq.s32.totalorder %s9, 0
    %p78 = por %p76, %p77
    %p79 = scmp.ne.s32.totalorder %s68, %s71
    %p80 = scmp.eq.s32.totalorder %s14, 1
    %p81 = por %p79, %p80
    %p82 = scmp.ne.s32.totalorder %s71, %s72
    %p83 = scmp.eq.s32.totalorder %s14, 0
    %p84 = por %p82, %p83
    %p85 = scmp.ne.s32.totalorder %s71, %s72
    %p86 = scmp.eq.s32.totalorder %s15, 1
    %p87 = por %p85, %p86
    %p89 = scmp.ne.s32.totalorder %s72, %s88
    %p90 = scmp.eq.s32.totalorder %s15, 0
    %p91 = por %p89, %p90
    %s92 = ssub.s32 %s17, %s31
    %p93 = scmp.eq.s32.totalorder %s92, 0
    %s95 = sadd.s32 %s94, 1
    %s96 = scalar_select %p93, %s94, %s95
    %p99 = pneg %p93
    %p100 = scmp.eq.s32.totalorder %s9, 1
    %p101 = por %p99, %p100
    %p102 = scmp.ne.s32.totalorder %s94, %s97
    %p103 = scmp.eq.s32.totalorder %s9, 0
    %p104 = por %p102, %p103
    %p105 = scmp.ne.s32.totalorder %s94, %s97
    %p106 = scmp.eq.s32.totalorder %s14, 1
    %p107 = por %p105, %p106
    %p108 = scmp.ne.s32.totalorder %s97, %s98
    %p109 = scmp.eq.s32.totalorder %s14, 0
    %p110 = por %p108, %p109
    %p111 = scmp.ne.s32.totalorder %s97, %s98
    %p112 = scmp.eq.s32.totalorder %s15, 1
    %p113 = por %p111, %p112
    %p115 = scmp.ne.s32.totalorder %s98, %s114
    %p116 = scmp.eq.s32.totalorder %s15, 0
    %p117 = por %p115, %p116
    %s118 = ssub.s32 %s16, %s35
    %s119 = ssub.s32 %s17, %s31
    %s120 = sor.u32 %s118, %s119
    %p121 = scmp.eq.s32.totalorder %s120, 0
    %s123 = sadd.s32 %s122, 1
    %s124 = scalar_select %p121, %s122, %s123
    %p127 = pneg %p121
    %p128 = scmp.eq.s32.totalorder %s9, 1
    %p129 = por %p127, %p128
    %p130 = scmp.ne.s32.totalorder %s122, %s125
    %p131 = scmp.eq.s32.totalorder %s9, 0
    %p132 = por %p130, %p131
    %p133 = scmp.ne.s32.totalorder %s122, %s125
    %p134 = scmp.eq.s32.totalorder %s14, 1
    %p135 = por %p133, %p134
    %p136 = scmp.ne.s32.totalorder %s125, %s126
    %p137 = scmp.eq.s32.totalorder %s14, 0
    %p138 = por %p136, %p137
    %p139 = scmp.ne.s32.totalorder %s125, %s126
    %p140 = scmp.eq.s32.totalorder %s15, 1
    %p141 = por %p139, %p140
    %p143 = scmp.ne.s32.totalorder %s126, %s142
    %p144 = scmp.eq.s32.totalorder %s15, 0
    %p145 = por %p143, %p144
    %p146 = scmp.le.s32.totalorder 1, %s9
    %p147 = scmp.lt.s32.totalorder %s9, 3
    %p148 = pnand %p146, %p147
    %p149 = pneg %p148
    // Predicated region
    $region9: #{transformer_forward.27} parent=5 // pred_check
      _
    $region10: #{transformer_forward.27} parent=5 // pred_check_branch
      %151 = sbr.rel (%p148) target = $region12
    $region11: #{transformer_forward.27} parent=5 // pred_region
      %s152 = ssub.s32 %s9, 1
      // Predicated region
      $region13: #{transformer_forward.27} parent=11 // pred_check
        %p153 = pneg %p84
      $region14: #{transformer_forward.27} parent=11 // pred_check_branch
        %155 = sbr.rel (%p153) target = $region16
      $region15: #{transformer_forward.27} parent=11 // pred_region
        %s156 = smul.u32 4, %s21
        %p157 = scmp.lt.s32.totalorder %s156, 3
        %s158 = scalar_select %p157, %s156, 3
        %p159 = scmp.lt.s32.totalorder %s20, 0
        %s160 = scalar_select %p159, %s20, 0
        %s161 = sadd.s32 %s160, %s158
        %s162 = smul.addr %s161, 4
        %s163 = scalar_lea.vmem %s1, %s162
        %s164 = smul.u32 4, %s21
      $region16: #{transformer_forward.27} parent=11 // pred_fallthru
        _
      // Predicated region
      $region17: #{transformer_forward.27} parent=11 // pred_check
        %p165 = pneg %p110
      $region18: #{transformer_forward.27} parent=11 // pred_check_branch
        %167 = sbr.rel (%p165) target = $region20
      $region19: #{transformer_forward.27} parent=11 // pred_region
        %p168 = scmp.lt.s32.totalorder %s20, 0
        %s169 = scalar_select %p168, %s20, 0
        %s170 = scalar_lea.vmem %s2, %s169
      $region20: #{transformer_forward.27} parent=11 // pred_fallthru
        _
    $region12: #{transformer_forward.27} parent=5 // pred_fallthru
      _
    %p171 = scmp.lt.s32.totalorder %s9, 2
    // Predicated region
    $region21: #{transformer_forward.27} parent=5 // pred_check
      %p172 = pneg %p171
    $region22: #{transformer_forward.27} parent=5 // pred_check_branch
      %174 = sbr.rel (%p172) target = $region24
    $region23: #{transformer_forward.27} parent=5 // pred_region
      // Predicated region
      $region25: #{transformer_forward.27} parent=23 // pred_check
        %p175 = pneg %p50
      $region26: #{transformer_forward.27} parent=23 // pred_check_branch
        %177 = sbr.rel (%p175) target = $region28
      $region27: #{transformer_forward.27} parent=23 // pred_region
        %p178 = scmp.lt.s32.totalorder %s16, 1
        %s179 = scalar_select %p178, %s16, 1
        %p180 = scmp.lt.s32.totalorder %s18, 0
        %s181 = scalar_select %p180, %s18, 0
        %s182 = sadd.s32 %s181, %s179
        %s183 = smul.addr %s182, 8
        %s184 = scalar_lea.vmem %s0, %s183
      $region28: #{transformer_forward.27} parent=23 // pred_fallthru
        _
    $region24: #{transformer_forward.27} parent=5 // pred_fallthru
      _
    %p185 = scmp.le.s32.totalorder 1, %s9
    %p186 = scmp.lt.s32.totalorder %s9, 3
    %p187 = pnand %p185, %p186
    %p188 = pneg %p187
    // Predicated region
    $region29: #{transformer_forward.27} parent=5 // pred_check
      _
    $region30: #{transformer_forward.27} parent=5 // pred_check_branch
      %190 = sbr.rel (%p187) target = $region32
    $region31: #{transformer_forward.27} parent=5 // pred_region
      %s191 = ssub.s32 %s9, 1
      %p192 = scmp.lt.s32.totalorder %s19, 1
      %s193 = scalar_select %p192, %s19, 1
      %p194 = scmp.lt.s32.totalorder %s21, 0
      %s195 = scalar_select %p194, %s21, 0
      %s196 = sadd.s32 %s195, %s193
      %s197 = smul.addr %s196, 8
      %s198 = scalar_lea.vmem %s0, %s197
      %p199 = pneg %p56
      %p200 = pneg %p53
      %s201 = smul.u32 4, %s21
      %p202 = scmp.lt.s32.totalorder %s201, 3
      %s203 = scalar_select %p202, %s201, 3
      %p204 = scmp.lt.s32.totalorder %s20, 0
      %s205 = scalar_select %p204, %s20, 0
      %s206 = sadd.s32 %s205, %s203
      %s207 = smul.addr %s206, 4
      %s208 = scalar_lea.vmem %s1, %s207
      %p209 = pneg %p84
      %p210 = pneg %p81
      %p211 = scmp.lt.s32.totalorder %s20, 0
      %s212 = scalar_select %p211, %s20, 0
      %s213 = scalar_lea.vmem %s2, %s212
      %p214 = pneg %p110
      %p215 = pneg %p107
      %p216 = pneg %p138
      %p217 = pneg %p135
      %p218 = scmp.lt.s32.totalorder %s19, 1
      %s219 = scalar_select %p218, %s19, 1
      %p220 = scmp.lt.s32.totalorder %s20, 0
      %s221 = scalar_select %p220, %s20, 0
      %s222 = sadd.s32 %s221, %s219
      %s223 = smul.addr %s222, 8
      %s224 = scalar_lea.vmem %s3, %s223
      %p225 = scmp.lt.s32.totalorder %s19, 1
      %s226 = scalar_select %p225, %s19, 1
      %p227 = scmp.lt.s32.totalorder %s21, 0
      %s228 = scalar_select %p227, %s21, 0
      %s229 = sadd.s32 %s228, %s226
      %s230 = smul.addr %s229, 8
      %s231 = scalar_lea.vmem %s0, %s230
      %s232 = smul.u32 4, %s21
      %p233 = scmp.lt.s32.totalorder %s232, 3
      %s234 = scalar_select %p233, %s232, 3
      %p235 = scmp.lt.s32.totalorder %s20, 0
      %s236 = scalar_select %p235, %s20, 0
      %s237 = sadd.s32 %s236, %s234
      %s238 = smul.addr %s237, 4
      %s239 = scalar_lea.vmem %s1, %s238
      %s240 = smul.u32 4, %s21
      %p241 = scmp.lt.s32.totalorder %s20, 0
      %s242 = scalar_select %p241, %s20, 0
      %s243 = scalar_lea.vmem %s2, %s242
      %p244 = scmp.lt.s32.totalorder %s19, 1
      %s245 = scalar_select %p244, %s19, 1
      %p246 = scmp.lt.s32.totalorder %s20, 0
      %s247 = scalar_select %p246, %s20, 0
      %s248 = sadd.s32 %s247, %s245
      %s249 = smul.addr %s248, 8
      %s250 = scalar_lea.vmem %s3, %s249
      %v252 = vld [vmem:[%s231] sm:$0xff]
      %v253 = vmax.f32 %v252, 0.0
      %v254 = vpack.c.bf16 %v253, %v253
      %v255 = vld [vmem:[%s239] sm:$0xf]
      %v256 = vld [vmem:[%s239 + $0x4] sm:$0xf]
      %v257 = vld [vmem:[%s239 + $0x8] sm:$0xf]
      %v258 = vld [vmem:[%s239 + $0xc] sm:$0xf]
      %v263 = vunpack.c.l.b16 %v255
      %v264 = vunpack.c.l.b16 %v256
      %v265 = vunpack.c.l.b16 %v257
      %v266 = vunpack.c.l.b16 %v258
      %v267 = vpack.c.b16 %v264, %v263
      %v268 = vpack.c.b16 %v266, %v265
      %vm271 = vcmask 261120
      %v273 = vsel %vm271, %v254, 0
      %275 = vmatprep.subr.bf16.mxu0 0
      %276 = vmatpush1.bf16.msra.mxu0 %v267
      %277 = vmatprep.subr.bf16.mxu0 0
      %278 = vmatpush1.bf16.msra.mxu0 %v268
      %279 = vmatprep.subr.bf16.mxu0 0
      %280 = vmatpush1.bf16.msra.mxu0 0
      %281 = vmatprep.subr.bf16.mxu0 0
      %282 = vmatpush1.bf16.msra.mxu0 0
      %283 = vmatprep.subr.bf16.mxu0 0
      %284 = vmatpush1.bf16.msra.mxu0 0
      %285 = vmatprep.subr.bf16.mxu0 0
      %286 = vmatpush1.bf16.msra.mxu0 0
      %287 = vmatprep.subr.bf16.mxu0 0
      %288 = vmatpush1.bf16.msra.mxu0 0
      %289 = vmatprep.subr.bf16.mxu0 0
      %290 = vmatpush1.bf16.msra.mxu0 0
      %291 = vmatprep.subr.bf16.mxu0 0
      %292 = vmatpush1.bf16.msra.mxu0 0
      %293 = vmatprep.subr.bf16.mxu0 0
      %294 = vmatpush1.bf16.msra.mxu0 0
      %295 = vmatprep.subr.bf16.mxu0 0
      %296 = vmatpush1.bf16.msra.mxu0 0
      %297 = vmatprep.subr.bf16.mxu0 0
      %298 = vmatpush1.bf16.msra.mxu0 0
      %299 = vmatprep.subr.bf16.mxu0 0
      %300 = vmatpush1.bf16.msra.mxu0 0
      %301 = vmatprep.subr.bf16.mxu0 0
      %302 = vmatpush1.bf16.msra.mxu0 0
      %303 = vmatprep.subr.bf16.mxu0 0
      %304 = vmatpush1.bf16.msra.mxu0 0
      %305 = vmatprep.subr.bf16.mxu0 0
      %306 = vmatpush1.bf16.msra.mxu0 0
      %307 = vmatprep.mubr.bf16.mxu0 0
      %308 = vmatmul.mubr.bf16.gmra.mrb[0].mxu0 %v273
      %v309 = vpop.f32.mrb[0].mxu0
      %v310 = vadd.f32 0.0, %v309
      %v311 = vpop.f32.mrb[0].mxu0
      %v312 = vpop.f32.mrb[0].mxu0
      %v313 = vpop.f32.mrb[0].mxu0
      %314 = vdwg.mxu0
      %p315 = scmp.eq.s32.totalorder %s21, 0
      // Predicated region
      $region33: #{transformer_forward.27} parent=31 // pred_check
        %p316 = pneg %p315
      $region34: #{transformer_forward.27} parent=31 // pred_check_branch
        %318 = sbr.rel (%p316) target = $region36
      $region35: #{transformer_forward.27} parent=31 // pred_region
        %v319 = vld [vmem:[%s243] sm:$0x1]
        %v321 = vlaneseq
        %v322 = vshrl.u32 %v321, 7
        %v323 = vsub.s32 0, %v322
        %v324 = vrot.slane %v319, %v323
        %v326 = vadd.f32 %v324, %v310
        %327 = vst.msk [vmem:[%s250] sm:$0xff] %vm271, %v326
      $region36: #{transformer_forward.27} parent=31 // pred_fallthru
        _
      %p328 = scmp.gt.s32.totalorder %s21, 0
      // Predicated region
      $region37: #{transformer_forward.27} parent=31 // pred_check
        %p329 = pneg %p328
      $region38: #{transformer_forward.27} parent=31 // pred_check_branch
        %331 = sbr.rel (%p329) target = $region40
      $region39: #{transformer_forward.27} parent=31 // pred_region
        %v332 = vld [vmem:[%s250] sm:$0xff]
        %v333 = vadd.f32 %v332, %v310
        %334 = vst.msk [vmem:[%s250] sm:$0xff] %vm271, %v333
      $region40: #{transformer_forward.27} parent=31 // pred_fallthru
        _
      %p335 = scmp.lt.s32.totalorder %s19, 1
      %s336 = scalar_select %p335, %s19, 1
      %p337 = scmp.lt.s32.totalorder %s20, 0
      %s338 = scalar_select %p337, %s20, 0
      %s339 = sadd.s32 %s338, %s336
      %s340 = smul.addr %s339, 8
      %s341 = scalar_lea.vmem %s3, %s340
      // Predicated region
      $region41: #{transformer_forward.27} parent=31 // pred_check
        %p342 = pneg %p135
      $region42: #{transformer_forward.27} parent=31 // pred_check_branch
        %344 = sbr.rel (%p342) target = $region44
      $region43: #{transformer_forward.27} parent=31 // pred_region
        _
      $region44: #{transformer_forward.27} parent=31 // pred_fallthru
        _
    $region32: #{transformer_forward.27} parent=5 // pred_fallthru
      _
    %p345 = scmp.le.s32.totalorder 2, %s9
    // Predicated region
    $region45: #{transformer_forward.27} parent=5 // pred_check
      %p346 = pneg %p345
    $region46: #{transformer_forward.27} parent=5 // pred_check_branch
      %348 = sbr.rel (%p346) target = $region48
    $region47: #{transformer_forward.27} parent=5 // pred_region
      %s349 = ssub.s32 %s9, 2
      // Predicated region
      $region49: #{transformer_forward.27} parent=47 // pred_check
        %p350 = pneg %p141
      $region50: #{transformer_forward.27} parent=47 // pred_check_branch
        %352 = sbr.rel (%p350) target = $region52
      $region51: #{transformer_forward.27} parent=47 // pred_region
        %p353 = scmp.lt.s32.totalorder %s22, 1
        %s354 = scalar_select %p353, %s22, 1
        %p355 = scmp.lt.s32.totalorder %s23, 0
        %s356 = scalar_select %p355, %s23, 0
        %s357 = sadd.s32 %s356, %s354
        %s358 = smul.addr %s357, 8
        %s359 = scalar_lea.vmem %s3, %s358
      $region52: #{transformer_forward.27} parent=47 // pred_fallthru
        _
    $region48: #{transformer_forward.27} parent=5 // pred_fallthru
      _
  $region6: #{transformer_forward.27} parent=0 // loop_footer
    %s13 = sadd.s32 1, %s9
  $region7: #{transformer_forward.27} parent=0 // loop_footer_branch
    %8 = sbr.rel target = $region3
  $region8: #{transformer_forward.27} parent=0 // loop_exit
    _

// kernel: transformer_forward.37
$region0: #{transformer_forward.37}
  #allocation0 [shape = 'u32[]', space=smem, size = 0x4, offset = 0x4, fixed_abs, tag = 'smem constant byte address 0x4 - core index']
  #allocation1 [shape = 'u32[144,128]{1,0:T(1,128)}', space=vmem, size = 0x12000, scoped, tag = 'internal scratch']
  %s0 = inlined_call_operand.vmem [shape: f32[16,32], index: 0, kind: input, shape index: {}]
  %s1 = inlined_call_operand.vmem [shape: f32[16,32], index: 1, kind: input, shape index: {}]
  %s2 = inlined_call_operand.vmem [shape: f32[1,32], index: 2, kind: input, shape index: {}]
  %s3 = inlined_call_operand.vmem [shape: f32[1,32], index: 3, kind: input, shape index: {}]
  %s4 = inlined_call_operand.hbm [shape: f32[16,32], index: 4, kind: output, shape index: {}]
  %s5 = sld [smem:[#allocation0]]
  $region49: #{transformer_forward.37} parent=0
    _
  %s7 = ssub.s32 1, %s5
  %s8 = scalar_select 0, %s7, %s5
  $region1: #{transformer_forward.37} parent=0
    #allocation2 [shape = 'u8[8192]{0}', space=vmem, size = 0x2000, scoped, tag = 'output window, operand 0']
    #allocation3 [shape = 's32[2]{0}', space=sflag, size = 0x8, scoped, tag = 'scoped memory for transformer_forward.37']
    %9 = vsyncpa [#allocation3], 0
    %s10 = scalar_lea.sflag [#allocation3], 1
    %11 = vsyncpa %s10, 0
    loop: start=0, step=1, limit=4
    $region2: #{transformer_forward.37} parent=1 // loop_pre_header
      _
    $region3: #{transformer_forward.37} parent=1 // loop_header
      %s13 = sphi 0, %s17
      %p14 = scmp.ge.s32.totalorder %s13, 4
      %s23 = sphi 0, %s25
      %s26 = sphi 0, %s23
      %s27 = sphi 0, %s26
      %s43 = sphi 0, %s27
      %s49 = sphi 0, %s51
      %s52 = sphi 0, %s49
      %s53 = sphi 0, %s52
      %s69 = sphi 0, %s53
      %s73 = sphi 0, %s73
      %s75 = sphi 0, %s73
      %s76 = sphi 0, %s75
      %s90 = sphi 0, %s76
      %s94 = sphi 0, %s94
      %s96 = sphi 0, %s94
      %s97 = sphi 0, %s96
      %s111 = sphi 0, %s97
      %s117 = sphi 0, %s119
      %s120 = sphi 0, %s117
      %s121 = sphi 0, %s120
      %s137 = sphi 0, %s121
    $region4: #{transformer_forward.37} parent=1 // loop_header_branch
      %16 = sbr.rel (%p14) target = $region8
    $region5: #{transformer_forward.37} parent=1 // loop_body
      %s18 = ssub.s32 %s13, 1
      %s19 = ssub.s32 %s13, 2
      %s20 = sadd.s32 %s13, 1
      %s21 = ssub.s32 %s13, %s20
      %p22 = scmp.eq.s32.totalorder %s21, 0
      %s24 = sadd.s32 %s23, 1
      %s25 = scalar_select %p22, %s23, %s24
      %p28 = pneg %p22
      %p29 = scmp.eq.s32.totalorder %s13, 1
      %p30 = por %p28, %p29
      %p31 = scmp.ne.s32.totalorder %s23, %s26
      %p32 = scmp.eq.s32.totalorder %s13, 0
      %p33 = por %p31, %p32
      %p34 = scmp.ne.s32.totalorder %s23, %s26
      %p35 = scmp.eq.s32.totalorder %s18, 1
      %p36 = por %p34, %p35
      %p37 = scmp.ne.s32.totalorder %s26, %s27
      %p38 = scmp.eq.s32.totalorder %s18, 0
      %p39 = por %p37, %p38
      %p40 = scmp.ne.s32.totalorder %s26, %s27
      %p41 = scmp.eq.s32.totalorder %s19, 1
      %p42 = por %p40, %p41
      %p44 = scmp.ne.s32.totalorder %s27, %s43
      %p45 = scmp.eq.s32.totalorder %s19, 0
      %p46 = por %p44, %p45
      %s47 = ssub.s32 %s13, %s20
      %p48 = scmp.eq.s32.totalorder %s47, 0
      %s50 = sadd.s32 %s49, 1
      %s51 = scalar_select %p48, %s49, %s50
      %p54 = pneg %p48
      %p55 = scmp.eq.s32.totalorder %s13, 1
      %p56 = por %p54, %p55
      %p57 = scmp.ne.s32.totalorder %s49, %s52
      %p58 = scmp.eq.s32.totalorder %s13, 0
      %p59 = por %p57, %p58
      %p60 = scmp.ne.s32.totalorder %s49, %s52
      %p61 = scmp.eq.s32.totalorder %s18, 1
      %p62 = por %p60, %p61
      %p63 = scmp.ne.s32.totalorder %s52, %s53
      %p64 = scmp.eq.s32.totalorder %s18, 0
      %p65 = por %p63, %p64
      %p66 = scmp.ne.s32.totalorder %s52, %s53
      %p67 = scmp.eq.s32.totalorder %s19, 1
      %p68 = por %p66, %p67
      %p70 = scmp.ne.s32.totalorder %s53, %s69
      %p71 = scmp.eq.s32.totalorder %s19, 0
      %p72 = por %p70, %p71
      %s74 = sadd.s32 %s73, 1
      %p77 = scmp.eq.s32.totalorder %s13, 1
      %p78 = scmp.ne.s32.totalorder %s73, %s75
      %p79 = scmp.eq.s32.totalorder %s13, 0
      %p80 = por %p78, %p79
      %p81 = scmp.ne.s32.totalorder %s73, %s75
      %p82 = scmp.eq.s32.totalorder %s18, 1
      %p83 = por %p81, %p82
      %p84 = scmp.ne.s32.totalorder %s75, %s76
      %p85 = scmp.eq.s32.totalorder %s18, 0
      %p86 = por %p84, %p85
      %p87 = scmp.ne.s32.totalorder %s75, %s76
      %p88 = scmp.eq.s32.totalorder %s19, 1
      %p89 = por %p87, %p88
      %p91 = scmp.ne.s32.totalorder %s76, %s90
      %p92 = scmp.eq.s32.totalorder %s19, 0
      %p93 = por %p91, %p92
      %s95 = sadd.s32 %s94, 1
      %p98 = scmp.eq.s32.totalorder %s13, 1
      %p99 = scmp.ne.s32.totalorder %s94, %s96
      %p100 = scmp.eq.s32.totalorder %s13, 0
      %p101 = por %p99, %p100
      %p102 = scmp.ne.s32.totalorder %s94, %s96
      %p103 = scmp.eq.s32.totalorder %s18, 1
      %p104 = por %p102, %p103
      %p105 = scmp.ne.s32.totalorder %s96, %s97
      %p106 = scmp.eq.s32.totalorder %s18, 0
      %p107 = por %p105, %p106
      %p108 = scmp.ne.s32.totalorder %s96, %s97
      %p109 = scmp.eq.s32.totalorder %s19, 1
      %p110 = por %p108, %p109
      %p112 = scmp.ne.s32.totalorder %s97, %s111
      %p113 = scmp.eq.s32.totalorder %s19, 0
      %p114 = por %p112, %p113
      %s115 = ssub.s32 %s13, %s20
      %p116 = scmp.eq.s32.totalorder %s115, 0
      %s118 = sadd.s32 %s117, 1
      %s119 = scalar_select %p116, %s117, %s118
      %p122 = pneg %p116
      %p123 = scmp.eq.s32.totalorder %s13, 1
      %p124 = por %p122, %p123
      %p125 = scmp.ne.s32.totalorder %s117, %s120
      %p126 = scmp.eq.s32.totalorder %s13, 0
      %p127 = por %p125, %p126
      %p128 = scmp.ne.s32.totalorder %s117, %s120
      %p129 = scmp.eq.s32.totalorder %s18, 1
      %p130 = por %p128, %p129
      %p131 = scmp.ne.s32.totalorder %s120, %s121
      %p132 = scmp.eq.s32.totalorder %s18, 0
      %p133 = por %p131, %p132
      %p134 = scmp.ne.s32.totalorder %s120, %s121
      %p135 = scmp.eq.s32.totalorder %s19, 1
      %p136 = por %p134, %p135
      %p138 = scmp.ne.s32.totalorder %s121, %s137
      %p139 = scmp.eq.s32.totalorder %s19, 0
      %p140 = por %p138, %p139
      %p141 = scmp.le.s32.totalorder 1, %s13
      %p142 = scmp.lt.s32.totalorder %s13, 3
      %p143 = pnand %p141, %p142
      %p144 = pneg %p143
      // Predicated region
      $region9: #{transformer_forward.37} parent=5 // pred_check
        _
      $region10: #{transformer_forward.37} parent=5 // pred_check_branch
        %146 = sbr.rel (%p143) target = $region12
      $region11: #{transformer_forward.37} parent=5 // pred_region
        %s147 = ssub.s32 %s13, 1
        // Predicated region
        $region13: #{transformer_forward.37} parent=11 // pred_check
          %p148 = pneg %p86
        $region14: #{transformer_forward.37} parent=11 // pred_check_branch
          %150 = sbr.rel (%p148) target = $region16
        $region15: #{transformer_forward.37} parent=11 // pred_region
          _
        $region16: #{transformer_forward.37} parent=11 // pred_fallthru
          _
        // Predicated region
        $region17: #{transformer_forward.37} parent=11 // pred_check
          %p151 = pneg %p107
        $region18: #{transformer_forward.37} parent=11 // pred_check_branch
          %153 = sbr.rel (%p151) target = $region20
        $region19: #{transformer_forward.37} parent=11 // pred_region
          _
        $region20: #{transformer_forward.37} parent=11 // pred_fallthru
          _
      $region12: #{transformer_forward.37} parent=5 // pred_fallthru
        _
      %p154 = scmp.lt.s32.totalorder %s13, 2
      // Predicated region
      $region21: #{transformer_forward.37} parent=5 // pred_check
        %p155 = pneg %p154
      $region22: #{transformer_forward.37} parent=5 // pred_check_branch
        %157 = sbr.rel (%p155) target = $region24
      $region23: #{transformer_forward.37} parent=5 // pred_region
        // Predicated region
        $region25: #{transformer_forward.37} parent=23 // pred_check
          %p158 = pneg %p33
        $region26: #{transformer_forward.37} parent=23 // pred_check_branch
          %160 = sbr.rel (%p158) target = $region28
        $region27: #{transformer_forward.37} parent=23 // pred_region
          %p161 = scmp.lt.s32.totalorder %s13, 1
          %s162 = scalar_select %p161, %s13, 1
          %s163 = smul.addr %s162, 8
          %s164 = scalar_lea.vmem %s0, %s163
        $region28: #{transformer_forward.37} parent=23 // pred_fallthru
          _
        // Predicated region
        $region29: #{transformer_forward.37} parent=23 // pred_check
          %p165 = pneg %p59
        $region30: #{transformer_forward.37} parent=23 // pred_check_branch
          %167 = sbr.rel (%p165) target = $region32
        $region31: #{transformer_forward.37} parent=23 // pred_region
          %p168 = scmp.lt.s32.totalorder %s13, 1
          %s169 = scalar_select %p168, %s13, 1
          %s170 = smul.addr %s169, 8
          %s171 = scalar_lea.vmem %s1, %s170
        $region32: #{transformer_forward.37} parent=23 // pred_fallthru
          _
      $region24: #{transformer_forward.37} parent=5 // pred_fallthru
        _
      %p172 = scmp.le.s32.totalorder 1, %s13
      %p173 = scmp.lt.s32.totalorder %s13, 3
      %p174 = pnand %p172, %p173
      %p175 = pneg %p174
      // Predicated region
      $region33: #{transformer_forward.37} parent=5 // pred_check
        _
      $region34: #{transformer_forward.37} parent=5 // pred_check_branch
        %177 = sbr.rel (%p174) target = $region36
      $region35: #{transformer_forward.37} parent=5 // pred_region
        %s178 = ssub.s32 %s13, 1
        %p179 = scmp.lt.s32.totalorder %s18, 1
        %s180 = scalar_select %p179, %s18, 1
        %s181 = smul.addr %s180, 8
        %s182 = scalar_lea.vmem %s0, %s181
        %p183 = pneg %p39
        %p184 = pneg %p36
        %p185 = scmp.lt.s32.totalorder %s18, 1
        %s186 = scalar_select %p185, %s18, 1
        %s187 = smul.addr %s186, 8
        %s188 = scalar_lea.vmem %s1, %s187
        %p189 = pneg %p65
        %p190 = pneg %p62
        %p191 = pneg %p86
        %p192 = pneg %p83
        %p193 = pneg %p107
        %p194 = pneg %p104
        %p195 = pneg %p133
        %p196 = pneg %p130
        %s197 = sand.u32 %s120, 1
        %s198 = scalar_lea.sflag [#allocation3], %s197
        %s199 = sand.u32 %s120, 1
        %s200 = smul.addr %s199, 8
        %s201 = scalar_lea.vmem [#allocation2], %s200
        %p202 = scmp.lt.s32.totalorder %s18, 1
        %s203 = scalar_select %p202, %s18, 1
        %s204 = smul.addr %s203, 8
        %s205 = scalar_lea.vmem %s0, %s204
        %p206 = scmp.lt.s32.totalorder %s18, 1
        %s207 = scalar_select %p206, %s18, 1
        %s208 = smul.addr %s207, 8
        %s209 = scalar_lea.vmem %s1, %s208
        %v210 = vld [vmem:[%s205] sm:$0xff]
        %v211 = vld [vmem:[%s209] sm:$0xff]
        %v212 = vadd.f32 %v210, %v211
        %vm213 = vcmask 261120
        %v214 = vsel %vm213, %v212, 0.0
        %215 = vadd.xlane.f32.xlu0 %v214
        %v216 = vpop.xlane.xlu0 %215
        %v217 = vrcp.pop 32.0
        %v218 = vmul.f32 %v216, %v217
        %v219 = vsub.f32 %v212, %v218
        %v220 = vmul.f32 %v219, %v219
        %v221 = vsel %vm213, %v220, 0.0
        %222 = vadd.xlane.f32.xlu0 %v221
        %v223 = vpop.xlane.xlu0 %222
        %v224 = vmul.f32 %v223, %v217
        %v225 = vadd.f32 %v224, 1e-05
        %v226 = vrsqrt.pop %v225
        %v227 = vmul.f32 %v219, %v226
        %v228 = vld [vmem:[%s2] sm:$0x1]
        %v230 = vlaneseq
        %v231 = vshrl.u32 %v230, 7
        %v232 = vsub.s32 0, %v231
        %v233 = vrot.slane %v228, %v232
        %v235 = vmul.f32 %v227, %v233
        %v236 = vld [vmem:[%s3] sm:$0x1]
        %v238 = vlaneseq
        %v239 = vshrl.u32 %v238, 7
        %v240 = vsub.s32 0, %v239
        %v241 = vrot.slane %v236, %v240
        %v243 = vadd.f32 %v235, %v241
        %244 = vst.msk [vmem:[%s201] sm:$0xff] %vm213, %v243
        %s245 = sand.u32 %s120, 1
        %s246 = scalar_lea.sflag [#allocation3], %s245
        %s247 = sand.u32 %s120, 1
        %s248 = smul.addr %s247, 8
        %s249 = scalar_lea.vmem [#allocation2], %s248
        // Predicated region
        $region37: #{transformer_forward.37} parent=35 // pred_check
          %p250 = pneg %p130
        $region38: #{transformer_forward.37} parent=35 // pred_check_branch
          %252 = sbr.rel (%p250) target = $region40
        $region39: #{transformer_forward.37} parent=35 // pred_region
          %s254 = ssub.s32 128, 128
          %255 = vsyncadd %s246, %s254
          %s256 = smul.addr %s18, 128
          %s257 = scalar_lea.hbm %s4, %s256
          %s259 = sshll.u32 %s249, 4
          %s260 = int_to_ptr.vmem [resolvable:$true] %s259
          %262 = dma.vmem_to_hbm [thread:$0]  %s260, 128, %s257, %s246
        $region40: #{transformer_forward.37} parent=35 // pred_fallthru
          _
      $region36: #{transformer_forward.37} parent=5 // pred_fallthru
        _
      %p263 = scmp.le.s32.totalorder 2, %s13
      // Predicated region
      $region41: #{transformer_forward.37} parent=5 // pred_check
        %p264 = pneg %p263
      $region42: #{transformer_forward.37} parent=5 // pred_check_branch
        %266 = sbr.rel (%p264) target = $region44
      $region43: #{transformer_forward.37} parent=5 // pred_region
        %s267 = ssub.s32 %s13, 2
        // Predicated region
        $region45: #{transformer_forward.37} parent=43 // pred_check
          %p268 = pneg %p136
        $region46: #{transformer_forward.37} parent=43 // pred_check_branch
          %270 = sbr.rel (%p268) target = $region48
        $region47: #{transformer_forward.37} parent=43 // pred_region
          %s271 = sand.u32 %s121, 1
          %s272 = scalar_lea.sflag [#allocation3], %s271
          %s273 = sand.u32 %s121, 1
          %s274 = smul.addr %s273, 8
          %s275 = scalar_lea.vmem [#allocation2], %s274
          %276 = dma.done %s272, 128
        $region48: #{transformer_forward.37} parent=43 // pred_fallthru
          _
      $region44: #{transformer_forward.37} parent=5 // pred_fallthru
        _
    $region6: #{transformer_forward.37} parent=1 // loop_footer
      %s17 = sadd.s32 1, %s13
    $region7: #{transformer_forward.37} parent=1 // loop_footer_branch
      %12 = sbr.rel target = $region3
    $region8: #{transformer_forward.37} parent=1 // loop_exit
      _
    %277 = vsyncpa [#allocation3], 1
    %s278 = scalar_lea.sflag [#allocation3], 1
    %279 = vsyncpa %s278, 1

</llo_original>
